<compile_context>
chip_gen: v5e
topology: v5e:2x2
jax: 0.10.0
libtpu: 0.0.40
codegen_flags: <defaults>
</compile_context>

<pallas_src>
import math

import jax
import jax.numpy as jnp
from jax.experimental import pallas as pl
from jax.experimental.pallas import tpu as pltpu


def _layernorm(x, g, b, eps=1e-5):
    mu = jnp.mean(x, axis=-1, keepdims=True)
    var = jnp.mean((x - mu) ** 2, axis=-1, keepdims=True)
    return (x - mu) * jax.lax.rsqrt(var + eps) * g + b


def make_cls_encoder_kernel(S, D, DP, Dh, FF, PPAD):
    """One grid step = one batch element: encoder layer + classifier on its CLS row."""
    HP = DP // Dh                      # padded head count (extra heads are all-zero)
    scale = 1.0 / math.sqrt(Dh)
    bf16 = jnp.bfloat16
    f32 = jnp.float32
    inv_d = 1.0 / D

    def kernel(x_cls_ref, xT_ref,
               wq_ref, bq_ref, wk_ref, bk_ref, wv_ref, bv_ref,
               wo_ref, bo_ref, g1_ref, be1_ref,
               w1_ref, b1_ref, w2_ref, b2_ref,
               g2_ref, be2_ref, wd_ref, bd_ref,
               out_ref):
        # Mask of the real (unpadded) feature lanes, for LayerNorm statistics.
        lane = jax.lax.broadcasted_iota(jnp.int32, (1, DP), 1)
        feat = lane < D

        def layernorm_masked(v, g, b):
            # Pad lanes of v are zero by construction; divide by the real D.
            mu = jnp.sum(v, axis=-1, keepdims=True) * inv_d
            c = jnp.where(feat, v - mu, 0.0)
            var = jnp.sum(c * c, axis=-1, keepdims=True) * inv_d
            return c * jax.lax.rsqrt(var + 1e-5) * g + b

        x_cls = x_cls_ref[...]                     # (1, DP) f32, pad lanes zero
        xT = xT_ref[...]                           # (D, S)  bf16 (this batch element)

        # ---- self-attention; queries restricted to the CLS row ----------------
        kT = jnp.dot(wk_ref[...], xT, preferred_element_type=f32) + bk_ref[...]   # (DP, S)
        vT = jnp.dot(wv_ref[...], xT, preferred_element_type=f32) + bv_ref[...]   # (DP, S)
        qT = jnp.dot(wq_ref[...], xT[:, 0:1],
                     preferred_element_type=f32) + bq_ref[...]                    # (DP, 1)

        kh = kT.reshape(HP, Dh, S).astype(bf16)                       # (HP, Dh, S)
        vh = vT.reshape(HP, Dh, S).astype(bf16)                       # (HP, Dh, S)
        qh = jnp.swapaxes(qT.reshape(HP, Dh, 1), 1, 2).astype(bf16)   # (HP, 1, Dh) tiny

        s = jnp.einsum('hid,hdj->hij', qh, kh,
                       preferred_element_type=f32) * scale            # (HP, 1, S)
        s = s - jnp.max(s, axis=-1, keepdims=True)
        p = jnp.exp(s)
        p = p * pl.reciprocal(jnp.sum(p, axis=-1, keepdims=True), approx=True)

        o = jnp.einsum('hij,hdj->hid', p.astype(bf16), vh,
                       preferred_element_type=f32)                    # (HP, 1, Dh)

        # Out-projection as per-head matmuls summed over heads (avoids any
        # sublane->lane reshape of the attention output).
        attn = jnp.sum(
            jnp.einsum('hid,hdo->hio', o.astype(bf16), wo_ref[...],
                       preferred_element_type=f32), axis=0) + bo_ref[...]   # (1, DP)

        # Residual + LayerNorm 1 (CLS row only).
        r1 = layernorm_masked(x_cls + attn, g1_ref[...], be1_ref[...])

        # Feed-forward (ReLU) + residual + LayerNorm 2 (CLS row only).
        h1 = jnp.maximum(
            jnp.dot(r1.astype(bf16), w1_ref[...], preferred_element_type=f32)
            + b1_ref[...], 0.0)                                        # (1, FF)
        ff = jnp.dot(h1.astype(bf16), w2_ref[...],
                     preferred_element_type=f32) + b2_ref[...]         # (1, DP)
        cls = layernorm_masked(r1 + ff, g2_ref[...], be2_ref[...])

        # Classifier (lane-dense PPAD output; sliced back in the wrapper).
        out_ref[...] = (jnp.dot(cls.astype(bf16), wd_ref[...],
                                preferred_element_type=f32)
                        + bd_ref[...]).astype(out_ref.dtype)           # (1, PPAD)

    return kernel


def bert_label_head(encoding, params, *, nhead=12):
    """encoding: (B, S, D) float32 -> logits (B, polarities_dim)."""
    B, S, D = encoding.shape
    H = nhead
    assert D % H == 0, (D, H)
    Dh = D // H
    FF = params["w1"].shape[0]
    P = params["wd"].shape[0]
    LANES = 128
    DP = pl.cdiv(D, LANES) * LANES          # lane-dense feature width (96 -> 128)
    assert DP % Dh == 0
    HP = DP // Dh
    PPAD = LANES                            # lane-dense classifier width

    f32, bf16 = jnp.float32, jnp.bfloat16
    kernel = make_cls_encoder_kernel(S, D, DP, Dh, FF, PPAD)

    # ---- wrapper-side layout prep (plain XLA ops, outside the kernel) --------
    xTb = jnp.transpose(encoding, (0, 2, 1)).astype(bf16)             # (B, D, S)
    x_cls = jnp.zeros((B, 1, DP), f32).at[:, 0, :D].set(encoding[:, 0, :])

    def pad_out_rows(w):                    # torch (out, in) -> (DP, in), zero pad rows
        return jnp.zeros((DP, w.shape[1]), f32).at[:w.shape[0], :].set(w).astype(bf16)

    def col_bias(b):                        # (1, D) -> (DP, 1)
        return jnp.zeros((DP, 1), f32).at[:D, 0].set(b.reshape(-1))

    def row_vec(v, width):                  # (1, n) -> (1, width)
        return jnp.zeros((1, width), f32).at[0, :v.shape[-1]].set(v.reshape(-1))

    wq_p, wk_p, wv_p = (pad_out_rows(params[k]) for k in ("wq", "wk", "wv"))
    bq_p, bk_p, bv_p = (col_bias(params[k]) for k in ("bq", "bk", "bv"))

    woT = jnp.zeros((DP, DP), f32).at[:D, :D].set(params["wo"].T)
    wo_heads = woT.reshape(HP, Dh, DP).astype(bf16)                   # per-head out-proj
    bo_p = row_vec(params["bo"], DP)

    g1_p, be1_p = row_vec(params["ln1_g"], DP), row_vec(params["ln1_b"], DP)
    g2_p, be2_p = row_vec(params["ln2_g"], DP), row_vec(params["ln2_b"], DP)

    w1T = jnp.zeros((DP, FF), f32).at[:D, :].set(params["w1"].T).astype(bf16)
    b1_p = params["b1"].reshape(1, FF).astype(f32)
    w2T = jnp.zeros((FF, DP), f32).at[:, :D].set(params["w2"].T).astype(bf16)
    b2_p = row_vec(params["b2"], DP)

    wdT = jnp.zeros((DP, PPAD), f32).at[:D, :P].set(params["wd"].T).astype(bf16)
    bd_p = row_vec(params["bd"], PPAD)

    weights = [wq_p, bq_p, wk_p, bk_p, wv_p, bv_p,
               wo_heads, bo_p, g1_p, be1_p,
               w1T, b1_p, w2T, b2_p,
               g2_p, be2_p, wdT, bd_p]
    args = [x_cls, xTb] + weights

    def _const_spec(a):
        nd = a.ndim
        return pl.BlockSpec(a.shape, lambda b, _nd=nd: (0,) * _nd)

    in_specs = (
        [pl.BlockSpec((None, 1, DP), lambda b: (b, 0, 0)),     # CLS row (f32)
         pl.BlockSpec((None, D, S), lambda b: (b, 0, 0))]      # x^T for this batch (bf16)
        + [_const_spec(w) for w in weights])                   # resident weights
    out_specs = pl.BlockSpec((None, 1, PPAD), lambda b: (b, 0, 0))

    arg_bytes = sum(int(a.size) * a.dtype.itemsize for a in args)
    vmem_limit = int(min(32 * 2**20, max(8 * 2**20, 6 * arg_bytes)))

    flops = B * int(2 * D * DP * S * 2        # K, V projections (full sequence)
                    + 2 * D * DP              # Q (CLS row only)
                    + 2 * HP * Dh * S * 2     # scores + PV (CLS row only)
                    + 2 * HP * Dh * DP        # out-projection
                    + 2 * DP * FF * 2         # FFN
                    + 2 * DP * PPAD)          # classifier
    transcendentals = B * int(HP * S + 8)
    bytes_accessed = int(arg_bytes + B * PPAD * 4)

    out = pl.pallas_call(
        kernel,
        out_shape=jax.ShapeDtypeStruct((B, 1, PPAD), jnp.float32),
        grid=(B,),
        in_specs=in_specs,
        out_specs=out_specs,
        compiler_params=pltpu.CompilerParams(
            dimension_semantics=("parallel",),
            vmem_limit_bytes=vmem_limit),
        cost_estimate=pl.CostEstimate(flops=flops,
                                      transcendentals=transcendentals,
                                      bytes_accessed=bytes_accessed),
    )(*args)
    return out.reshape(B, PPAD)[:, :P]


def synthetic_bert(indices, segments, params):
    """Minimal deterministic stand-in for the external `bert` module (glue)."""
    tok = params["tok_emb"][indices]                       # (B, S, D)
    seg = params["seg_emb"][segments]                      # (B, S, D)
    pos = params["pos_emb"][None, : indices.shape[1]]      # (1, S, D)
    enc = _layernorm(tok + seg + pos, params["emb_g"], params["emb_b"])
    pooled = jnp.tanh(enc[:, 0] @ params["pool_w"].T + params["pool_b"])
    return enc, pooled


def init_params(key, D, FF, P, vocab, max_seq_len):
    ks = jax.random.split(key, 12)

    def nrm(k, shape, s=0.02):
        return (s * jax.random.normal(k, shape)).astype(jnp.float32)

    return dict(
        # synthetic BERT embeddings
        tok_emb=nrm(ks[0], (vocab, D)),
        seg_emb=nrm(ks[1], (2, D)),
        pos_emb=nrm(ks[2], (max_seq_len, D)),
        emb_g=jnp.ones((D,), jnp.float32),
        emb_b=jnp.zeros((D,), jnp.float32),
        pool_w=nrm(ks[3], (D, D)),
        pool_b=jnp.zeros((1, D), jnp.float32),
        # TransformerEncoderLayer (split in_proj into q/k/v), PyTorch (out,in)
        wq=nrm(ks[4], (D, D)), bq=jnp.zeros((1, D), jnp.float32),
        wk=nrm(ks[5], (D, D)), bk=jnp.zeros((1, D), jnp.float32),
        wv=nrm(ks[6], (D, D)), bv=jnp.zeros((1, D), jnp.float32),
        wo=nrm(ks[7], (D, D)), bo=jnp.zeros((1, D), jnp.float32),
        ln1_g=jnp.ones((1, D), jnp.float32), ln1_b=jnp.zeros((1, D), jnp.float32),
        w1=nrm(ks[8], (FF, D)), b1=jnp.zeros((1, FF), jnp.float32),
        w2=nrm(ks[9], (D, FF)), b2=jnp.zeros((1, D), jnp.float32),
        ln2_g=jnp.ones((1, D), jnp.float32), ln2_b=jnp.zeros((1, D), jnp.float32),
        # final dense (bert_dim -> polarities_dim)
        wd=nrm(ks[10], (P, D)), bd=jnp.zeros((1, P), jnp.float32),
    )


if __name__ == "__main__":
    B, S, D, H, P = 2, 8, 96, 12, 3          # nhead=12 -> head_dim = 8
    FF = 4 * D
    VOCAB = 30

    key = jax.random.PRNGKey(0)
    kp, ki = jax.random.split(key)
    params = init_params(kp, D, FF, P, VOCAB, S)

    text_raw_bert_indices = jax.random.randint(ki, (B, S), 0, VOCAB)
    bert_segments_ids = jnp.zeros((B, S), dtype=jnp.int32)

    encoding, pooled_output = synthetic_bert(text_raw_bert_indices,
                                             bert_segments_ids, params)
    logits = bert_label_head(encoding, params, nhead=H)
    logits = jax.block_until_ready(logits)

    assert logits.shape == (B, P), logits.shape
    assert bool(jnp.all(jnp.isfinite(logits)))
    print("KERNEL_OK")
</pallas_src>

<mosaic_0001>
module attributes {stable_mosaic.version = 11 : i64} {
  func.func @kernel(%arg0: i32, %arg1: memref<1x1x128xf32, #tpu.memory_space<vmem>>, %arg2: memref<1x96x8xbf16, #tpu.memory_space<vmem>>, %arg3: memref<128x96xbf16, #tpu.memory_space<vmem>>, %arg4: memref<128x1xf32, #tpu.memory_space<vmem>>, %arg5: memref<128x96xbf16, #tpu.memory_space<vmem>>, %arg6: memref<128x1xf32, #tpu.memory_space<vmem>>, %arg7: memref<128x96xbf16, #tpu.memory_space<vmem>>, %arg8: memref<128x1xf32, #tpu.memory_space<vmem>>, %arg9: memref<16x8x128xbf16, #tpu.memory_space<vmem>>, %arg10: memref<1x128xf32, #tpu.memory_space<vmem>>, %arg11: memref<1x128xf32, #tpu.memory_space<vmem>>, %arg12: memref<1x128xf32, #tpu.memory_space<vmem>>, %arg13: memref<128x384xbf16, #tpu.memory_space<vmem>>, %arg14: memref<1x384xf32, #tpu.memory_space<vmem>>, %arg15: memref<384x128xbf16, #tpu.memory_space<vmem>>, %arg16: memref<1x128xf32, #tpu.memory_space<vmem>>, %arg17: memref<1x128xf32, #tpu.memory_space<vmem>>, %arg18: memref<1x128xf32, #tpu.memory_space<vmem>>, %arg19: memref<128x128xbf16, #tpu.memory_space<vmem>>, %arg20: memref<1x128xf32, #tpu.memory_space<vmem>>, %arg21: memref<1x1x128xf32, #tpu.memory_space<vmem>>) attributes {dimension_semantics = [#tpu.dimension_semantics<parallel>], iteration_bounds = array<i64: 2>, scalar_prefetch = 0 : i64, scratch_operands = 0 : i64, tpu.core_type = #tpu.core_type<tc>, window_params = [{transform_indices = @transform_0, window_bounds = array<i64: 1, 1, 128>}, {transform_indices = @transform_1, window_bounds = array<i64: 1, 96, 8>}, {pipeline_mode = #tpu.pipeline_mode<synchronous>, transform_indices = @transform_2, window_bounds = array<i64: 128, 96>}, {pipeline_mode = #tpu.pipeline_mode<synchronous>, transform_indices = @transform_3, window_bounds = array<i64: 128, 1>}, {pipeline_mode = #tpu.pipeline_mode<synchronous>, transform_indices = @transform_4, window_bounds = array<i64: 128, 96>}, {pipeline_mode = #tpu.pipeline_mode<synchronous>, transform_indices = @transform_5, window_bounds = array<i64: 128, 1>}, {pipeline_mode = #tpu.pipeline_mode<synchronous>, transform_indices = @transform_6, window_bounds = array<i64: 128, 96>}, {pipeline_mode = #tpu.pipeline_mode<synchronous>, transform_indices = @transform_7, window_bounds = array<i64: 128, 1>}, {pipeline_mode = #tpu.pipeline_mode<synchronous>, transform_indices = @transform_8, window_bounds = array<i64: 16, 8, 128>}, {pipeline_mode = #tpu.pipeline_mode<synchronous>, transform_indices = @transform_9, window_bounds = array<i64: 1, 128>}, {pipeline_mode = #tpu.pipeline_mode<synchronous>, transform_indices = @transform_10, window_bounds = array<i64: 1, 128>}, {pipeline_mode = #tpu.pipeline_mode<synchronous>, transform_indices = @transform_11, window_bounds = array<i64: 1, 128>}, {pipeline_mode = #tpu.pipeline_mode<synchronous>, transform_indices = @transform_12, window_bounds = array<i64: 128, 384>}, {pipeline_mode = #tpu.pipeline_mode<synchronous>, transform_indices = @transform_13, window_bounds = array<i64: 1, 384>}, {pipeline_mode = #tpu.pipeline_mode<synchronous>, transform_indices = @transform_14, window_bounds = array<i64: 384, 128>}, {pipeline_mode = #tpu.pipeline_mode<synchronous>, transform_indices = @transform_15, window_bounds = array<i64: 1, 128>}, {pipeline_mode = #tpu.pipeline_mode<synchronous>, transform_indices = @transform_16, window_bounds = array<i64: 1, 128>}, {pipeline_mode = #tpu.pipeline_mode<synchronous>, transform_indices = @transform_17, window_bounds = array<i64: 1, 128>}, {pipeline_mode = #tpu.pipeline_mode<synchronous>, transform_indices = @transform_18, window_bounds = array<i64: 128, 128>}, {pipeline_mode = #tpu.pipeline_mode<synchronous>, transform_indices = @transform_19, window_bounds = array<i64: 1, 128>}, {transform_indices = @transform_20, window_bounds = array<i64: 1, 1, 128>}]} {
    %0 = tpu.iota {dimensions = array<i32: 1>} : vector<1x128xi32>
    %c96_i32 = arith.constant 96 : i32
    %1 = vector.broadcast %c96_i32 : i32 to vector<1x128xi32>
    %2 = arith.cmpi slt, %0, %1 : vector<1x128xi32>
    %c0 = arith.constant 0 : index
    %c0_0 = arith.constant 0 : index
    %c0_1 = arith.constant 0 : index
    %3 = vector.load %arg1[%c0, %c0_0, %c0_1] : memref<1x1x128xf32, #tpu.memory_space<vmem>>, vector<1x1x128xf32>
    %4 = vector.shape_cast %3 : vector<1x1x128xf32> to vector<1x128xf32>
    %c0_2 = arith.constant 0 : index
    %c0_3 = arith.constant 0 : index
    %c0_4 = arith.constant 0 : index
    %5 = vector.load %arg2[%c0_2, %c0_3, %c0_4] : memref<1x96x8xbf16, #tpu.memory_space<vmem>>, vector<1x96x8xbf16>
    %6 = vector.shape_cast %5 : vector<1x96x8xbf16> to vector<96x8xbf16>
    %c0_5 = arith.constant 0 : index
    %c0_6 = arith.constant 0 : index
    %7 = vector.load %arg5[%c0_5, %c0_6] : memref<128x96xbf16, #tpu.memory_space<vmem>>, vector<128x96xbf16>
    %cst = arith.constant dense<0.000000e+00> : vector<128x8xf32>
    %8 = tpu.matmul %7, %6, %cst {dimension_numbers = #tpu.dot_dimension_numbers<[1], [0], [0], [1], [0, 0, 1, 1], [], []>} : vector<128x96xbf16>, vector<96x8xbf16>, vector<128x8xf32> -> vector<128x8xf32>
    %c0_7 = arith.constant 0 : index
    %c0_8 = arith.constant 0 : index
    %9 = vector.load %arg6[%c0_7, %c0_8] : memref<128x1xf32, #tpu.memory_space<vmem>>, vector<128x1xf32>
    %10 = vector.broadcast %9 : vector<128x1xf32> to vector<128x8xf32>
    %11 = arith.addf %8, %10 : vector<128x8xf32>
    %c0_9 = arith.constant 0 : index
    %c0_10 = arith.constant 0 : index
    %12 = vector.load %arg7[%c0_9, %c0_10] : memref<128x96xbf16, #tpu.memory_space<vmem>>, vector<128x96xbf16>
    %cst_11 = arith.constant dense<0.000000e+00> : vector<128x8xf32>
    %13 = tpu.matmul %12, %6, %cst_11 {dimension_numbers = #tpu.dot_dimension_numbers<[1], [0], [0], [1], [0, 0, 1, 1], [], []>} : vector<128x96xbf16>, vector<96x8xbf16>, vector<128x8xf32> -> vector<128x8xf32>
    %c0_12 = arith.constant 0 : index
    %c0_13 = arith.constant 0 : index
    %14 = vector.load %arg8[%c0_12, %c0_13] : memref<128x1xf32, #tpu.memory_space<vmem>>, vector<128x1xf32>
    %15 = vector.broadcast %14 : vector<128x1xf32> to vector<128x8xf32>
    %16 = arith.addf %13, %15 : vector<128x8xf32>
    %c0_14 = arith.constant 0 : index
    %c0_15 = arith.constant 0 : index
    %17 = vector.load %arg3[%c0_14, %c0_15] : memref<128x96xbf16, #tpu.memory_space<vmem>>, vector<128x96xbf16>
    %18 = vector.extract_strided_slice %6 {offsets = [0, 0], sizes = [96, 1], strides = [1, 1]} : vector<96x8xbf16> to vector<96x1xbf16>
    %cst_16 = arith.constant dense<0.000000e+00> : vector<128x1xf32>
    %19 = tpu.matmul %17, %18, %cst_16 {dimension_numbers = #tpu.dot_dimension_numbers<[1], [0], [0], [1], [0, 0, 1, 1], [], []>} : vector<128x96xbf16>, vector<96x1xbf16>, vector<128x1xf32> -> vector<128x1xf32>
    %c0_17 = arith.constant 0 : index
    %c0_18 = arith.constant 0 : index
    %20 = vector.load %arg4[%c0_17, %c0_18] : memref<128x1xf32, #tpu.memory_space<vmem>>, vector<128x1xf32>
    %21 = arith.addf %19, %20 : vector<128x1xf32>
    %22 = vector.shape_cast %11 : vector<128x8xf32> to vector<16x8x8xf32>
    %23 = arith.truncf %22 : vector<16x8x8xf32> to vector<16x8x8xbf16>
    %24 = vector.shape_cast %16 : vector<128x8xf32> to vector<16x8x8xf32>
    %25 = arith.truncf %24 : vector<16x8x8xf32> to vector<16x8x8xbf16>
    %26 = vector.shape_cast %21 : vector<128x1xf32> to vector<16x8x1xf32>
    %27 = tpu.transpose %26, [0, 2, 1] : vector<16x8x1xf32> -> vector<16x1x8xf32>
    %28 = arith.truncf %27 : vector<16x1x8xf32> to vector<16x1x8xbf16>
    "tpu.trace_start"() <{level = 10 : i32, message = "hid,hdj->hij"}> : () -> ()
    %cst_19 = arith.constant dense<0.000000e+00> : vector<16x1x8xf32>
    %29 = tpu.matmul %28, %23, %cst_19 {dimension_numbers = #tpu.dot_dimension_numbers<[2], [1], [1], [2], [0, 0, 0, 1, 1, 2], [0], [0]>} : vector<16x1x8xbf16>, vector<16x8x8xbf16>, vector<16x1x8xf32> -> vector<16x1x8xf32>
    "tpu.trace_stop"() : () -> ()
    %cst_20 = arith.constant 0.353553385 : f32
    %30 = vector.broadcast %cst_20 : f32 to vector<16x1x8xf32>
    %31 = arith.mulf %29, %30 : vector<16x1x8xf32>
    %cst_21 = arith.constant dense<0xFF800000> : vector<16x1xf32>
    %32 = vector.multi_reduction <maximumf>, %31, %cst_21 [2] : vector<16x1x8xf32> to vector<16x1xf32>
    %33 = vector.shape_cast %32 : vector<16x1xf32> to vector<16x1x1xf32>
    %34 = vector.broadcast %33 : vector<16x1x1xf32> to vector<16x1x8xf32>
    %35 = arith.subf %31, %34 : vector<16x1x8xf32>
    %36 = math.exp %35 : vector<16x1x8xf32>
    %cst_22 = arith.constant dense<0.000000e+00> : vector<16x1xf32>
    %37 = vector.multi_reduction <add>, %36, %cst_22 [2] : vector<16x1x8xf32> to vector<16x1xf32>
    %38 = vector.shape_cast %37 : vector<16x1xf32> to vector<16x1x1xf32>
    %39 = tpu.reciprocal %38 {approx = true} : vector<16x1x1xf32> -> vector<16x1x1xf32>
    %40 = vector.broadcast %39 : vector<16x1x1xf32> to vector<16x1x8xf32>
    %41 = arith.mulf %36, %40 : vector<16x1x8xf32>
    %42 = arith.truncf %41 : vector<16x1x8xf32> to vector<16x1x8xbf16>
    "tpu.trace_start"() <{level = 10 : i32, message = "hij,hdj->hid"}> : () -> ()
    %cst_23 = arith.constant dense<0.000000e+00> : vector<16x1x8xf32>
    %43 = tpu.matmul %42, %25, %cst_23 {dimension_numbers = #tpu.dot_dimension_numbers<[2], [2], [1], [1], [0, 0, 0, 1, 1, 1], [0], [0]>} : vector<16x1x8xbf16>, vector<16x8x8xbf16>, vector<16x1x8xf32> -> vector<16x1x8xf32>
    "tpu.trace_stop"() : () -> ()
    %44 = arith.truncf %43 : vector<16x1x8xf32> to vector<16x1x8xbf16>
    %c0_24 = arith.constant 0 : index
    %c0_25 = arith.constant 0 : index
    %c0_26 = arith.constant 0 : index
    %45 = vector.load %arg9[%c0_24, %c0_25, %c0_26] : memref<16x8x128xbf16, #tpu.memory_space<vmem>>, vector<16x8x128xbf16>
    "tpu.trace_start"() <{level = 10 : i32, message = "hid,hdo->hio"}> : () -> ()
    %cst_27 = arith.constant dense<0.000000e+00> : vector<16x1x128xf32>
    %46 = tpu.matmul %44, %45, %cst_27 {dimension_numbers = #tpu.dot_dimension_numbers<[2], [1], [1], [2], [0, 0, 0, 1, 1, 2], [0], [0]>} : vector<16x1x8xbf16>, vector<16x8x128xbf16>, vector<16x1x128xf32> -> vector<16x1x128xf32>
    "tpu.trace_stop"() : () -> ()
    %cst_28 = arith.constant dense<0.000000e+00> : vector<1x128xf32>
    %47 = vector.multi_reduction <add>, %46, %cst_28 [0] : vector<16x1x128xf32> to vector<1x128xf32>
    %c0_29 = arith.constant 0 : index
    %c0_30 = arith.constant 0 : index
    %48 = vector.load %arg10[%c0_29, %c0_30] : memref<1x128xf32, #tpu.memory_space<vmem>>, vector<1x128xf32>
    %49 = arith.addf %47, %48 : vector<1x128xf32>
    %50 = arith.addf %4, %49 : vector<1x128xf32>
    %c0_31 = arith.constant 0 : index
    %c0_32 = arith.constant 0 : index
    %51 = vector.load %arg11[%c0_31, %c0_32] : memref<1x128xf32, #tpu.memory_space<vmem>>, vector<1x128xf32>
    %c0_33 = arith.constant 0 : index
    %c0_34 = arith.constant 0 : index
    %52 = vector.load %arg12[%c0_33, %c0_34] : memref<1x128xf32, #tpu.memory_space<vmem>>, vector<1x128xf32>
    %cst_35 = arith.constant dense<0.000000e+00> : vector<1xf32>
    %53 = vector.multi_reduction <add>, %50, %cst_35 [1] : vector<1x128xf32> to vector<1xf32>
    %54 = vector.shape_cast %53 : vector<1xf32> to vector<1x1xf32>
    %cst_36 = arith.constant 0.010416667 : f32
    %55 = vector.broadcast %cst_36 : f32 to vector<1x1xf32>
    %56 = arith.mulf %54, %55 : vector<1x1xf32>
    %57 = vector.broadcast %56 : vector<1x1xf32> to vector<1x128xf32>
    %58 = arith.subf %50, %57 : vector<1x128xf32>
    %cst_37 = arith.constant 0.000000e+00 : f32
    %59 = vector.broadcast %cst_37 : f32 to vector<1x128xf32>
    %60 = arith.select %2, %58, %59 : vector<1x128xi1>, vector<1x128xf32>
    %61 = arith.mulf %60, %60 : vector<1x128xf32>
    %cst_38 = arith.constant dense<0.000000e+00> : vector<1xf32>
    %62 = vector.multi_reduction <add>, %61, %cst_38 [1] : vector<1x128xf32> to vector<1xf32>
    %63 = vector.shape_cast %62 : vector<1xf32> to vector<1x1xf32>
    %cst_39 = arith.constant 0.010416667 : f32
    %64 = vector.broadcast %cst_39 : f32 to vector<1x1xf32>
    %65 = arith.mulf %63, %64 : vector<1x1xf32>
    %cst_40 = arith.constant 9.99999974E-6 : f32
    %66 = vector.broadcast %cst_40 : f32 to vector<1x1xf32>
    %67 = arith.addf %65, %66 : vector<1x1xf32>
    %68 = math.rsqrt %67 : vector<1x1xf32>
    %69 = vector.broadcast %68 : vector<1x1xf32> to vector<1x128xf32>
    %70 = arith.mulf %60, %69 : vector<1x128xf32>
    %71 = arith.mulf %70, %51 : vector<1x128xf32>
    %72 = arith.addf %71, %52 : vector<1x128xf32>
    %73 = arith.truncf %72 : vector<1x128xf32> to vector<1x128xbf16>
    %c0_41 = arith.constant 0 : index
    %c0_42 = arith.constant 0 : index
    %74 = vector.load %arg13[%c0_41, %c0_42] : memref<128x384xbf16, #tpu.memory_space<vmem>>, vector<128x384xbf16>
    %cst_43 = arith.constant dense<0.000000e+00> : vector<1x384xf32>
    %75 = tpu.matmul %73, %74, %cst_43 {dimension_numbers = #tpu.dot_dimension_numbers<[1], [0], [0], [1], [0, 0, 1, 1], [], []>} : vector<1x128xbf16>, vector<128x384xbf16>, vector<1x384xf32> -> vector<1x384xf32>
    %c0_44 = arith.constant 0 : index
    %c0_45 = arith.constant 0 : index
    %76 = vector.load %arg14[%c0_44, %c0_45] : memref<1x384xf32, #tpu.memory_space<vmem>>, vector<1x384xf32>
    %77 = arith.addf %75, %76 : vector<1x384xf32>
    %cst_46 = arith.constant 0.000000e+00 : f32
    %78 = vector.broadcast %cst_46 : f32 to vector<1x384xf32>
    %79 = arith.maximumf %77, %78 : vector<1x384xf32>
    %80 = arith.truncf %79 : vector<1x384xf32> to vector<1x384xbf16>
    %c0_47 = arith.constant 0 : index
    %c0_48 = arith.constant 0 : index
    %81 = vector.load %arg15[%c0_47, %c0_48] : memref<384x128xbf16, #tpu.memory_space<vmem>>, vector<384x128xbf16>
    %cst_49 = arith.constant dense<0.000000e+00> : vector<1x128xf32>
    %82 = tpu.matmul %80, %81, %cst_49 {dimension_numbers = #tpu.dot_dimension_numbers<[1], [0], [0], [1], [0, 0, 1, 1], [], []>} : vector<1x384xbf16>, vector<384x128xbf16>, vector<1x128xf32> -> vector<1x128xf32>
    %c0_50 = arith.constant 0 : index
    %c0_51 = arith.constant 0 : index
    %83 = vector.load %arg16[%c0_50, %c0_51] : memref<1x128xf32, #tpu.memory_space<vmem>>, vector<1x128xf32>
    %84 = arith.addf %82, %83 : vector<1x128xf32>
    %85 = arith.addf %72, %84 : vector<1x128xf32>
    %c0_52 = arith.constant 0 : index
    %c0_53 = arith.constant 0 : index
    %86 = vector.load %arg17[%c0_52, %c0_53] : memref<1x128xf32, #tpu.memory_space<vmem>>, vector<1x128xf32>
    %c0_54 = arith.constant 0 : index
    %c0_55 = arith.constant 0 : index
    %87 = vector.load %arg18[%c0_54, %c0_55] : memref<1x128xf32, #tpu.memory_space<vmem>>, vector<1x128xf32>
    %cst_56 = arith.constant dense<0.000000e+00> : vector<1xf32>
    %88 = vector.multi_reduction <add>, %85, %cst_56 [1] : vector<1x128xf32> to vector<1xf32>
    %89 = vector.shape_cast %88 : vector<1xf32> to vector<1x1xf32>
    %cst_57 = arith.constant 0.010416667 : f32
    %90 = vector.broadcast %cst_57 : f32 to vector<1x1xf32>
    %91 = arith.mulf %89, %90 : vector<1x1xf32>
    %92 = vector.broadcast %91 : vector<1x1xf32> to vector<1x128xf32>
    %93 = arith.subf %85, %92 : vector<1x128xf32>
    %cst_58 = arith.constant 0.000000e+00 : f32
    %94 = vector.broadcast %cst_58 : f32 to vector<1x128xf32>
    %95 = arith.select %2, %93, %94 : vector<1x128xi1>, vector<1x128xf32>
    %96 = arith.mulf %95, %95 : vector<1x128xf32>
    %cst_59 = arith.constant dense<0.000000e+00> : vector<1xf32>
    %97 = vector.multi_reduction <add>, %96, %cst_59 [1] : vector<1x128xf32> to vector<1xf32>
    %98 = vector.shape_cast %97 : vector<1xf32> to vector<1x1xf32>
    %cst_60 = arith.constant 0.010416667 : f32
    %99 = vector.broadcast %cst_60 : f32 to vector<1x1xf32>
    %100 = arith.mulf %98, %99 : vector<1x1xf32>
    %cst_61 = arith.constant 9.99999974E-6 : f32
    %101 = vector.broadcast %cst_61 : f32 to vector<1x1xf32>
    %102 = arith.addf %100, %101 : vector<1x1xf32>
    %103 = math.rsqrt %102 : vector<1x1xf32>
    %104 = vector.broadcast %103 : vector<1x1xf32> to vector<1x128xf32>
    %105 = arith.mulf %95, %104 : vector<1x128xf32>
    %106 = arith.mulf %105, %86 : vector<1x128xf32>
    %107 = arith.addf %106, %87 : vector<1x128xf32>
    %108 = arith.truncf %107 : vector<1x128xf32> to vector<1x128xbf16>
    %c0_62 = arith.constant 0 : index
    %c0_63 = arith.constant 0 : index
    %109 = vector.load %arg19[%c0_62, %c0_63] : memref<128x128xbf16, #tpu.memory_space<vmem>>, vector<128x128xbf16>
    %cst_64 = arith.constant dense<0.000000e+00> : vector<1x128xf32>
    %110 = tpu.matmul %108, %109, %cst_64 {dimension_numbers = #tpu.dot_dimension_numbers<[1], [0], [0], [1], [0, 0, 1, 1], [], []>} : vector<1x128xbf16>, vector<128x128xbf16>, vector<1x128xf32> -> vector<1x128xf32>
    %c0_65 = arith.constant 0 : index
    %c0_66 = arith.constant 0 : index
    %111 = vector.load %arg20[%c0_65, %c0_66] : memref<1x128xf32, #tpu.memory_space<vmem>>, vector<1x128xf32>
    %112 = arith.addf %110, %111 : vector<1x128xf32>
    %c0_67 = arith.constant 0 : index
    %c0_68 = arith.constant 0 : index
    %c0_69 = arith.constant 0 : index
    %113 = vector.load %arg21[%c0_67, %c0_68, %c0_69] : memref<1x1x128xf32, #tpu.memory_space<vmem>>, vector<1x1x128xf32>
    %114 = vector.shape_cast %113 : vector<1x1x128xf32> to vector<1x128xf32>
    %115 = vector.shape_cast %112 : vector<1x128xf32> to vector<1x1x128xf32>
    tpu.vector_store %arg21[%c0_67, %c0_68, %c0_69], %115 {strides = array<i32>} : memref<1x1x128xf32, #tpu.memory_space<vmem>>, vector<1x1x128xf32>,
    return
  }
  func.func @transform_0(%arg0: i32) -> (i32, i32, i32) {
    %c0_i32 = arith.constant 0 : i32
    %c0_i32_0 = arith.constant 0 : i32
    %c0_i32_1 = arith.constant 0 : i32
    return %arg0, %c0_i32, %c0_i32_0 : i32, i32, i32
  }
  func.func @transform_1(%arg0: i32) -> (i32, i32, i32) {
    %c0_i32 = arith.constant 0 : i32
    %c0_i32_0 = arith.constant 0 : i32
    %c0_i32_1 = arith.constant 0 : i32
    return %arg0, %c0_i32, %c0_i32_0 : i32, i32, i32
  }
  func.func @transform_2(%arg0: i32) -> (i32, i32) {
    %c0_i32 = arith.constant 0 : i32
    %c0_i32_0 = arith.constant 0 : i32
    %c0_i32_1 = arith.constant 0 : i32
    return %c0_i32, %c0_i32_0 : i32, i32
  }
  func.func @transform_3(%arg0: i32) -> (i32, i32) {
    %c0_i32 = arith.constant 0 : i32
    %c0_i32_0 = arith.constant 0 : i32
    %c0_i32_1 = arith.constant 0 : i32
    return %c0_i32, %c0_i32_0 : i32, i32
  }
  func.func @transform_4(%arg0: i32) -> (i32, i32) {
    %c0_i32 = arith.constant 0 : i32
    %c0_i32_0 = arith.constant 0 : i32
    %c0_i32_1 = arith.constant 0 : i32
    return %c0_i32, %c0_i32_0 : i32, i32
  }
  func.func @transform_5(%arg0: i32) -> (i32, i32) {
    %c0_i32 = arith.constant 0 : i32
    %c0_i32_0 = arith.constant 0 : i32
    %c0_i32_1 = arith.constant 0 : i32
    return %c0_i32, %c0_i32_0 : i32, i32
  }
  func.func @transform_6(%arg0: i32) -> (i32, i32) {
    %c0_i32 = arith.constant 0 : i32
    %c0_i32_0 = arith.constant 0 : i32
    %c0_i32_1 = arith.constant 0 : i32
    return %c0_i32, %c0_i32_0 : i32, i32
  }
  func.func @transform_7(%arg0: i32) -> (i32, i32) {
    %c0_i32 = arith.constant 0 : i32
    %c0_i32_0 = arith.constant 0 : i32
    %c0_i32_1 = arith.constant 0 : i32
    return %c0_i32, %c0_i32_0 : i32, i32
  }
  func.func @transform_8(%arg0: i32) -> (i32, i32, i32) {
    %c0_i32 = arith.constant 0 : i32
    %c0_i32_0 = arith.constant 0 : i32
    %c0_i32_1 = arith.constant 0 : i32
    %c0_i32_2 = arith.constant 0 : i32
    return %c0_i32, %c0_i32_0, %c0_i32_1 : i32, i32, i32
  }
  func.func @transform_9(%arg0: i32) -> (i32, i32) {
    %c0_i32 = arith.constant 0 : i32
    %c0_i32_0 = arith.constant 0 : i32
    %c0_i32_1 = arith.constant 0 : i32
    return %c0_i32, %c0_i32_0 : i32, i32
  }
  func.func @transform_10(%arg0: i32) -> (i32, i32) {
    %c0_i32 = arith.constant 0 : i32
    %c0_i32_0 = arith.constant 0 : i32
    %c0_i32_1 = arith.constant 0 : i32
    return %c0_i32, %c0_i32_0 : i32, i32
  }
  func.func @transform_11(%arg0: i32) -> (i32, i32) {
    %c0_i32 = arith.constant 0 : i32
    %c0_i32_0 = arith.constant 0 : i32
    %c0_i32_1 = arith.constant 0 : i32
    return %c0_i32, %c0_i32_0 : i32, i32
  }
  func.func @transform_12(%arg0: i32) -> (i32, i32) {
    %c0_i32 = arith.constant 0 : i32
    %c0_i32_0 = arith.constant 0 : i32
    %c0_i32_1 = arith.constant 0 : i32
    return %c0_i32, %c0_i32_0 : i32, i32
  }
  func.func @transform_13(%arg0: i32) -> (i32, i32) {
    %c0_i32 = arith.constant 0 : i32
    %c0_i32_0 = arith.constant 0 : i32
    %c0_i32_1 = arith.constant 0 : i32
    return %c0_i32, %c0_i32_0 : i32, i32
  }
  func.func @transform_14(%arg0: i32) -> (i32, i32) {
    %c0_i32 = arith.constant 0 : i32
    %c0_i32_0 = arith.constant 0 : i32
    %c0_i32_1 = arith.constant 0 : i32
    return %c0_i32, %c0_i32_0 : i32, i32
  }
  func.func @transform_15(%arg0: i32) -> (i32, i32) {
    %c0_i32 = arith.constant 0 : i32
    %c0_i32_0 = arith.constant 0 : i32
    %c0_i32_1 = arith.constant 0 : i32
    return %c0_i32, %c0_i32_0 : i32, i32
  }
  func.func @transform_16(%arg0: i32) -> (i32, i32) {
    %c0_i32 = arith.constant 0 : i32
    %c0_i32_0 = arith.constant 0 : i32
    %c0_i32_1 = arith.constant 0 : i32
    return %c0_i32, %c0_i32_0 : i32, i32
  }
  func.func @transform_17(%arg0: i32) -> (i32, i32) {
    %c0_i32 = arith.constant 0 : i32
    %c0_i32_0 = arith.constant 0 : i32
    %c0_i32_1 = arith.constant 0 : i32
    return %c0_i32, %c0_i32_0 : i32, i32
  }
  func.func @transform_18(%arg0: i32) -> (i32, i32) {
    %c0_i32 = arith.constant 0 : i32
    %c0_i32_0 = arith.constant 0 : i32
    %c0_i32_1 = arith.constant 0 : i32
    return %c0_i32, %c0_i32_0 : i32, i32
  }
  func.func @transform_19(%arg0: i32) -> (i32, i32) {
    %c0_i32 = arith.constant 0 : i32
    %c0_i32_0 = arith.constant 0 : i32
    %c0_i32_1 = arith.constant 0 : i32
    return %c0_i32, %c0_i32_0 : i32, i32
  }
  func.func @transform_20(%arg0: i32) -> (i32, i32, i32) {
    %c0_i32 = arith.constant 0 : i32
    %c0_i32_0 = arith.constant 0 : i32
    %c0_i32_1 = arith.constant 0 : i32
    return %arg0, %c0_i32, %c0_i32_0 : i32, i32, i32
  }
}

</mosaic_0001>

<llo_original>
// kernel: tpu_custom_call.1
$region0: #{tpu_custom_call.1}
  #allocation0 [shape = 'u32[]', space=smem, size = 0x4, offset = 0x4, fixed_abs, tag = 'smem constant byte address 0x4 - core index']
  #allocation1 [shape = 'u32[72,128]{1,0:T(1,128)}', space=vmem, size = 0x9000, scoped, tag = 'internal scratch']
  %s0 = inlined_call_operand.vmem [shape: f32[2,1,128], index: 0, kind: input, shape index: {}]
  %s1 = inlined_call_operand.vmem [shape: bf16[2,96,8], index: 1, kind: input, shape index: {}]
  %s2 = inlined_call_operand.vmem [shape: bf16[128,96], index: 2, kind: input, shape index: {}]
  %s3 = inlined_call_operand.vmem [shape: f32[128,1], index: 3, kind: input, shape index: {}]
  %s4 = inlined_call_operand.vmem [shape: bf16[128,96], index: 4, kind: input, shape index: {}]
  %s5 = inlined_call_operand.vmem [shape: f32[128,1], index: 5, kind: input, shape index: {}]
  %s6 = inlined_call_operand.vmem [shape: bf16[128,96], index: 6, kind: input, shape index: {}]
  %s7 = inlined_call_operand.vmem [shape: f32[128,1], index: 7, kind: input, shape index: {}]
  %s8 = inlined_call_operand.vmem [shape: bf16[16,8,128], index: 8, kind: input, shape index: {}]
  %s9 = inlined_call_operand.vmem [shape: f32[1,128], index: 9, kind: input, shape index: {}]
  %s10 = inlined_call_operand.vmem [shape: f32[1,128], index: 10, kind: input, shape index: {}]
  %s11 = inlined_call_operand.vmem [shape: f32[1,128], index: 11, kind: input, shape index: {}]
  %s12 = inlined_call_operand.vmem [shape: bf16[128,384], index: 12, kind: input, shape index: {}]
  %s13 = inlined_call_operand.vmem [shape: f32[1,384], index: 13, kind: input, shape index: {}]
  %s14 = inlined_call_operand.vmem [shape: bf16[384,128], index: 14, kind: input, shape index: {}]
  %s15 = inlined_call_operand.vmem [shape: f32[1,128], index: 15, kind: input, shape index: {}]
  %s16 = inlined_call_operand.vmem [shape: f32[1,128], index: 16, kind: input, shape index: {}]
  %s17 = inlined_call_operand.vmem [shape: f32[1,128], index: 17, kind: input, shape index: {}]
  %s18 = inlined_call_operand.vmem [shape: bf16[128,128], index: 18, kind: input, shape index: {}]
  %s19 = inlined_call_operand.vmem [shape: f32[1,128], index: 19, kind: input, shape index: {}]
  %s20 = inlined_call_operand.hbm [shape: f32[2,1,128], index: 20, kind: output, shape index: {}]
  %s21 = sld [smem:[#allocation0]]
  $region113: #{tpu_custom_call.1} parent=0
    _
  %s23 = ssub.s32 1, %s21
  %s24 = scalar_select 0, %s23, %s21
  $region1: #{tpu_custom_call.1} parent=0
    #allocation2 [shape = 'u8[1024]{0}', space=vmem, size = 0x400, scoped, tag = 'output window, operand 0']
    #allocation3 [shape = 's32[2]{0}', space=sflag, size = 0x8, scoped, tag = 'scoped memory for tpu_custom_call.1']
    %25 = vsyncpa [#allocation3], 0
    %s26 = scalar_lea.sflag [#allocation3], 1
    %27 = vsyncpa %s26, 0
    loop: start=0, step=1, limit=4
    $region2: #{tpu_custom_call.1} parent=1 // loop_pre_header
      _
    $region3: #{tpu_custom_call.1} parent=1 // loop_header
      %s29 = sphi 0, %s33
      %p30 = scmp.ge.s32.totalorder %s29, 4
      %s39 = sphi 0, %s41
      %s42 = sphi 0, %s39
      %s43 = sphi 0, %s42
      %s59 = sphi 0, %s43
      %s65 = sphi 0, %s67
      %s68 = sphi 0, %s65
      %s69 = sphi 0, %s68
      %s85 = sphi 0, %s69
      %s89 = sphi 0, %s89
      %s91 = sphi 0, %s89
      %s92 = sphi 0, %s91
      %s106 = sphi 0, %s92
      %s110 = sphi 0, %s110
      %s112 = sphi 0, %s110
      %s113 = sphi 0, %s112
      %s127 = sphi 0, %s113
      %s131 = sphi 0, %s131
      %s133 = sphi 0, %s131
      %s134 = sphi 0, %s133
      %s148 = sphi 0, %s134
      %s152 = sphi 0, %s152
      %s154 = sphi 0, %s152
      %s155 = sphi 0, %s154
      %s169 = sphi 0, %s155
      %s173 = sphi 0, %s173
      %s175 = sphi 0, %s173
      %s176 = sphi 0, %s175
      %s190 = sphi 0, %s176
      %s194 = sphi 0, %s194
      %s196 = sphi 0, %s194
      %s197 = sphi 0, %s196
      %s211 = sphi 0, %s197
      %s215 = sphi 0, %s215
      %s217 = sphi 0, %s215
      %s218 = sphi 0, %s217
      %s232 = sphi 0, %s218
      %s236 = sphi 0, %s236
      %s238 = sphi 0, %s236
      %s239 = sphi 0, %s238
      %s253 = sphi 0, %s239
      %s257 = sphi 0, %s257
      %s259 = sphi 0, %s257
      %s260 = sphi 0, %s259
      %s274 = sphi 0, %s260
      %s278 = sphi 0, %s278
      %s280 = sphi 0, %s278
      %s281 = sphi 0, %s280
      %s295 = sphi 0, %s281
      %s299 = sphi 0, %s299
      %s301 = sphi 0, %s299
      %s302 = sphi 0, %s301
      %s316 = sphi 0, %s302
      %s320 = sphi 0, %s320
      %s322 = sphi 0, %s320
      %s323 = sphi 0, %s322
      %s337 = sphi 0, %s323
      %s341 = sphi 0, %s341
      %s343 = sphi 0, %s341
      %s344 = sphi 0, %s343
      %s358 = sphi 0, %s344
      %s362 = sphi 0, %s362
      %s364 = sphi 0, %s362
      %s365 = sphi 0, %s364
      %s379 = sphi 0, %s365
      %s383 = sphi 0, %s383
      %s385 = sphi 0, %s383
      %s386 = sphi 0, %s385
      %s400 = sphi 0, %s386
      %s404 = sphi 0, %s404
      %s406 = sphi 0, %s404
      %s407 = sphi 0, %s406
      %s421 = sphi 0, %s407
      %s425 = sphi 0, %s425
      %s427 = sphi 0, %s425
      %s428 = sphi 0, %s427
      %s442 = sphi 0, %s428
      %s446 = sphi 0, %s446
      %s448 = sphi 0, %s446
      %s449 = sphi 0, %s448
      %s463 = sphi 0, %s449
      %s469 = sphi 0, %s471
      %s472 = sphi 0, %s469
      %s473 = sphi 0, %s472
      %s489 = sphi 0, %s473
    $region4: #{tpu_custom_call.1} parent=1 // loop_header_branch
      %32 = sbr.rel (%p30) target = $region8
    $region5: #{tpu_custom_call.1} parent=1 // loop_body
      %s34 = ssub.s32 %s29, 1
      %s35 = ssub.s32 %s29, 2
      %s36 = sadd.s32 %s29, 1
      %s37 = ssub.s32 %s29, %s36
      %p38 = scmp.eq.s32.totalorder %s37, 0
      %s40 = sadd.s32 %s39, 1
      %s41 = scalar_select %p38, %s39, %s40
      %p44 = pneg %p38
      %p45 = scmp.eq.s32.totalorder %s29, 1
      %p46 = por %p44, %p45
      %p47 = scmp.ne.s32.totalorder %s39, %s42
      %p48 = scmp.eq.s32.totalorder %s29, 0
      %p49 = por %p47, %p48
      %p50 = scmp.ne.s32.totalorder %s39, %s42
      %p51 = scmp.eq.s32.totalorder %s34, 1
      %p52 = por %p50, %p51
      %p53 = scmp.ne.s32.totalorder %s42, %s43
      %p54 = scmp.eq.s32.totalorder %s34, 0
      %p55 = por %p53, %p54
      %p56 = scmp.ne.s32.totalorder %s42, %s43
      %p57 = scmp.eq.s32.totalorder %s35, 1
      %p58 = por %p56, %p57
      %p60 = scmp.ne.s32.totalorder %s43, %s59
      %p61 = scmp.eq.s32.totalorder %s35, 0
      %p62 = por %p60, %p61
      %s63 = ssub.s32 %s29, %s36
      %p64 = scmp.eq.s32.totalorder %s63, 0
      %s66 = sadd.s32 %s65, 1
      %s67 = scalar_select %p64, %s65, %s66
      %p70 = pneg %p64
      %p71 = scmp.eq.s32.totalorder %s29, 1
      %p72 = por %p70, %p71
      %p73 = scmp.ne.s32.totalorder %s65, %s68
      %p74 = scmp.eq.s32.totalorder %s29, 0
      %p75 = por %p73, %p74
      %p76 = scmp.ne.s32.totalorder %s65, %s68
      %p77 = scmp.eq.s32.totalorder %s34, 1
      %p78 = por %p76, %p77
      %p79 = scmp.ne.s32.totalorder %s68, %s69
      %p80 = scmp.eq.s32.totalorder %s34, 0
      %p81 = por %p79, %p80
      %p82 = scmp.ne.s32.totalorder %s68, %s69
      %p83 = scmp.eq.s32.totalorder %s35, 1
      %p84 = por %p82, %p83
      %p86 = scmp.ne.s32.totalorder %s69, %s85
      %p87 = scmp.eq.s32.totalorder %s35, 0
      %p88 = por %p86, %p87
      %s90 = sadd.s32 %s89, 1
      %p93 = scmp.eq.s32.totalorder %s29, 1
      %p94 = scmp.ne.s32.totalorder %s89, %s91
      %p95 = scmp.eq.s32.totalorder %s29, 0
      %p96 = por %p94, %p95
      %p97 = scmp.ne.s32.totalorder %s89, %s91
      %p98 = scmp.eq.s32.totalorder %s34, 1
      %p99 = por %p97, %p98
      %p100 = scmp.ne.s32.totalorder %s91, %s92
      %p101 = scmp.eq.s32.totalorder %s34, 0
      %p102 = por %p100, %p101
      %p103 = scmp.ne.s32.totalorder %s91, %s92
      %p104 = scmp.eq.s32.totalorder %s35, 1
      %p105 = por %p103, %p104
      %p107 = scmp.ne.s32.totalorder %s92, %s106
      %p108 = scmp.eq.s32.totalorder %s35, 0
      %p109 = por %p107, %p108
      %s111 = sadd.s32 %s110, 1
      %p114 = scmp.eq.s32.totalorder %s29, 1
      %p115 = scmp.ne.s32.totalorder %s110, %s112
      %p116 = scmp.eq.s32.totalorder %s29, 0
      %p117 = por %p115, %p116
      %p118 = scmp.ne.s32.totalorder %s110, %s112
      %p119 = scmp.eq.s32.totalorder %s34, 1
      %p120 = por %p118, %p119
      %p121 = scmp.ne.s32.totalorder %s112, %s113
      %p122 = scmp.eq.s32.totalorder %s34, 0
      %p123 = por %p121, %p122
      %p124 = scmp.ne.s32.totalorder %s112, %s113
      %p125 = scmp.eq.s32.totalorder %s35, 1
      %p126 = por %p124, %p125
      %p128 = scmp.ne.s32.totalorder %s113, %s127
      %p129 = scmp.eq.s32.totalorder %s35, 0
      %p130 = por %p128, %p129
      %s132 = sadd.s32 %s131, 1
      %p135 = scmp.eq.s32.totalorder %s29, 1
      %p136 = scmp.ne.s32.totalorder %s131, %s133
      %p137 = scmp.eq.s32.totalorder %s29, 0
      %p138 = por %p136, %p137
      %p139 = scmp.ne.s32.totalorder %s131, %s133
      %p140 = scmp.eq.s32.totalorder %s34, 1
      %p141 = por %p139, %p140
      %p142 = scmp.ne.s32.totalorder %s133, %s134
      %p143 = scmp.eq.s32.totalorder %s34, 0
      %p144 = por %p142, %p143
      %p145 = scmp.ne.s32.totalorder %s133, %s134
      %p146 = scmp.eq.s32.totalorder %s35, 1
      %p147 = por %p145, %p146
      %p149 = scmp.ne.s32.totalorder %s134, %s148
      %p150 = scmp.eq.s32.totalorder %s35, 0
      %p151 = por %p149, %p150
      %s153 = sadd.s32 %s152, 1
      %p156 = scmp.eq.s32.totalorder %s29, 1
      %p157 = scmp.ne.s32.totalorder %s152, %s154
      %p158 = scmp.eq.s32.totalorder %s29, 0
      %p159 = por %p157, %p158
      %p160 = scmp.ne.s32.totalorder %s152, %s154
      %p161 = scmp.eq.s32.totalorder %s34, 1
      %p162 = por %p160, %p161
      %p163 = scmp.ne.s32.totalorder %s154, %s155
      %p164 = scmp.eq.s32.totalorder %s34, 0
      %p165 = por %p163, %p164
      %p166 = scmp.ne.s32.totalorder %s154, %s155
      %p167 = scmp.eq.s32.totalorder %s35, 1
      %p168 = por %p166, %p167
      %p170 = scmp.ne.s32.totalorder %s155, %s169
      %p171 = scmp.eq.s32.totalorder %s35, 0
      %p172 = por %p170, %p171
      %s174 = sadd.s32 %s173, 1
      %p177 = scmp.eq.s32.totalorder %s29, 1
      %p178 = scmp.ne.s32.totalorder %s173, %s175
      %p179 = scmp.eq.s32.totalorder %s29, 0
      %p180 = por %p178, %p179
      %p181 = scmp.ne.s32.totalorder %s173, %s175
      %p182 = scmp.eq.s32.totalorder %s34, 1
      %p183 = por %p181, %p182
      %p184 = scmp.ne.s32.totalorder %s175, %s176
      %p185 = scmp.eq.s32.totalorder %s34, 0
      %p186 = por %p184, %p185
      %p187 = scmp.ne.s32.totalorder %s175, %s176
      %p188 = scmp.eq.s32.totalorder %s35, 1
      %p189 = por %p187, %p188
      %p191 = scmp.ne.s32.totalorder %s176, %s190
      %p192 = scmp.eq.s32.totalorder %s35, 0
      %p193 = por %p191, %p192
      %s195 = sadd.s32 %s194, 1
      %p198 = scmp.eq.s32.totalorder %s29, 1
      %p199 = scmp.ne.s32.totalorder %s194, %s196
      %p200 = scmp.eq.s32.totalorder %s29, 0
      %p201 = por %p199, %p200
      %p202 = scmp.ne.s32.totalorder %s194, %s196
      %p203 = scmp.eq.s32.totalorder %s34, 1
      %p204 = por %p202, %p203
      %p205 = scmp.ne.s32.totalorder %s196, %s197
      %p206 = scmp.eq.s32.totalorder %s34, 0
      %p207 = por %p205, %p206
      %p208 = scmp.ne.s32.totalorder %s196, %s197
      %p209 = scmp.eq.s32.totalorder %s35, 1
      %p210 = por %p208, %p209
      %p212 = scmp.ne.s32.totalorder %s197, %s211
      %p213 = scmp.eq.s32.totalorder %s35, 0
      %p214 = por %p212, %p213
      %s216 = sadd.s32 %s215, 1
      %p219 = scmp.eq.s32.totalorder %s29, 1
      %p220 = scmp.ne.s32.totalorder %s215, %s217
      %p221 = scmp.eq.s32.totalorder %s29, 0
      %p222 = por %p220, %p221
      %p223 = scmp.ne.s32.totalorder %s215, %s217
      %p224 = scmp.eq.s32.totalorder %s34, 1
      %p225 = por %p223, %p224
      %p226 = scmp.ne.s32.totalorder %s217, %s218
      %p227 = scmp.eq.s32.totalorder %s34, 0
      %p228 = por %p226, %p227
      %p229 = scmp.ne.s32.totalorder %s217, %s218
      %p230 = scmp.eq.s32.totalorder %s35, 1
      %p231 = por %p229, %p230
      %p233 = scmp.ne.s32.totalorder %s218, %s232
      %p234 = scmp.eq.s32.totalorder %s35, 0
      %p235 = por %p233, %p234
      %s237 = sadd.s32 %s236, 1
      %p240 = scmp.eq.s32.totalorder %s29, 1
      %p241 = scmp.ne.s32.totalorder %s236, %s238
      %p242 = scmp.eq.s32.totalorder %s29, 0
      %p243 = por %p241, %p242
      %p244 = scmp.ne.s32.totalorder %s236, %s238
      %p245 = scmp.eq.s32.totalorder %s34, 1
      %p246 = por %p244, %p245
      %p247 = scmp.ne.s32.totalorder %s238, %s239
      %p248 = scmp.eq.s32.totalorder %s34, 0
      %p249 = por %p247, %p248
      %p250 = scmp.ne.s32.totalorder %s238, %s239
      %p251 = scmp.eq.s32.totalorder %s35, 1
      %p252 = por %p250, %p251
      %p254 = scmp.ne.s32.totalorder %s239, %s253
      %p255 = scmp.eq.s32.totalorder %s35, 0
      %p256 = por %p254, %p255
      %s258 = sadd.s32 %s257, 1
      %p261 = scmp.eq.s32.totalorder %s29, 1
      %p262 = scmp.ne.s32.totalorder %s257, %s259
      %p263 = scmp.eq.s32.totalorder %s29, 0
      %p264 = por %p262, %p263
      %p265 = scmp.ne.s32.totalorder %s257, %s259
      %p266 = scmp.eq.s32.totalorder %s34, 1
      %p267 = por %p265, %p266
      %p268 = scmp.ne.s32.totalorder %s259, %s260
      %p269 = scmp.eq.s32.totalorder %s34, 0
      %p270 = por %p268, %p269
      %p271 = scmp.ne.s32.totalorder %s259, %s260
      %p272 = scmp.eq.s32.totalorder %s35, 1
      %p273 = por %p271, %p272
      %p275 = scmp.ne.s32.totalorder %s260, %s274
      %p276 = scmp.eq.s32.totalorder %s35, 0
      %p277 = por %p275, %p276
      %s279 = sadd.s32 %s278, 1
      %p282 = scmp.eq.s32.totalorder %s29, 1
      %p283 = scmp.ne.s32.totalorder %s278, %s280
      %p284 = scmp.eq.s32.totalorder %s29, 0
      %p285 = por %p283, %p284
      %p286 = scmp.ne.s32.totalorder %s278, %s280
      %p287 = scmp.eq.s32.totalorder %s34, 1
      %p288 = por %p286, %p287
      %p289 = scmp.ne.s32.totalorder %s280, %s281
      %p290 = scmp.eq.s32.totalorder %s34, 0
      %p291 = por %p289, %p290
      %p292 = scmp.ne.s32.totalorder %s280, %s281
      %p293 = scmp.eq.s32.totalorder %s35, 1
      %p294 = por %p292, %p293
      %p296 = scmp.ne.s32.totalorder %s281, %s295
      %p297 = scmp.eq.s32.totalorder %s35, 0
      %p298 = por %p296, %p297
      %s300 = sadd.s32 %s299, 1
      %p303 = scmp.eq.s32.totalorder %s29, 1
      %p304 = scmp.ne.s32.totalorder %s299, %s301
      %p305 = scmp.eq.s32.totalorder %s29, 0
      %p306 = por %p304, %p305
      %p307 = scmp.ne.s32.totalorder %s299, %s301
      %p308 = scmp.eq.s32.totalorder %s34, 1
      %p309 = por %p307, %p308
      %p310 = scmp.ne.s32.totalorder %s301, %s302
      %p311 = scmp.eq.s32.totalorder %s34, 0
      %p312 = por %p310, %p311
      %p313 = scmp.ne.s32.totalorder %s301, %s302
      %p314 = scmp.eq.s32.totalorder %s35, 1
      %p315 = por %p313, %p314
      %p317 = scmp.ne.s32.totalorder %s302, %s316
      %p318 = scmp.eq.s32.totalorder %s35, 0
      %p319 = por %p317, %p318
      %s321 = sadd.s32 %s320, 1
      %p324 = scmp.eq.s32.totalorder %s29, 1
      %p325 = scmp.ne.s32.totalorder %s320, %s322
      %p326 = scmp.eq.s32.totalorder %s29, 0
      %p327 = por %p325, %p326
      %p328 = scmp.ne.s32.totalorder %s320, %s322
      %p329 = scmp.eq.s32.totalorder %s34, 1
      %p330 = por %p328, %p329
      %p331 = scmp.ne.s32.totalorder %s322, %s323
      %p332 = scmp.eq.s32.totalorder %s34, 0
      %p333 = por %p331, %p332
      %p334 = scmp.ne.s32.totalorder %s322, %s323
      %p335 = scmp.eq.s32.totalorder %s35, 1
      %p336 = por %p334, %p335
      %p338 = scmp.ne.s32.totalorder %s323, %s337
      %p339 = scmp.eq.s32.totalorder %s35, 0
      %p340 = por %p338, %p339
      %s342 = sadd.s32 %s341, 1
      %p345 = scmp.eq.s32.totalorder %s29, 1
      %p346 = scmp.ne.s32.totalorder %s341, %s343
      %p347 = scmp.eq.s32.totalorder %s29, 0
      %p348 = por %p346, %p347
      %p349 = scmp.ne.s32.totalorder %s341, %s343
      %p350 = scmp.eq.s32.totalorder %s34, 1
      %p351 = por %p349, %p350
      %p352 = scmp.ne.s32.totalorder %s343, %s344
      %p353 = scmp.eq.s32.totalorder %s34, 0
      %p354 = por %p352, %p353
      %p355 = scmp.ne.s32.totalorder %s343, %s344
      %p356 = scmp.eq.s32.totalorder %s35, 1
      %p357 = por %p355, %p356
      %p359 = scmp.ne.s32.totalorder %s344, %s358
      %p360 = scmp.eq.s32.totalorder %s35, 0
      %p361 = por %p359, %p360
      %s363 = sadd.s32 %s362, 1
      %p366 = scmp.eq.s32.totalorder %s29, 1
      %p367 = scmp.ne.s32.totalorder %s362, %s364
      %p368 = scmp.eq.s32.totalorder %s29, 0
      %p369 = por %p367, %p368
      %p370 = scmp.ne.s32.totalorder %s362, %s364
      %p371 = scmp.eq.s32.totalorder %s34, 1
      %p372 = por %p370, %p371
      %p373 = scmp.ne.s32.totalorder %s364, %s365
      %p374 = scmp.eq.s32.totalorder %s34, 0
      %p375 = por %p373, %p374
      %p376 = scmp.ne.s32.totalorder %s364, %s365
      %p377 = scmp.eq.s32.totalorder %s35, 1
      %p378 = por %p376, %p377
      %p380 = scmp.ne.s32.totalorder %s365, %s379
      %p381 = scmp.eq.s32.totalorder %s35, 0
      %p382 = por %p380, %p381
      %s384 = sadd.s32 %s383, 1
      %p387 = scmp.eq.s32.totalorder %s29, 1
      %p388 = scmp.ne.s32.totalorder %s383, %s385
      %p389 = scmp.eq.s32.totalorder %s29, 0
      %p390 = por %p388, %p389
      %p391 = scmp.ne.s32.totalorder %s383, %s385
      %p392 = scmp.eq.s32.totalorder %s34, 1
      %p393 = por %p391, %p392
      %p394 = scmp.ne.s32.totalorder %s385, %s386
      %p395 = scmp.eq.s32.totalorder %s34, 0
      %p396 = por %p394, %p395
      %p397 = scmp.ne.s32.totalorder %s385, %s386
      %p398 = scmp.eq.s32.totalorder %s35, 1
      %p399 = por %p397, %p398
      %p401 = scmp.ne.s32.totalorder %s386, %s400
      %p402 = scmp.eq.s32.totalorder %s35, 0
      %p403 = por %p401, %p402
      %s405 = sadd.s32 %s404, 1
      %p408 = scmp.eq.s32.totalorder %s29, 1
      %p409 = scmp.ne.s32.totalorder %s404, %s406
      %p410 = scmp.eq.s32.totalorder %s29, 0
      %p411 = por %p409, %p410
      %p412 = scmp.ne.s32.totalorder %s404, %s406
      %p413 = scmp.eq.s32.totalorder %s34, 1
      %p414 = por %p412, %p413
      %p415 = scmp.ne.s32.totalorder %s406, %s407
      %p416 = scmp.eq.s32.totalorder %s34, 0
      %p417 = por %p415, %p416
      %p418 = scmp.ne.s32.totalorder %s406, %s407
      %p419 = scmp.eq.s32.totalorder %s35, 1
      %p420 = por %p418, %p419
      %p422 = scmp.ne.s32.totalorder %s407, %s421
      %p423 = scmp.eq.s32.totalorder %s35, 0
      %p424 = por %p422, %p423
      %s426 = sadd.s32 %s425, 1
      %p429 = scmp.eq.s32.totalorder %s29, 1
      %p430 = scmp.ne.s32.totalorder %s425, %s427
      %p431 = scmp.eq.s32.totalorder %s29, 0
      %p432 = por %p430, %p431
      %p433 = scmp.ne.s32.totalorder %s425, %s427
      %p434 = scmp.eq.s32.totalorder %s34, 1
      %p435 = por %p433, %p434
      %p436 = scmp.ne.s32.totalorder %s427, %s428
      %p437 = scmp.eq.s32.totalorder %s34, 0
      %p438 = por %p436, %p437
      %p439 = scmp.ne.s32.totalorder %s427, %s428
      %p440 = scmp.eq.s32.totalorder %s35, 1
      %p441 = por %p439, %p440
      %p443 = scmp.ne.s32.totalorder %s428, %s442
      %p444 = scmp.eq.s32.totalorder %s35, 0
      %p445 = por %p443, %p444
      %s447 = sadd.s32 %s446, 1
      %p450 = scmp.eq.s32.totalorder %s29, 1
      %p451 = scmp.ne.s32.totalorder %s446, %s448
      %p452 = scmp.eq.s32.totalorder %s29, 0
      %p453 = por %p451, %p452
      %p454 = scmp.ne.s32.totalorder %s446, %s448
      %p455 = scmp.eq.s32.totalorder %s34, 1
      %p456 = por %p454, %p455
      %p457 = scmp.ne.s32.totalorder %s448, %s449
      %p458 = scmp.eq.s32.totalorder %s34, 0
      %p459 = por %p457, %p458
      %p460 = scmp.ne.s32.totalorder %s448, %s449
      %p461 = scmp.eq.s32.totalorder %s35, 1
      %p462 = por %p460, %p461
      %p464 = scmp.ne.s32.totalorder %s449, %s463
      %p465 = scmp.eq.s32.totalorder %s35, 0
      %p466 = por %p464, %p465
      %s467 = ssub.s32 %s29, %s36
      %p468 = scmp.eq.s32.totalorder %s467, 0
      %s470 = sadd.s32 %s469, 1
      %s471 = scalar_select %p468, %s469, %s470
      %p474 = pneg %p468
      %p475 = scmp.eq.s32.totalorder %s29, 1
      %p476 = por %p474, %p475
      %p477 = scmp.ne.s32.totalorder %s469, %s472
      %p478 = scmp.eq.s32.totalorder %s29, 0
      %p479 = por %p477, %p478
      %p480 = scmp.ne.s32.totalorder %s469, %s472
      %p481 = scmp.eq.s32.totalorder %s34, 1
      %p482 = por %p480, %p481
      %p483 = scmp.ne.s32.totalorder %s472, %s473
      %p484 = scmp.eq.s32.totalorder %s34, 0
      %p485 = por %p483, %p484
      %p486 = scmp.ne.s32.totalorder %s472, %s473
      %p487 = scmp.eq.s32.totalorder %s35, 1
      %p488 = por %p486, %p487
      %p490 = scmp.ne.s32.totalorder %s473, %s489
      %p491 = scmp.eq.s32.totalorder %s35, 0
      %p492 = por %p490, %p491
      %p493 = scmp.le.s32.totalorder 1, %s29
      %p494 = scmp.lt.s32.totalorder %s29, 3
      %p495 = pnand %p493, %p494
      %p496 = pneg %p495
      // Predicated region
      $region9: #{tpu_custom_call.1} parent=5 // pred_check
        _
      $region10: #{tpu_custom_call.1} parent=5 // pred_check_branch
        %498 = sbr.rel (%p495) target = $region12
      $region11: #{tpu_custom_call.1} parent=5 // pred_region
        %s499 = ssub.s32 %s29, 1
        // Predicated region
        $region13: #{tpu_custom_call.1} parent=11 // pred_check
          %p500 = pneg %p102
        $region14: #{tpu_custom_call.1} parent=11 // pred_check_branch
          %502 = sbr.rel (%p500) target = $region16
        $region15: #{tpu_custom_call.1} parent=11 // pred_region
          _
        $region16: #{tpu_custom_call.1} parent=11 // pred_fallthru
          _
        // Predicated region
        $region17: #{tpu_custom_call.1} parent=11 // pred_check
          %p503 = pneg %p123
        $region18: #{tpu_custom_call.1} parent=11 // pred_check_branch
          %505 = sbr.rel (%p503) target = $region20
        $region19: #{tpu_custom_call.1} parent=11 // pred_region
          _
        $region20: #{tpu_custom_call.1} parent=11 // pred_fallthru
          _
        // Predicated region
        $region21: #{tpu_custom_call.1} parent=11 // pred_check
          %p506 = pneg %p144
        $region22: #{tpu_custom_call.1} parent=11 // pred_check_branch
          %508 = sbr.rel (%p506) target = $region24
        $region23: #{tpu_custom_call.1} parent=11 // pred_region
          _
        $region24: #{tpu_custom_call.1} parent=11 // pred_fallthru
          _
        // Predicated region
        $region25: #{tpu_custom_call.1} parent=11 // pred_check
          %p509 = pneg %p165
        $region26: #{tpu_custom_call.1} parent=11 // pred_check_branch
          %511 = sbr.rel (%p509) target = $region28
        $region27: #{tpu_custom_call.1} parent=11 // pred_region
          _
        $region28: #{tpu_custom_call.1} parent=11 // pred_fallthru
          _
        // Predicated region
        $region29: #{tpu_custom_call.1} parent=11 // pred_check
          %p512 = pneg %p186
        $region30: #{tpu_custom_call.1} parent=11 // pred_check_branch
          %514 = sbr.rel (%p512) target = $region32
        $region31: #{tpu_custom_call.1} parent=11 // pred_region
          _
        $region32: #{tpu_custom_call.1} parent=11 // pred_fallthru
          _
        // Predicated region
        $region33: #{tpu_custom_call.1} parent=11 // pred_check
          %p515 = pneg %p207
        $region34: #{tpu_custom_call.1} parent=11 // pred_check_branch
          %517 = sbr.rel (%p515) target = $region36
        $region35: #{tpu_custom_call.1} parent=11 // pred_region
          _
        $region36: #{tpu_custom_call.1} parent=11 // pred_fallthru
          _
        // Predicated region
        $region37: #{tpu_custom_call.1} parent=11 // pred_check
          %p518 = pneg %p228
        $region38: #{tpu_custom_call.1} parent=11 // pred_check_branch
          %520 = sbr.rel (%p518) target = $region40
        $region39: #{tpu_custom_call.1} parent=11 // pred_region
          _
        $region40: #{tpu_custom_call.1} parent=11 // pred_fallthru
          _
        // Predicated region
        $region41: #{tpu_custom_call.1} parent=11 // pred_check
          %p521 = pneg %p249
        $region42: #{tpu_custom_call.1} parent=11 // pred_check_branch
          %523 = sbr.rel (%p521) target = $region44
        $region43: #{tpu_custom_call.1} parent=11 // pred_region
          _
        $region44: #{tpu_custom_call.1} parent=11 // pred_fallthru
          _
        // Predicated region
        $region45: #{tpu_custom_call.1} parent=11 // pred_check
          %p524 = pneg %p270
        $region46: #{tpu_custom_call.1} parent=11 // pred_check_branch
          %526 = sbr.rel (%p524) target = $region48
        $region47: #{tpu_custom_call.1} parent=11 // pred_region
          _
        $region48: #{tpu_custom_call.1} parent=11 // pred_fallthru
          _
        // Predicated region
        $region49: #{tpu_custom_call.1} parent=11 // pred_check
          %p527 = pneg %p291
        $region50: #{tpu_custom_call.1} parent=11 // pred_check_branch
          %529 = sbr.rel (%p527) target = $region52
        $region51: #{tpu_custom_call.1} parent=11 // pred_region
          _
        $region52: #{tpu_custom_call.1} parent=11 // pred_fallthru
          _
        // Predicated region
        $region53: #{tpu_custom_call.1} parent=11 // pred_check
          %p530 = pneg %p312
        $region54: #{tpu_custom_call.1} parent=11 // pred_check_branch
          %532 = sbr.rel (%p530) target = $region56
        $region55: #{tpu_custom_call.1} parent=11 // pred_region
          _
        $region56: #{tpu_custom_call.1} parent=11 // pred_fallthru
          _
        // Predicated region
        $region57: #{tpu_custom_call.1} parent=11 // pred_check
          %p533 = pneg %p333
        $region58: #{tpu_custom_call.1} parent=11 // pred_check_branch
          %535 = sbr.rel (%p533) target = $region60
        $region59: #{tpu_custom_call.1} parent=11 // pred_region
          _
        $region60: #{tpu_custom_call.1} parent=11 // pred_fallthru
          _
        // Predicated region
        $region61: #{tpu_custom_call.1} parent=11 // pred_check
          %p536 = pneg %p354
        $region62: #{tpu_custom_call.1} parent=11 // pred_check_branch
          %538 = sbr.rel (%p536) target = $region64
        $region63: #{tpu_custom_call.1} parent=11 // pred_region
          _
        $region64: #{tpu_custom_call.1} parent=11 // pred_fallthru
          _
        // Predicated region
        $region65: #{tpu_custom_call.1} parent=11 // pred_check
          %p539 = pneg %p375
        $region66: #{tpu_custom_call.1} parent=11 // pred_check_branch
          %541 = sbr.rel (%p539) target = $region68
        $region67: #{tpu_custom_call.1} parent=11 // pred_region
          _
        $region68: #{tpu_custom_call.1} parent=11 // pred_fallthru
          _
        // Predicated region
        $region69: #{tpu_custom_call.1} parent=11 // pred_check
          %p542 = pneg %p396
        $region70: #{tpu_custom_call.1} parent=11 // pred_check_branch
          %544 = sbr.rel (%p542) target = $region72
        $region71: #{tpu_custom_call.1} parent=11 // pred_region
          _
        $region72: #{tpu_custom_call.1} parent=11 // pred_fallthru
          _
        // Predicated region
        $region73: #{tpu_custom_call.1} parent=11 // pred_check
          %p545 = pneg %p417
        $region74: #{tpu_custom_call.1} parent=11 // pred_check_branch
          %547 = sbr.rel (%p545) target = $region76
        $region75: #{tpu_custom_call.1} parent=11 // pred_region
          _
        $region76: #{tpu_custom_call.1} parent=11 // pred_fallthru
          _
        // Predicated region
        $region77: #{tpu_custom_call.1} parent=11 // pred_check
          %p548 = pneg %p438
        $region78: #{tpu_custom_call.1} parent=11 // pred_check_branch
          %550 = sbr.rel (%p548) target = $region80
        $region79: #{tpu_custom_call.1} parent=11 // pred_region
          _
        $region80: #{tpu_custom_call.1} parent=11 // pred_fallthru
          _
        // Predicated region
        $region81: #{tpu_custom_call.1} parent=11 // pred_check
          %p551 = pneg %p459
        $region82: #{tpu_custom_call.1} parent=11 // pred_check_branch
          %553 = sbr.rel (%p551) target = $region84
        $region83: #{tpu_custom_call.1} parent=11 // pred_region
          _
        $region84: #{tpu_custom_call.1} parent=11 // pred_fallthru
          _
      $region12: #{tpu_custom_call.1} parent=5 // pred_fallthru
        _
      %p554 = scmp.lt.s32.totalorder %s29, 2
      // Predicated region
      $region85: #{tpu_custom_call.1} parent=5 // pred_check
        %p555 = pneg %p554
      $region86: #{tpu_custom_call.1} parent=5 // pred_check_branch
        %557 = sbr.rel (%p555) target = $region88
      $region87: #{tpu_custom_call.1} parent=5 // pred_region
        // Predicated region
        $region89: #{tpu_custom_call.1} parent=87 // pred_check
          %p558 = pneg %p49
        $region90: #{tpu_custom_call.1} parent=87 // pred_check_branch
          %560 = sbr.rel (%p558) target = $region92
        $region91: #{tpu_custom_call.1} parent=87 // pred_region
          %p561 = scmp.lt.s32.totalorder %s29, 1
          %s562 = scalar_select %p561, %s29, 1
          %s563 = scalar_lea.vmem %s0, %s562
        $region92: #{tpu_custom_call.1} parent=87 // pred_fallthru
          _
        // Predicated region
        $region93: #{tpu_custom_call.1} parent=87 // pred_check
          %p564 = pneg %p75
        $region94: #{tpu_custom_call.1} parent=87 // pred_check_branch
          %566 = sbr.rel (%p564) target = $region96
        $region95: #{tpu_custom_call.1} parent=87 // pred_region
          %p567 = scmp.lt.s32.totalorder %s29, 1
          %s568 = scalar_select %p567, %s29, 1
          %s569 = smul.addr %s568, 12
          %s570 = smul.addr %s569, 4
          %s571 = scalar_lea.vmem %s1, %s570
        $region96: #{tpu_custom_call.1} parent=87 // pred_fallthru
          _
      $region88: #{tpu_custom_call.1} parent=5 // pred_fallthru
        _
      %p572 = scmp.le.s32.totalorder 1, %s29
      %p573 = scmp.lt.s32.totalorder %s29, 3
      %p574 = pnand %p572, %p573
      %p575 = pneg %p574
      // Predicated region
      $region97: #{tpu_custom_call.1} parent=5 // pred_check
        _
      $region98: #{tpu_custom_call.1} parent=5 // pred_check_branch
        %577 = sbr.rel (%p574) target = $region100
      $region99: #{tpu_custom_call.1} parent=5 // pred_region
        %s578 = ssub.s32 %s29, 1
        %p579 = scmp.lt.s32.totalorder %s34, 1
        %s580 = scalar_select %p579, %s34, 1
        %s581 = scalar_lea.vmem %s0, %s580
        %p582 = pneg %p55
        %p583 = pneg %p52
        %p584 = scmp.lt.s32.totalorder %s34, 1
        %s585 = scalar_select %p584, %s34, 1
        %s586 = smul.addr %s585, 12
        %s587 = smul.addr %s586, 4
        %s588 = scalar_lea.vmem %s1, %s587
        %p589 = pneg %p81
        %p590 = pneg %p78
        %p591 = pneg %p102
        %p592 = pneg %p99
        %p593 = pneg %p123
        %p594 = pneg %p120
        %p595 = pneg %p144
        %p596 = pneg %p141
        %p597 = pneg %p165
        %p598 = pneg %p162
        %p599 = pneg %p186
        %p600 = pneg %p183
        %p601 = pneg %p207
        %p602 = pneg %p204
        %p603 = pneg %p228
        %p604 = pneg %p225
        %p605 = pneg %p249
        %p606 = pneg %p246
        %p607 = pneg %p270
        %p608 = pneg %p267
        %p609 = pneg %p291
        %p610 = pneg %p288
        %p611 = pneg %p312
        %p612 = pneg %p309
        %p613 = pneg %p333
        %p614 = pneg %p330
        %p615 = pneg %p354
        %p616 = pneg %p351
        %p617 = pneg %p375
        %p618 = pneg %p372
        %p619 = pneg %p396
        %p620 = pneg %p393
        %p621 = pneg %p417
        %p622 = pneg %p414
        %p623 = pneg %p438
        %p624 = pneg %p435
        %p625 = pneg %p459
        %p626 = pneg %p456
        %p627 = pneg %p485
        %p628 = pneg %p482
        %s629 = sand.u32 %s472, 1
        %s630 = scalar_lea.sflag [#allocation3], %s629
        %s631 = sand.u32 %s472, 1
        %s632 = scalar_lea.vmem [#allocation2], %s631
        %p633 = scmp.lt.s32.totalorder %s34, 1
        %s634 = scalar_select %p633, %s34, 1
        %s635 = scalar_lea.vmem %s0, %s634
        %p636 = scmp.lt.s32.totalorder %s34, 1
        %s637 = scalar_select %p636, %s34, 1
        %s638 = smul.addr %s637, 12
        %s639 = smul.addr %s638, 4
        %s640 = scalar_lea.vmem %s1, %s639
        %v642 = vlaneseq
        %v643 = vand.u32 %v642, 127
        %vm644 = vcmp.lt.s32.totalorder %v643, 96
        %v645 = vld [vmem:[%s635] sm:$0x1]
        %v646 = vld [vmem:[%s640] sm:$0xf]
        %v647 = vld [vmem:[%s640 + $0x4] sm:$0xf]
        %v648 = vld [vmem:[%s640 + $0x8] sm:$0xf]
        %v649 = vld [vmem:[%s640 + $0xc] sm:$0xf]
        %v650 = vld [vmem:[%s640 + $0x10] sm:$0xf]
        %v651 = vld [vmem:[%s640 + $0x14] sm:$0xf]
        %v652 = vld [vmem:[%s640 + $0x18] sm:$0xf]
        %v653 = vld [vmem:[%s640 + $0x1c] sm:$0xf]
        %v654 = vld [vmem:[%s640 + $0x20] sm:$0xf]
        %v655 = vld [vmem:[%s640 + $0x24] sm:$0xf]
        %v656 = vld [vmem:[%s640 + $0x28] sm:$0xf]
        %v657 = vld [vmem:[%s640 + $0x2c] sm:$0xf]
        %v658 = vld [vmem:[%s4] sm:$0xf]
        %v659 = vld [vmem:[%s4 + $0x4] sm:$0xf]
        %v660 = vld [vmem:[%s4 + $0x8] sm:$0xf]
        %v661 = vld [vmem:[%s4 + $0xc] sm:$0xf]
        %v662 = vld [vmem:[%s4 + $0x10] sm:$0xf]
        %v663 = vld [vmem:[%s4 + $0x14] sm:$0xf]
        %v664 = vld [vmem:[%s4 + $0x18] sm:$0xf]
        %v665 = vld [vmem:[%s4 + $0x1c] sm:$0xf]
        %v666 = vld [vmem:[%s4 + $0x20] sm:$0xf]
        %v667 = vld [vmem:[%s4 + $0x24] sm:$0xf]
        %v668 = vld [vmem:[%s4 + $0x28] sm:$0xf]
        %v669 = vld [vmem:[%s4 + $0x2c] sm:$0xf]
        %v670 = vld [vmem:[%s4 + $0x30] sm:$0xf]
        %v671 = vld [vmem:[%s4 + $0x34] sm:$0xf]
        %v672 = vld [vmem:[%s4 + $0x38] sm:$0xf]
        %v673 = vld [vmem:[%s4 + $0x3c] sm:$0xf]
        %v674 = vld [vmem:[%s5] sm:$0xff]
        %v675 = vld [vmem:[%s5 + $0x8] sm:$0xff]
        %v676 = vld [vmem:[%s5 + $0x10] sm:$0xff]
        %v677 = vld [vmem:[%s5 + $0x18] sm:$0xff]
        %v678 = vld [vmem:[%s5 + $0x20] sm:$0xff]
        %v679 = vld [vmem:[%s5 + $0x28] sm:$0xff]
        %v680 = vld [vmem:[%s5 + $0x30] sm:$0xff]
        %v681 = vld [vmem:[%s5 + $0x38] sm:$0xff]
        %v682 = vld [vmem:[%s5 + $0x40] sm:$0xff]
        %v683 = vld [vmem:[%s5 + $0x48] sm:$0xff]
        %v684 = vld [vmem:[%s5 + $0x50] sm:$0xff]
        %v685 = vld [vmem:[%s5 + $0x58] sm:$0xff]
        %v686 = vld [vmem:[%s5 + $0x60] sm:$0xff]
        %v687 = vld [vmem:[%s5 + $0x68] sm:$0xff]
        %v688 = vld [vmem:[%s5 + $0x70] sm:$0xff]
        %v689 = vld [vmem:[%s5 + $0x78] sm:$0xff]
        %691 = vset.pattern.permute.xlu0 0
        %692 = vperm.xlu0 %691, %v674
        %v693 = vpop.permute.xlu0 %692
        %696 = vset.pattern.permute.xlu0 0
        %697 = vperm.xlu0 %696, %v675
        %v698 = vpop.permute.xlu0 %697
        %701 = vset.pattern.permute.xlu0 0
        %702 = vperm.xlu0 %701, %v676
        %v703 = vpop.permute.xlu0 %702
        %706 = vset.pattern.permute.xlu0 0
        %707 = vperm.xlu0 %706, %v677
        %v708 = vpop.permute.xlu0 %707
        %711 = vset.pattern.permute.xlu0 0
        %712 = vperm.xlu0 %711, %v678
        %v713 = vpop.permute.xlu0 %712
        %716 = vset.pattern.permute.xlu0 0
        %717 = vperm.xlu0 %716, %v679
        %v718 = vpop.permute.xlu0 %717
        %721 = vset.pattern.permute.xlu0 0
        %722 = vperm.xlu0 %721, %v680
        %v723 = vpop.permute.xlu0 %722
        %726 = vset.pattern.permute.xlu0 0
        %727 = vperm.xlu0 %726, %v681
        %v728 = vpop.permute.xlu0 %727
        %731 = vset.pattern.permute.xlu0 0
        %732 = vperm.xlu0 %731, %v682
        %v733 = vpop.permute.xlu0 %732
        %736 = vset.pattern.permute.xlu0 0
        %737 = vperm.xlu0 %736, %v683
        %v738 = vpop.permute.xlu0 %737
        %741 = vset.pattern.permute.xlu0 0
        %742 = vperm.xlu0 %741, %v684
        %v743 = vpop.permute.xlu0 %742
        %746 = vset.pattern.permute.xlu0 0
        %747 = vperm.xlu0 %746, %v685
        %v748 = vpop.permute.xlu0 %747
        %751 = vset.pattern.permute.xlu0 0
        %752 = vperm.xlu0 %751, %v686
        %v753 = vpop.permute.xlu0 %752
        %756 = vset.pattern.permute.xlu0 0
        %757 = vperm.xlu0 %756, %v687
        %v758 = vpop.permute.xlu0 %757
        %761 = vset.pattern.permute.xlu0 0
        %762 = vperm.xlu0 %761, %v688
        %v763 = vpop.permute.xlu0 %762
        %766 = vset.pattern.permute.xlu0 0
        %767 = vperm.xlu0 %766, %v689
        %v768 = vpop.permute.xlu0 %767
        %v786 = vunpack.c.l.b16 %v658
        %v787 = vunpack.c.l.b16 %v659
        %v788 = vunpack.c.l.b16 %v660
        %v789 = vunpack.c.l.b16 %v661
        %v790 = vunpack.c.l.b16 %v662
        %v791 = vunpack.c.l.b16 %v663
        %v792 = vunpack.c.l.b16 %v664
        %v793 = vunpack.c.l.b16 %v665
        %v794 = vunpack.c.l.b16 %v666
        %v795 = vunpack.c.l.b16 %v667
        %v796 = vunpack.c.l.b16 %v668
        %v797 = vunpack.c.l.b16 %v669
        %v798 = vunpack.c.l.b16 %v670
        %v799 = vunpack.c.l.b16 %v671
        %v800 = vunpack.c.l.b16 %v672
        %v801 = vunpack.c.l.b16 %v673
        %v802 = vpack.c.b16 %v787, %v786
        %v803 = vpack.c.b16 %v789, %v788
        %v804 = vpack.c.b16 %v791, %v790
        %v805 = vpack.c.b16 %v793, %v792
        %v806 = vpack.c.b16 %v795, %v794
        %v807 = vpack.c.b16 %v797, %v796
        %v808 = vpack.c.b16 %v799, %v798
        %v809 = vpack.c.b16 %v801, %v800
        %v822 = vunpack.c.l.b16 %v646
        %v823 = vunpack.c.l.b16 %v647
        %v824 = vunpack.c.l.b16 %v648
        %v825 = vunpack.c.l.b16 %v649
        %v826 = vunpack.c.l.b16 %v650
        %v827 = vunpack.c.l.b16 %v651
        %v828 = vunpack.c.l.b16 %v652
        %v829 = vunpack.c.l.b16 %v653
        %v830 = vunpack.c.l.b16 %v654
        %v831 = vunpack.c.l.b16 %v655
        %v832 = vunpack.c.l.b16 %v656
        %v833 = vunpack.c.l.b16 %v657
        %v834 = vpack.c.b16 %v823, %v822
        %v835 = vpack.c.b16 %v825, %v824
        %v836 = vpack.c.b16 %v827, %v826
        %v837 = vpack.c.b16 %v829, %v828
        %v838 = vpack.c.b16 %v831, %v830
        %v839 = vpack.c.b16 %v833, %v832
        %vm846 = vcmask 785408
        %v848 = vsel %vm846, %v802, 0
        %v851 = vsel %vm846, %v803, 0
        %v854 = vsel %vm846, %v804, 0
        %v857 = vsel %vm846, %v805, 0
        %v860 = vsel %vm846, %v806, 0
        %v863 = vsel %vm846, %v807, 0
        %v866 = vsel %vm846, %v808, 0
        %v869 = vsel %vm846, %v809, 0
        %871 = vmatpush.bf16.msra.mxu0 0
        %872 = vmatpush.bf16.msra.mxu0 0
        %873 = vmatpush.bf16.msra.mxu0 %v839
        %874 = vmatpush.bf16.msra.mxu0 %v838
        %875 = vmatpush.bf16.msra.mxu0 %v837
        %876 = vmatpush.bf16.msra.mxu0 %v836
        %877 = vmatpush.bf16.msra.mxu0 %v835
        %878 = vmatpush.bf16.msra.mxu0 %v834
        %879 = vmatmul.bf16.gmra.mxu0 %v848
        %v880 = vpop.f32.mrf.mxu0
        %v881 = vadd.f32 %v693, %v880
        %v882 = vpop.f32.mrf.mxu0
        %v883 = vadd.f32 %v698, %v882
        %884 = vmatmul.bf16.gmra.mxu0 %v851
        %v885 = vpop.f32.mrf.mxu0
        %v886 = vadd.f32 %v703, %v885
        %v887 = vpop.f32.mrf.mxu0
        %v888 = vadd.f32 %v708, %v887
        %889 = vmatmul.bf16.gmra.mxu0 %v854
        %v890 = vpop.f32.mrf.mxu0
        %v891 = vadd.f32 %v713, %v890
        %v892 = vpop.f32.mrf.mxu0
        %v893 = vadd.f32 %v718, %v892
        %894 = vmatmul.bf16.gmra.mxu0 %v857
        %v895 = vpop.f32.mrf.mxu0
        %v896 = vadd.f32 %v723, %v895
        %v897 = vpop.f32.mrf.mxu0
        %v898 = vadd.f32 %v728, %v897
        %899 = vmatmul.bf16.gmra.mxu0 %v860
        %v900 = vpop.f32.mrf.mxu0
        %v901 = vadd.f32 %v733, %v900
        %v902 = vpop.f32.mrf.mxu0
        %v903 = vadd.f32 %v738, %v902
        %904 = vmatmul.bf16.gmra.mxu0 %v863
        %v905 = vpop.f32.mrf.mxu0
        %v906 = vadd.f32 %v743, %v905
        %v907 = vpop.f32.mrf.mxu0
        %v908 = vadd.f32 %v748, %v907
        %909 = vmatmul.bf16.gmra.mxu0 %v866
        %v910 = vpop.f32.mrf.mxu0
        %v911 = vadd.f32 %v753, %v910
        %v912 = vpop.f32.mrf.mxu0
        %v913 = vadd.f32 %v758, %v912
        %914 = vmatmul.bf16.gmra.mxu0 %v869
        %v915 = vpop.f32.mrf.mxu0
        %v916 = vadd.f32 %v763, %v915
        %v917 = vpop.f32.mrf.mxu0
        %v918 = vadd.f32 %v768, %v917
        %919 = vdwg.mxu0
        %v920 = vld [vmem:[%s6] sm:$0xf]
        %v921 = vld [vmem:[%s6 + $0x4] sm:$0xf]
        %v922 = vld [vmem:[%s6 + $0x8] sm:$0xf]
        %v923 = vld [vmem:[%s6 + $0xc] sm:$0xf]
        %v924 = vld [vmem:[%s6 + $0x10] sm:$0xf]
        %v925 = vld [vmem:[%s6 + $0x14] sm:$0xf]
        %v926 = vld [vmem:[%s6 + $0x18] sm:$0xf]
        %v927 = vld [vmem:[%s6 + $0x1c] sm:$0xf]
        %v928 = vld [vmem:[%s6 + $0x20] sm:$0xf]
        %v929 = vld [vmem:[%s6 + $0x24] sm:$0xf]
        %v930 = vld [vmem:[%s6 + $0x28] sm:$0xf]
        %v931 = vld [vmem:[%s6 + $0x2c] sm:$0xf]
        %v932 = vld [vmem:[%s6 + $0x30] sm:$0xf]
        %v933 = vld [vmem:[%s6 + $0x34] sm:$0xf]
        %v934 = vld [vmem:[%s6 + $0x38] sm:$0xf]
        %v935 = vld [vmem:[%s6 + $0x3c] sm:$0xf]
        %v936 = vld [vmem:[%s7] sm:$0xff]
        %v937 = vld [vmem:[%s7 + $0x8] sm:$0xff]
        %v938 = vld [vmem:[%s7 + $0x10] sm:$0xff]
        %v939 = vld [vmem:[%s7 + $0x18] sm:$0xff]
        %v940 = vld [vmem:[%s7 + $0x20] sm:$0xff]
        %v941 = vld [vmem:[%s7 + $0x28] sm:$0xff]
        %v942 = vld [vmem:[%s7 + $0x30] sm:$0xff]
        %v943 = vld [vmem:[%s7 + $0x38] sm:$0xff]
        %v944 = vld [vmem:[%s7 + $0x40] sm:$0xff]
        %v945 = vld [vmem:[%s7 + $0x48] sm:$0xff]
        %v946 = vld [vmem:[%s7 + $0x50] sm:$0xff]
        %v947 = vld [vmem:[%s7 + $0x58] sm:$0xff]
        %v948 = vld [vmem:[%s7 + $0x60] sm:$0xff]
        %v949 = vld [vmem:[%s7 + $0x68] sm:$0xff]
        %v950 = vld [vmem:[%s7 + $0x70] sm:$0xff]
        %v951 = vld [vmem:[%s7 + $0x78] sm:$0xff]
        %953 = vset.pattern.permute.xlu0 0
        %954 = vperm.xlu0 %953, %v936
        %v955 = vpop.permute.xlu0 %954
        %958 = vset.pattern.permute.xlu0 0
        %959 = vperm.xlu0 %958, %v937
        %v960 = vpop.permute.xlu0 %959
        %963 = vset.pattern.permute.xlu0 0
        %964 = vperm.xlu0 %963, %v938
        %v965 = vpop.permute.xlu0 %964
        %968 = vset.pattern.permute.xlu0 0
        %969 = vperm.xlu0 %968, %v939
        %v970 = vpop.permute.xlu0 %969
        %973 = vset.pattern.permute.xlu0 0
        %974 = vperm.xlu0 %973, %v940
        %v975 = vpop.permute.xlu0 %974
        %978 = vset.pattern.permute.xlu0 0
        %979 = vperm.xlu0 %978, %v941
        %v980 = vpop.permute.xlu0 %979
        %983 = vset.pattern.permute.xlu0 0
        %984 = vperm.xlu0 %983, %v942
        %v985 = vpop.permute.xlu0 %984
        %988 = vset.pattern.permute.xlu0 0
        %989 = vperm.xlu0 %988, %v943
        %v990 = vpop.permute.xlu0 %989
        %993 = vset.pattern.permute.xlu0 0
        %994 = vperm.xlu0 %993, %v944
        %v995 = vpop.permute.xlu0 %994
        %998 = vset.pattern.permute.xlu0 0
        %999 = vperm.xlu0 %998, %v945
        %v1000 = vpop.permute.xlu0 %999
        %1003 = vset.pattern.permute.xlu0 0
        %1004 = vperm.xlu0 %1003, %v946
        %v1005 = vpop.permute.xlu0 %1004
        %1008 = vset.pattern.permute.xlu0 0
        %1009 = vperm.xlu0 %1008, %v947
        %v1010 = vpop.permute.xlu0 %1009
        %1013 = vset.pattern.permute.xlu0 0
        %1014 = vperm.xlu0 %1013, %v948
        %v1015 = vpop.permute.xlu0 %1014
        %1018 = vset.pattern.permute.xlu0 0
        %1019 = vperm.xlu0 %1018, %v949
        %v1020 = vpop.permute.xlu0 %1019
        %1023 = vset.pattern.permute.xlu0 0
        %1024 = vperm.xlu0 %1023, %v950
        %v1025 = vpop.permute.xlu0 %1024
        %1028 = vset.pattern.permute.xlu0 0
        %1029 = vperm.xlu0 %1028, %v951
        %v1030 = vpop.permute.xlu0 %1029
        %v1048 = vunpack.c.l.b16 %v920
        %v1049 = vunpack.c.l.b16 %v921
        %v1050 = vunpack.c.l.b16 %v922
        %v1051 = vunpack.c.l.b16 %v923
        %v1052 = vunpack.c.l.b16 %v924
        %v1053 = vunpack.c.l.b16 %v925
        %v1054 = vunpack.c.l.b16 %v926
        %v1055 = vunpack.c.l.b16 %v927
        %v1056 = vunpack.c.l.b16 %v928
        %v1057 = vunpack.c.l.b16 %v929
        %v1058 = vunpack.c.l.b16 %v930
        %v1059 = vunpack.c.l.b16 %v931
        %v1060 = vunpack.c.l.b16 %v932
        %v1061 = vunpack.c.l.b16 %v933
        %v1062 = vunpack.c.l.b16 %v934
        %v1063 = vunpack.c.l.b16 %v935
        %v1064 = vpack.c.b16 %v1049, %v1048
        %v1065 = vpack.c.b16 %v1051, %v1050
        %v1066 = vpack.c.b16 %v1053, %v1052
        %v1067 = vpack.c.b16 %v1055, %v1054
        %v1068 = vpack.c.b16 %v1057, %v1056
        %v1069 = vpack.c.b16 %v1059, %v1058
        %v1070 = vpack.c.b16 %v1061, %v1060
        %v1071 = vpack.c.b16 %v1063, %v1062
        %v1073 = vsel %vm846, %v1064, 0
        %v1076 = vsel %vm846, %v1065, 0
        %v1079 = vsel %vm846, %v1066, 0
        %v1082 = vsel %vm846, %v1067, 0
        %v1085 = vsel %vm846, %v1068, 0
        %v1088 = vsel %vm846, %v1069, 0
        %v1091 = vsel %vm846, %v1070, 0
        %v1094 = vsel %vm846, %v1071, 0
        %1096 = vmatpush.bf16.msra.mxu0 0
        %1097 = vmatpush.bf16.msra.mxu0 0
        %1098 = vmatpush.bf16.msra.mxu0 %v839
        %1099 = vmatpush.bf16.msra.mxu0 %v838
        %1100 = vmatpush.bf16.msra.mxu0 %v837
        %1101 = vmatpush.bf16.msra.mxu0 %v836
        %1102 = vmatpush.bf16.msra.mxu0 %v835
        %1103 = vmatpush.bf16.msra.mxu0 %v834
        %1104 = vmatmul.bf16.gmra.mxu0 %v1073
        %v1105 = vpop.f32.mrf.mxu0
        %v1106 = vadd.f32 %v955, %v1105
        %v1107 = vpop.f32.mrf.mxu0
        %v1108 = vadd.f32 %v960, %v1107
        %1109 = vmatmul.bf16.gmra.mxu0 %v1076
        %v1110 = vpop.f32.mrf.mxu0
        %v1111 = vadd.f32 %v965, %v1110
        %v1112 = vpop.f32.mrf.mxu0
        %v1113 = vadd.f32 %v970, %v1112
        %1114 = vmatmul.bf16.gmra.mxu0 %v1079
        %v1115 = vpop.f32.mrf.mxu0
        %v1116 = vadd.f32 %v975, %v1115
        %v1117 = vpop.f32.mrf.mxu0
        %v1118 = vadd.f32 %v980, %v1117
        %1119 = vmatmul.bf16.gmra.mxu0 %v1082
        %v1120 = vpop.f32.mrf.mxu0
        %v1121 = vadd.f32 %v985, %v1120
        %v1122 = vpop.f32.mrf.mxu0
        %v1123 = vadd.f32 %v990, %v1122
        %1124 = vmatmul.bf16.gmra.mxu0 %v1085
        %v1125 = vpop.f32.mrf.mxu0
        %v1126 = vadd.f32 %v995, %v1125
        %v1127 = vpop.f32.mrf.mxu0
        %v1128 = vadd.f32 %v1000, %v1127
        %1129 = vmatmul.bf16.gmra.mxu0 %v1088
        %v1130 = vpop.f32.mrf.mxu0
        %v1131 = vadd.f32 %v1005, %v1130
        %v1132 = vpop.f32.mrf.mxu0
        %v1133 = vadd.f32 %v1010, %v1132
        %1134 = vmatmul.bf16.gmra.mxu0 %v1091
        %v1135 = vpop.f32.mrf.mxu0
        %v1136 = vadd.f32 %v1015, %v1135
        %v1137 = vpop.f32.mrf.mxu0
        %v1138 = vadd.f32 %v1020, %v1137
        %1139 = vmatmul.bf16.gmra.mxu0 %v1094
        %v1140 = vpop.f32.mrf.mxu0
        %v1141 = vadd.f32 %v1025, %v1140
        %v1142 = vpop.f32.mrf.mxu0
        %v1143 = vadd.f32 %v1030, %v1142
        %1144 = vdwg.mxu0
        %v1145 = vld [vmem:[%s2] sm:$0xf]
        %v1146 = vld [vmem:[%s2 + $0x4] sm:$0xf]
        %v1147 = vld [vmem:[%s2 + $0x8] sm:$0xf]
        %v1148 = vld [vmem:[%s2 + $0xc] sm:$0xf]
        %v1149 = vld [vmem:[%s2 + $0x10] sm:$0xf]
        %v1150 = vld [vmem:[%s2 + $0x14] sm:$0xf]
        %v1151 = vld [vmem:[%s2 + $0x18] sm:$0xf]
        %v1152 = vld [vmem:[%s2 + $0x1c] sm:$0xf]
        %v1153 = vld [vmem:[%s2 + $0x20] sm:$0xf]
        %v1154 = vld [vmem:[%s2 + $0x24] sm:$0xf]
        %v1155 = vld [vmem:[%s2 + $0x28] sm:$0xf]
        %v1156 = vld [vmem:[%s2 + $0x2c] sm:$0xf]
        %v1157 = vld [vmem:[%s2 + $0x30] sm:$0xf]
        %v1158 = vld [vmem:[%s2 + $0x34] sm:$0xf]
        %v1159 = vld [vmem:[%s2 + $0x38] sm:$0xf]
        %v1160 = vld [vmem:[%s2 + $0x3c] sm:$0xf]
        %v1161 = vld [vmem:[%s3] sm:$0xff]
        %v1162 = vld [vmem:[%s3 + $0x8] sm:$0xff]
        %v1163 = vld [vmem:[%s3 + $0x10] sm:$0xff]
        %v1164 = vld [vmem:[%s3 + $0x18] sm:$0xff]
        %v1165 = vld [vmem:[%s3 + $0x20] sm:$0xff]
        %v1166 = vld [vmem:[%s3 + $0x28] sm:$0xff]
        %v1167 = vld [vmem:[%s3 + $0x30] sm:$0xff]
        %v1168 = vld [vmem:[%s3 + $0x38] sm:$0xff]
        %v1169 = vld [vmem:[%s3 + $0x40] sm:$0xff]
        %v1170 = vld [vmem:[%s3 + $0x48] sm:$0xff]
        %v1171 = vld [vmem:[%s3 + $0x50] sm:$0xff]
        %v1172 = vld [vmem:[%s3 + $0x58] sm:$0xff]
        %v1173 = vld [vmem:[%s3 + $0x60] sm:$0xff]
        %v1174 = vld [vmem:[%s3 + $0x68] sm:$0xff]
        %v1175 = vld [vmem:[%s3 + $0x70] sm:$0xff]
        %v1176 = vld [vmem:[%s3 + $0x78] sm:$0xff]
        %v1193 = vunpack.c.l.b16 %v1145
        %v1194 = vunpack.c.l.b16 %v1146
        %v1195 = vunpack.c.l.b16 %v1147
        %v1196 = vunpack.c.l.b16 %v1148
        %v1197 = vunpack.c.l.b16 %v1149
        %v1198 = vunpack.c.l.b16 %v1150
        %v1199 = vunpack.c.l.b16 %v1151
        %v1200 = vunpack.c.l.b16 %v1152
        %v1201 = vunpack.c.l.b16 %v1153
        %v1202 = vunpack.c.l.b16 %v1154
        %v1203 = vunpack.c.l.b16 %v1155
        %v1204 = vunpack.c.l.b16 %v1156
        %v1205 = vunpack.c.l.b16 %v1157
        %v1206 = vunpack.c.l.b16 %v1158
        %v1207 = vunpack.c.l.b16 %v1159
        %v1208 = vunpack.c.l.b16 %v1160
        %v1209 = vpack.c.b16 %v1194, %v1193
        %v1210 = vpack.c.b16 %v1196, %v1195
        %v1211 = vpack.c.b16 %v1198, %v1197
        %v1212 = vpack.c.b16 %v1200, %v1199
        %v1213 = vpack.c.b16 %v1202, %v1201
        %v1214 = vpack.c.b16 %v1204, %v1203
        %v1215 = vpack.c.b16 %v1206, %v1205
        %v1216 = vpack.c.b16 %v1208, %v1207
        %v1218 = vsel %vm846, %v1209, 0
        %v1221 = vsel %vm846, %v1210, 0
        %v1224 = vsel %vm846, %v1211, 0
        %v1227 = vsel %vm846, %v1212, 0
        %v1230 = vsel %vm846, %v1213, 0
        %v1233 = vsel %vm846, %v1214, 0
        %v1236 = vsel %vm846, %v1215, 0
        %v1239 = vsel %vm846, %v1216, 0
        %1241 = vmatpush.bf16.msra.mxu0 0
        %1242 = vmatpush.bf16.msra.mxu0 0
        %1243 = vmatpush.bf16.msra.mxu0 %v839
        %1244 = vmatpush.bf16.msra.mxu0 %v838
        %1245 = vmatpush.bf16.msra.mxu0 %v837
        %1246 = vmatpush.bf16.msra.mxu0 %v836
        %1247 = vmatpush.bf16.msra.mxu0 %v835
        %1248 = vmatpush.bf16.msra.mxu0 %v834
        %1249 = vmatmul.bf16.gmra.mxu0 %v1218
        %v1250 = vpop.f32.mrf.mxu0
        %v1251 = vadd.f32 %v1161, %v1250
        %v1252 = vpop.f32.mrf.mxu0
        %v1253 = vadd.f32 %v1162, %v1252
        %1254 = vmatmul.bf16.gmra.mxu0 %v1221
        %v1255 = vpop.f32.mrf.mxu0
        %v1256 = vadd.f32 %v1163, %v1255
        %v1257 = vpop.f32.mrf.mxu0
        %v1258 = vadd.f32 %v1164, %v1257
        %1259 = vmatmul.bf16.gmra.mxu0 %v1224
        %v1260 = vpop.f32.mrf.mxu0
        %v1261 = vadd.f32 %v1165, %v1260
        %v1262 = vpop.f32.mrf.mxu0
        %v1263 = vadd.f32 %v1166, %v1262
        %1264 = vmatmul.bf16.gmra.mxu0 %v1227
        %v1265 = vpop.f32.mrf.mxu0
        %v1266 = vadd.f32 %v1167, %v1265
        %v1267 = vpop.f32.mrf.mxu0
        %v1268 = vadd.f32 %v1168, %v1267
        %1269 = vmatmul.bf16.gmra.mxu0 %v1230
        %v1270 = vpop.f32.mrf.mxu0
        %v1271 = vadd.f32 %v1169, %v1270
        %v1272 = vpop.f32.mrf.mxu0
        %v1273 = vadd.f32 %v1170, %v1272
        %1274 = vmatmul.bf16.gmra.mxu0 %v1233
        %v1275 = vpop.f32.mrf.mxu0
        %v1276 = vadd.f32 %v1171, %v1275
        %v1277 = vpop.f32.mrf.mxu0
        %v1278 = vadd.f32 %v1172, %v1277
        %1279 = vmatmul.bf16.gmra.mxu0 %v1236
        %v1280 = vpop.f32.mrf.mxu0
        %v1281 = vadd.f32 %v1173, %v1280
        %v1282 = vpop.f32.mrf.mxu0
        %v1283 = vadd.f32 %v1174, %v1282
        %1284 = vmatmul.bf16.gmra.mxu0 %v1239
        %v1285 = vpop.f32.mrf.mxu0
        %v1286 = vadd.f32 %v1175, %v1285
        %v1287 = vpop.f32.mrf.mxu0
        %v1288 = vadd.f32 %v1176, %v1287
        %1289 = vdwg.mxu0
        %v1290 = vpack.c.bf16 %v881, %v881
        %v1291 = vpack.c.bf16 %v883, %v883
        %v1292 = vpack.c.bf16 %v886, %v886
        %v1293 = vpack.c.bf16 %v888, %v888
        %v1294 = vpack.c.bf16 %v891, %v891
        %v1295 = vpack.c.bf16 %v893, %v893
        %v1296 = vpack.c.bf16 %v896, %v896
        %v1297 = vpack.c.bf16 %v898, %v898
        %v1298 = vpack.c.bf16 %v901, %v901
        %v1299 = vpack.c.bf16 %v903, %v903
        %v1300 = vpack.c.bf16 %v906, %v906
        %v1301 = vpack.c.bf16 %v908, %v908
        %v1302 = vpack.c.bf16 %v911, %v911
        %v1303 = vpack.c.bf16 %v913, %v913
        %v1304 = vpack.c.bf16 %v916, %v916
        %v1305 = vpack.c.bf16 %v918, %v918
        %v1306 = vpack.c.bf16 %v1106, %v1106
        %v1307 = vpack.c.bf16 %v1108, %v1108
        %v1308 = vpack.c.bf16 %v1111, %v1111
        %v1309 = vpack.c.bf16 %v1113, %v1113
        %v1310 = vpack.c.bf16 %v1116, %v1116
        %v1311 = vpack.c.bf16 %v1118, %v1118
        %v1312 = vpack.c.bf16 %v1121, %v1121
        %v1313 = vpack.c.bf16 %v1123, %v1123
        %v1314 = vpack.c.bf16 %v1126, %v1126
        %v1315 = vpack.c.bf16 %v1128, %v1128
        %v1316 = vpack.c.bf16 %v1131, %v1131
        %v1317 = vpack.c.bf16 %v1133, %v1133
        %v1318 = vpack.c.bf16 %v1136, %v1136
        %v1319 = vpack.c.bf16 %v1138, %v1138
        %v1320 = vpack.c.bf16 %v1141, %v1141
        %v1321 = vpack.c.bf16 %v1143, %v1143
        %1322 = vxpose.xlu0.b32.start [1/16] %v1251, 128
        %1323 = vxpose.xlu0.b32.cont [2/16] 0.0, 128
        %1324 = vxpose.xlu0.b32.cont [3/16] 0.0, 128
        %1325 = vxpose.xlu0.b32.cont [4/16] 0.0, 128
        %1326 = vxpose.xlu0.b32.cont [5/16] 0.0, 128
        %1327 = vxpose.xlu0.b32.cont [6/16] 0.0, 128
        %1328 = vxpose.xlu0.b32.cont [7/16] 0.0, 128
        %1329 = vxpose.xlu0.b32.cont [8/16] 0.0, 128
        %1330 = vxpose.xlu0.b32.cont [9/16] 0.0, 128
        %1331 = vxpose.xlu0.b32.cont [10/16] 0.0, 128
        %1332 = vxpose.xlu0.b32.cont [11/16] 0.0, 128
        %1333 = vxpose.xlu0.b32.cont [12/16] 0.0, 128
        %1334 = vxpose.xlu0.b32.cont [13/16] 0.0, 128
        %1335 = vxpose.xlu0.b32.cont [14/16] 0.0, 128
        %1336 = vxpose.xlu0.b32.cont [15/16] 0.0, 128
        %1337 = vxpose.xlu0.b32.end [16/16] 0.0, 128
        %v1338 = vpop.trf.xlu0
        %v1339 = vpop.trf.xlu0
        %v1340 = vpop.trf.xlu0
        %v1341 = vpop.trf.xlu0
        %v1342 = vpop.trf.xlu0
        %v1343 = vpop.trf.xlu0
        %v1344 = vpop.trf.xlu0
        %v1345 = vpop.trf.xlu0
        %v1346 = vpop.trf.xlu0
        %v1347 = vpop.trf.xlu0
        %v1348 = vpop.trf.xlu0
        %v1349 = vpop.trf.xlu0
        %v1350 = vpop.trf.xlu0
        %v1351 = vpop.trf.xlu0
        %v1352 = vpop.trf.xlu0
        %v1353 = vpop.trf.xlu0
        %1354 = vxpose.xlu0.b32.start [1/16] %v1253, 128
        %1355 = vxpose.xlu0.b32.cont [2/16] 0.0, 128
        %1356 = vxpose.xlu0.b32.cont [3/16] 0.0, 128
        %1357 = vxpose.xlu0.b32.cont [4/16] 0.0, 128
        %1358 = vxpose.xlu0.b32.cont [5/16] 0.0, 128
        %1359 = vxpose.xlu0.b32.cont [6/16] 0.0, 128
        %1360 = vxpose.xlu0.b32.cont [7/16] 0.0, 128
        %1361 = vxpose.xlu0.b32.cont [8/16] 0.0, 128
        %1362 = vxpose.xlu0.b32.cont [9/16] 0.0, 128
        %1363 = vxpose.xlu0.b32.cont [10/16] 0.0, 128
        %1364 = vxpose.xlu0.b32.cont [11/16] 0.0, 128
        %1365 = vxpose.xlu0.b32.cont [12/16] 0.0, 128
        %1366 = vxpose.xlu0.b32.cont [13/16] 0.0, 128
        %1367 = vxpose.xlu0.b32.cont [14/16] 0.0, 128
        %1368 = vxpose.xlu0.b32.cont [15/16] 0.0, 128
        %1369 = vxpose.xlu0.b32.end [16/16] 0.0, 128
        %v1370 = vpop.trf.xlu0
        %v1371 = vpop.trf.xlu0
        %v1372 = vpop.trf.xlu0
        %v1373 = vpop.trf.xlu0
        %v1374 = vpop.trf.xlu0
        %v1375 = vpop.trf.xlu0
        %v1376 = vpop.trf.xlu0
        %v1377 = vpop.trf.xlu0
        %v1378 = vpop.trf.xlu0
        %v1379 = vpop.trf.xlu0
        %v1380 = vpop.trf.xlu0
        %v1381 = vpop.trf.xlu0
        %v1382 = vpop.trf.xlu0
        %v1383 = vpop.trf.xlu0
        %v1384 = vpop.trf.xlu0
        %v1385 = vpop.trf.xlu0
        %1386 = vxpose.xlu0.b32.start [1/16] %v1256, 128
        %1387 = vxpose.xlu0.b32.cont [2/16] 0.0, 128
        %1388 = vxpose.xlu0.b32.cont [3/16] 0.0, 128
        %1389 = vxpose.xlu0.b32.cont [4/16] 0.0, 128
        %1390 = vxpose.xlu0.b32.cont [5/16] 0.0, 128
        %1391 = vxpose.xlu0.b32.cont [6/16] 0.0, 128
        %1392 = vxpose.xlu0.b32.cont [7/16] 0.0, 128
        %1393 = vxpose.xlu0.b32.cont [8/16] 0.0, 128
        %1394 = vxpose.xlu0.b32.cont [9/16] 0.0, 128
        %1395 = vxpose.xlu0.b32.cont [10/16] 0.0, 128
        %1396 = vxpose.xlu0.b32.cont [11/16] 0.0, 128
        %1397 = vxpose.xlu0.b32.cont [12/16] 0.0, 128
        %1398 = vxpose.xlu0.b32.cont [13/16] 0.0, 128
        %1399 = vxpose.xlu0.b32.cont [14/16] 0.0, 128
        %1400 = vxpose.xlu0.b32.cont [15/16] 0.0, 128
        %1401 = vxpose.xlu0.b32.end [16/16] 0.0, 128
        %v1402 = vpop.trf.xlu0
        %v1403 = vpop.trf.xlu0
        %v1404 = vpop.trf.xlu0
        %v1405 = vpop.trf.xlu0
        %v1406 = vpop.trf.xlu0
        %v1407 = vpop.trf.xlu0
        %v1408 = vpop.trf.xlu0
        %v1409 = vpop.trf.xlu0
        %v1410 = vpop.trf.xlu0
        %v1411 = vpop.trf.xlu0
        %v1412 = vpop.trf.xlu0
        %v1413 = vpop.trf.xlu0
        %v1414 = vpop.trf.xlu0
        %v1415 = vpop.trf.xlu0
        %v1416 = vpop.trf.xlu0
        %v1417 = vpop.trf.xlu0
        %1418 = vxpose.xlu0.b32.start [1/16] %v1258, 128
        %1419 = vxpose.xlu0.b32.cont [2/16] 0.0, 128
        %1420 = vxpose.xlu0.b32.cont [3/16] 0.0, 128
        %1421 = vxpose.xlu0.b32.cont [4/16] 0.0, 128
        %1422 = vxpose.xlu0.b32.cont [5/16] 0.0, 128
        %1423 = vxpose.xlu0.b32.cont [6/16] 0.0, 128
        %1424 = vxpose.xlu0.b32.cont [7/16] 0.0, 128
        %1425 = vxpose.xlu0.b32.cont [8/16] 0.0, 128
        %1426 = vxpose.xlu0.b32.cont [9/16] 0.0, 128
        %1427 = vxpose.xlu0.b32.cont [10/16] 0.0, 128
        %1428 = vxpose.xlu0.b32.cont [11/16] 0.0, 128
        %1429 = vxpose.xlu0.b32.cont [12/16] 0.0, 128
        %1430 = vxpose.xlu0.b32.cont [13/16] 0.0, 128
        %1431 = vxpose.xlu0.b32.cont [14/16] 0.0, 128
        %1432 = vxpose.xlu0.b32.cont [15/16] 0.0, 128
        %1433 = vxpose.xlu0.b32.end [16/16] 0.0, 128
        %v1434 = vpop.trf.xlu0
        %v1435 = vpop.trf.xlu0
        %v1436 = vpop.trf.xlu0
        %v1437 = vpop.trf.xlu0
        %v1438 = vpop.trf.xlu0
        %v1439 = vpop.trf.xlu0
        %v1440 = vpop.trf.xlu0
        %v1441 = vpop.trf.xlu0
        %v1442 = vpop.trf.xlu0
        %v1443 = vpop.trf.xlu0
        %v1444 = vpop.trf.xlu0
        %v1445 = vpop.trf.xlu0
        %v1446 = vpop.trf.xlu0
        %v1447 = vpop.trf.xlu0
        %v1448 = vpop.trf.xlu0
        %v1449 = vpop.trf.xlu0
        %1450 = vxpose.xlu0.b32.start [1/16] %v1261, 128
        %1451 = vxpose.xlu0.b32.cont [2/16] 0.0, 128
        %1452 = vxpose.xlu0.b32.cont [3/16] 0.0, 128
        %1453 = vxpose.xlu0.b32.cont [4/16] 0.0, 128
        %1454 = vxpose.xlu0.b32.cont [5/16] 0.0, 128
        %1455 = vxpose.xlu0.b32.cont [6/16] 0.0, 128
        %1456 = vxpose.xlu0.b32.cont [7/16] 0.0, 128
        %1457 = vxpose.xlu0.b32.cont [8/16] 0.0, 128
        %1458 = vxpose.xlu0.b32.cont [9/16] 0.0, 128
        %1459 = vxpose.xlu0.b32.cont [10/16] 0.0, 128
        %1460 = vxpose.xlu0.b32.cont [11/16] 0.0, 128
        %1461 = vxpose.xlu0.b32.cont [12/16] 0.0, 128
        %1462 = vxpose.xlu0.b32.cont [13/16] 0.0, 128
        %1463 = vxpose.xlu0.b32.cont [14/16] 0.0, 128
        %1464 = vxpose.xlu0.b32.cont [15/16] 0.0, 128
        %1465 = vxpose.xlu0.b32.end [16/16] 0.0, 128
        %v1466 = vpop.trf.xlu0
        %v1467 = vpop.trf.xlu0
        %v1468 = vpop.trf.xlu0
        %v1469 = vpop.trf.xlu0
        %v1470 = vpop.trf.xlu0
        %v1471 = vpop.trf.xlu0
        %v1472 = vpop.trf.xlu0
        %v1473 = vpop.trf.xlu0
        %v1474 = vpop.trf.xlu0
        %v1475 = vpop.trf.xlu0
        %v1476 = vpop.trf.xlu0
        %v1477 = vpop.trf.xlu0
        %v1478 = vpop.trf.xlu0
        %v1479 = vpop.trf.xlu0
        %v1480 = vpop.trf.xlu0
        %v1481 = vpop.trf.xlu0
        %1482 = vxpose.xlu0.b32.start [1/16] %v1263, 128
        %1483 = vxpose.xlu0.b32.cont [2/16] 0.0, 128
        %1484 = vxpose.xlu0.b32.cont [3/16] 0.0, 128
        %1485 = vxpose.xlu0.b32.cont [4/16] 0.0, 128
        %1486 = vxpose.xlu0.b32.cont [5/16] 0.0, 128
        %1487 = vxpose.xlu0.b32.cont [6/16] 0.0, 128
        %1488 = vxpose.xlu0.b32.cont [7/16] 0.0, 128
        %1489 = vxpose.xlu0.b32.cont [8/16] 0.0, 128
        %1490 = vxpose.xlu0.b32.cont [9/16] 0.0, 128
        %1491 = vxpose.xlu0.b32.cont [10/16] 0.0, 128
        %1492 = vxpose.xlu0.b32.cont [11/16] 0.0, 128
        %1493 = vxpose.xlu0.b32.cont [12/16] 0.0, 128
        %1494 = vxpose.xlu0.b32.cont [13/16] 0.0, 128
        %1495 = vxpose.xlu0.b32.cont [14/16] 0.0, 128
        %1496 = vxpose.xlu0.b32.cont [15/16] 0.0, 128
        %1497 = vxpose.xlu0.b32.end [16/16] 0.0, 128
        %v1498 = vpop.trf.xlu0
        %v1499 = vpop.trf.xlu0
        %v1500 = vpop.trf.xlu0
        %v1501 = vpop.trf.xlu0
        %v1502 = vpop.trf.xlu0
        %v1503 = vpop.trf.xlu0
        %v1504 = vpop.trf.xlu0
        %v1505 = vpop.trf.xlu0
        %v1506 = vpop.trf.xlu0
        %v1507 = vpop.trf.xlu0
        %v1508 = vpop.trf.xlu0
        %v1509 = vpop.trf.xlu0
        %v1510 = vpop.trf.xlu0
        %v1511 = vpop.trf.xlu0
        %v1512 = vpop.trf.xlu0
        %v1513 = vpop.trf.xlu0
        %1514 = vxpose.xlu0.b32.start [1/16] %v1266, 128
        %1515 = vxpose.xlu0.b32.cont [2/16] 0.0, 128
        %1516 = vxpose.xlu0.b32.cont [3/16] 0.0, 128
        %1517 = vxpose.xlu0.b32.cont [4/16] 0.0, 128
        %1518 = vxpose.xlu0.b32.cont [5/16] 0.0, 128
        %1519 = vxpose.xlu0.b32.cont [6/16] 0.0, 128
        %1520 = vxpose.xlu0.b32.cont [7/16] 0.0, 128
        %1521 = vxpose.xlu0.b32.cont [8/16] 0.0, 128
        %1522 = vxpose.xlu0.b32.cont [9/16] 0.0, 128
        %1523 = vxpose.xlu0.b32.cont [10/16] 0.0, 128
        %1524 = vxpose.xlu0.b32.cont [11/16] 0.0, 128
        %1525 = vxpose.xlu0.b32.cont [12/16] 0.0, 128
        %1526 = vxpose.xlu0.b32.cont [13/16] 0.0, 128
        %1527 = vxpose.xlu0.b32.cont [14/16] 0.0, 128
        %1528 = vxpose.xlu0.b32.cont [15/16] 0.0, 128
        %1529 = vxpose.xlu0.b32.end [16/16] 0.0, 128
        %v1530 = vpop.trf.xlu0
        %v1531 = vpop.trf.xlu0
        %v1532 = vpop.trf.xlu0
        %v1533 = vpop.trf.xlu0
        %v1534 = vpop.trf.xlu0
        %v1535 = vpop.trf.xlu0
        %v1536 = vpop.trf.xlu0
        %v1537 = vpop.trf.xlu0
        %v1538 = vpop.trf.xlu0
        %v1539 = vpop.trf.xlu0
        %v1540 = vpop.trf.xlu0
        %v1541 = vpop.trf.xlu0
        %v1542 = vpop.trf.xlu0
        %v1543 = vpop.trf.xlu0
        %v1544 = vpop.trf.xlu0
        %v1545 = vpop.trf.xlu0
        %1546 = vxpose.xlu0.b32.start [1/16] %v1268, 128
        %1547 = vxpose.xlu0.b32.cont [2/16] 0.0, 128
        %1548 = vxpose.xlu0.b32.cont [3/16] 0.0, 128
        %1549 = vxpose.xlu0.b32.cont [4/16] 0.0, 128
        %1550 = vxpose.xlu0.b32.cont [5/16] 0.0, 128
        %1551 = vxpose.xlu0.b32.cont [6/16] 0.0, 128
        %1552 = vxpose.xlu0.b32.cont [7/16] 0.0, 128
        %1553 = vxpose.xlu0.b32.cont [8/16] 0.0, 128
        %1554 = vxpose.xlu0.b32.cont [9/16] 0.0, 128
        %1555 = vxpose.xlu0.b32.cont [10/16] 0.0, 128
        %1556 = vxpose.xlu0.b32.cont [11/16] 0.0, 128
        %1557 = vxpose.xlu0.b32.cont [12/16] 0.0, 128
        %1558 = vxpose.xlu0.b32.cont [13/16] 0.0, 128
        %1559 = vxpose.xlu0.b32.cont [14/16] 0.0, 128
        %1560 = vxpose.xlu0.b32.cont [15/16] 0.0, 128
        %1561 = vxpose.xlu0.b32.end [16/16] 0.0, 128
        %v1562 = vpop.trf.xlu0
        %v1563 = vpop.trf.xlu0
        %v1564 = vpop.trf.xlu0
        %v1565 = vpop.trf.xlu0
        %v1566 = vpop.trf.xlu0
        %v1567 = vpop.trf.xlu0
        %v1568 = vpop.trf.xlu0
        %v1569 = vpop.trf.xlu0
        %v1570 = vpop.trf.xlu0
        %v1571 = vpop.trf.xlu0
        %v1572 = vpop.trf.xlu0
        %v1573 = vpop.trf.xlu0
        %v1574 = vpop.trf.xlu0
        %v1575 = vpop.trf.xlu0
        %v1576 = vpop.trf.xlu0
        %v1577 = vpop.trf.xlu0
        %1578 = vxpose.xlu0.b32.start [1/16] %v1271, 128
        %1579 = vxpose.xlu0.b32.cont [2/16] 0.0, 128
        %1580 = vxpose.xlu0.b32.cont [3/16] 0.0, 128
        %1581 = vxpose.xlu0.b32.cont [4/16] 0.0, 128
        %1582 = vxpose.xlu0.b32.cont [5/16] 0.0, 128
        %1583 = vxpose.xlu0.b32.cont [6/16] 0.0, 128
        %1584 = vxpose.xlu0.b32.cont [7/16] 0.0, 128
        %1585 = vxpose.xlu0.b32.cont [8/16] 0.0, 128
        %1586 = vxpose.xlu0.b32.cont [9/16] 0.0, 128
        %1587 = vxpose.xlu0.b32.cont [10/16] 0.0, 128
        %1588 = vxpose.xlu0.b32.cont [11/16] 0.0, 128
        %1589 = vxpose.xlu0.b32.cont [12/16] 0.0, 128
        %1590 = vxpose.xlu0.b32.cont [13/16] 0.0, 128
        %1591 = vxpose.xlu0.b32.cont [14/16] 0.0, 128
        %1592 = vxpose.xlu0.b32.cont [15/16] 0.0, 128
        %1593 = vxpose.xlu0.b32.end [16/16] 0.0, 128
        %v1594 = vpop.trf.xlu0
        %v1595 = vpop.trf.xlu0
        %v1596 = vpop.trf.xlu0
        %v1597 = vpop.trf.xlu0
        %v1598 = vpop.trf.xlu0
        %v1599 = vpop.trf.xlu0
        %v1600 = vpop.trf.xlu0
        %v1601 = vpop.trf.xlu0
        %v1602 = vpop.trf.xlu0
        %v1603 = vpop.trf.xlu0
        %v1604 = vpop.trf.xlu0
        %v1605 = vpop.trf.xlu0
        %v1606 = vpop.trf.xlu0
        %v1607 = vpop.trf.xlu0
        %v1608 = vpop.trf.xlu0
        %v1609 = vpop.trf.xlu0
        %1610 = vxpose.xlu0.b32.start [1/16] %v1273, 128
        %1611 = vxpose.xlu0.b32.cont [2/16] 0.0, 128
        %1612 = vxpose.xlu0.b32.cont [3/16] 0.0, 128
        %1613 = vxpose.xlu0.b32.cont [4/16] 0.0, 128
        %1614 = vxpose.xlu0.b32.cont [5/16] 0.0, 128
        %1615 = vxpose.xlu0.b32.cont [6/16] 0.0, 128
        %1616 = vxpose.xlu0.b32.cont [7/16] 0.0, 128
        %1617 = vxpose.xlu0.b32.cont [8/16] 0.0, 128
        %1618 = vxpose.xlu0.b32.cont [9/16] 0.0, 128
        %1619 = vxpose.xlu0.b32.cont [10/16] 0.0, 128
        %1620 = vxpose.xlu0.b32.cont [11/16] 0.0, 128
        %1621 = vxpose.xlu0.b32.cont [12/16] 0.0, 128
        %1622 = vxpose.xlu0.b32.cont [13/16] 0.0, 128
        %1623 = vxpose.xlu0.b32.cont [14/16] 0.0, 128
        %1624 = vxpose.xlu0.b32.cont [15/16] 0.0, 128
        %1625 = vxpose.xlu0.b32.end [16/16] 0.0, 128
        %v1626 = vpop.trf.xlu0
        %v1627 = vpop.trf.xlu0
        %v1628 = vpop.trf.xlu0
        %v1629 = vpop.trf.xlu0
        %v1630 = vpop.trf.xlu0
        %v1631 = vpop.trf.xlu0
        %v1632 = vpop.trf.xlu0
        %v1633 = vpop.trf.xlu0
        %v1634 = vpop.trf.xlu0
        %v1635 = vpop.trf.xlu0
        %v1636 = vpop.trf.xlu0
        %v1637 = vpop.trf.xlu0
        %v1638 = vpop.trf.xlu0
        %v1639 = vpop.trf.xlu0
        %v1640 = vpop.trf.xlu0
        %v1641 = vpop.trf.xlu0
        %1642 = vxpose.xlu0.b32.start [1/16] %v1276, 128
        %1643 = vxpose.xlu0.b32.cont [2/16] 0.0, 128
        %1644 = vxpose.xlu0.b32.cont [3/16] 0.0, 128
        %1645 = vxpose.xlu0.b32.cont [4/16] 0.0, 128
        %1646 = vxpose.xlu0.b32.cont [5/16] 0.0, 128
        %1647 = vxpose.xlu0.b32.cont [6/16] 0.0, 128
        %1648 = vxpose.xlu0.b32.cont [7/16] 0.0, 128
        %1649 = vxpose.xlu0.b32.cont [8/16] 0.0, 128
        %1650 = vxpose.xlu0.b32.cont [9/16] 0.0, 128
        %1651 = vxpose.xlu0.b32.cont [10/16] 0.0, 128
        %1652 = vxpose.xlu0.b32.cont [11/16] 0.0, 128
        %1653 = vxpose.xlu0.b32.cont [12/16] 0.0, 128
        %1654 = vxpose.xlu0.b32.cont [13/16] 0.0, 128
        %1655 = vxpose.xlu0.b32.cont [14/16] 0.0, 128
        %1656 = vxpose.xlu0.b32.cont [15/16] 0.0, 128
        %1657 = vxpose.xlu0.b32.end [16/16] 0.0, 128
        %v1658 = vpop.trf.xlu0
        %v1659 = vpop.trf.xlu0
        %v1660 = vpop.trf.xlu0
        %v1661 = vpop.trf.xlu0
        %v1662 = vpop.trf.xlu0
        %v1663 = vpop.trf.xlu0
        %v1664 = vpop.trf.xlu0
        %v1665 = vpop.trf.xlu0
        %v1666 = vpop.trf.xlu0
        %v1667 = vpop.trf.xlu0
        %v1668 = vpop.trf.xlu0
        %v1669 = vpop.trf.xlu0
        %v1670 = vpop.trf.xlu0
        %v1671 = vpop.trf.xlu0
        %v1672 = vpop.trf.xlu0
        %v1673 = vpop.trf.xlu0
        %1674 = vxpose.xlu0.b32.start [1/16] %v1278, 128
        %1675 = vxpose.xlu0.b32.cont [2/16] 0.0, 128
        %1676 = vxpose.xlu0.b32.cont [3/16] 0.0, 128
        %1677 = vxpose.xlu0.b32.cont [4/16] 0.0, 128
        %1678 = vxpose.xlu0.b32.cont [5/16] 0.0, 128
        %1679 = vxpose.xlu0.b32.cont [6/16] 0.0, 128
        %1680 = vxpose.xlu0.b32.cont [7/16] 0.0, 128
        %1681 = vxpose.xlu0.b32.cont [8/16] 0.0, 128
        %1682 = vxpose.xlu0.b32.cont [9/16] 0.0, 128
        %1683 = vxpose.xlu0.b32.cont [10/16] 0.0, 128
        %1684 = vxpose.xlu0.b32.cont [11/16] 0.0, 128
        %1685 = vxpose.xlu0.b32.cont [12/16] 0.0, 128
        %1686 = vxpose.xlu0.b32.cont [13/16] 0.0, 128
        %1687 = vxpose.xlu0.b32.cont [14/16] 0.0, 128
        %1688 = vxpose.xlu0.b32.cont [15/16] 0.0, 128
        %1689 = vxpose.xlu0.b32.end [16/16] 0.0, 128
        %v1690 = vpop.trf.xlu0
        %v1691 = vpop.trf.xlu0
        %v1692 = vpop.trf.xlu0
        %v1693 = vpop.trf.xlu0
        %v1694 = vpop.trf.xlu0
        %v1695 = vpop.trf.xlu0
        %v1696 = vpop.trf.xlu0
        %v1697 = vpop.trf.xlu0
        %v1698 = vpop.trf.xlu0
        %v1699 = vpop.trf.xlu0
        %v1700 = vpop.trf.xlu0
        %v1701 = vpop.trf.xlu0
        %v1702 = vpop.trf.xlu0
        %v1703 = vpop.trf.xlu0
        %v1704 = vpop.trf.xlu0
        %v1705 = vpop.trf.xlu0
        %1706 = vxpose.xlu0.b32.start [1/16] %v1281, 128
        %1707 = vxpose.xlu0.b32.cont [2/16] 0.0, 128
        %1708 = vxpose.xlu0.b32.cont [3/16] 0.0, 128
        %1709 = vxpose.xlu0.b32.cont [4/16] 0.0, 128
        %1710 = vxpose.xlu0.b32.cont [5/16] 0.0, 128
        %1711 = vxpose.xlu0.b32.cont [6/16] 0.0, 128
        %1712 = vxpose.xlu0.b32.cont [7/16] 0.0, 128
        %1713 = vxpose.xlu0.b32.cont [8/16] 0.0, 128
        %1714 = vxpose.xlu0.b32.cont [9/16] 0.0, 128
        %1715 = vxpose.xlu0.b32.cont [10/16] 0.0, 128
        %1716 = vxpose.xlu0.b32.cont [11/16] 0.0, 128
        %1717 = vxpose.xlu0.b32.cont [12/16] 0.0, 128
        %1718 = vxpose.xlu0.b32.cont [13/16] 0.0, 128
        %1719 = vxpose.xlu0.b32.cont [14/16] 0.0, 128
        %1720 = vxpose.xlu0.b32.cont [15/16] 0.0, 128
        %1721 = vxpose.xlu0.b32.end [16/16] 0.0, 128
        %v1722 = vpop.trf.xlu0
        %v1723 = vpop.trf.xlu0
        %v1724 = vpop.trf.xlu0
        %v1725 = vpop.trf.xlu0
        %v1726 = vpop.trf.xlu0
        %v1727 = vpop.trf.xlu0
        %v1728 = vpop.trf.xlu0
        %v1729 = vpop.trf.xlu0
        %v1730 = vpop.trf.xlu0
        %v1731 = vpop.trf.xlu0
        %v1732 = vpop.trf.xlu0
        %v1733 = vpop.trf.xlu0
        %v1734 = vpop.trf.xlu0
        %v1735 = vpop.trf.xlu0
        %v1736 = vpop.trf.xlu0
        %v1737 = vpop.trf.xlu0
        %1738 = vxpose.xlu0.b32.start [1/16] %v1283, 128
        %1739 = vxpose.xlu0.b32.cont [2/16] 0.0, 128
        %1740 = vxpose.xlu0.b32.cont [3/16] 0.0, 128
        %1741 = vxpose.xlu0.b32.cont [4/16] 0.0, 128
        %1742 = vxpose.xlu0.b32.cont [5/16] 0.0, 128
        %1743 = vxpose.xlu0.b32.cont [6/16] 0.0, 128
        %1744 = vxpose.xlu0.b32.cont [7/16] 0.0, 128
        %1745 = vxpose.xlu0.b32.cont [8/16] 0.0, 128
        %1746 = vxpose.xlu0.b32.cont [9/16] 0.0, 128
        %1747 = vxpose.xlu0.b32.cont [10/16] 0.0, 128
        %1748 = vxpose.xlu0.b32.cont [11/16] 0.0, 128
        %1749 = vxpose.xlu0.b32.cont [12/16] 0.0, 128
        %1750 = vxpose.xlu0.b32.cont [13/16] 0.0, 128
        %1751 = vxpose.xlu0.b32.cont [14/16] 0.0, 128
        %1752 = vxpose.xlu0.b32.cont [15/16] 0.0, 128
        %1753 = vxpose.xlu0.b32.end [16/16] 0.0, 128
        %v1754 = vpop.trf.xlu0
        %v1755 = vpop.trf.xlu0
        %v1756 = vpop.trf.xlu0
        %v1757 = vpop.trf.xlu0
        %v1758 = vpop.trf.xlu0
        %v1759 = vpop.trf.xlu0
        %v1760 = vpop.trf.xlu0
        %v1761 = vpop.trf.xlu0
        %v1762 = vpop.trf.xlu0
        %v1763 = vpop.trf.xlu0
        %v1764 = vpop.trf.xlu0
        %v1765 = vpop.trf.xlu0
        %v1766 = vpop.trf.xlu0
        %v1767 = vpop.trf.xlu0
        %v1768 = vpop.trf.xlu0
        %v1769 = vpop.trf.xlu0
        %1770 = vxpose.xlu0.b32.start [1/16] %v1286, 128
        %1771 = vxpose.xlu0.b32.cont [2/16] 0.0, 128
        %1772 = vxpose.xlu0.b32.cont [3/16] 0.0, 128
        %1773 = vxpose.xlu0.b32.cont [4/16] 0.0, 128
        %1774 = vxpose.xlu0.b32.cont [5/16] 0.0, 128
        %1775 = vxpose.xlu0.b32.cont [6/16] 0.0, 128
        %1776 = vxpose.xlu0.b32.cont [7/16] 0.0, 128
        %1777 = vxpose.xlu0.b32.cont [8/16] 0.0, 128
        %1778 = vxpose.xlu0.b32.cont [9/16] 0.0, 128
        %1779 = vxpose.xlu0.b32.cont [10/16] 0.0, 128
        %1780 = vxpose.xlu0.b32.cont [11/16] 0.0, 128
        %1781 = vxpose.xlu0.b32.cont [12/16] 0.0, 128
        %1782 = vxpose.xlu0.b32.cont [13/16] 0.0, 128
        %1783 = vxpose.xlu0.b32.cont [14/16] 0.0, 128
        %1784 = vxpose.xlu0.b32.cont [15/16] 0.0, 128
        %1785 = vxpose.xlu0.b32.end [16/16] 0.0, 128
        %v1786 = vpop.trf.xlu0
        %v1787 = vpop.trf.xlu0
        %v1788 = vpop.trf.xlu0
        %v1789 = vpop.trf.xlu0
        %v1790 = vpop.trf.xlu0
        %v1791 = vpop.trf.xlu0
        %v1792 = vpop.trf.xlu0
        %v1793 = vpop.trf.xlu0
        %v1794 = vpop.trf.xlu0
        %v1795 = vpop.trf.xlu0
        %v1796 = vpop.trf.xlu0
        %v1797 = vpop.trf.xlu0
        %v1798 = vpop.trf.xlu0
        %v1799 = vpop.trf.xlu0
        %v1800 = vpop.trf.xlu0
        %v1801 = vpop.trf.xlu0
        %1802 = vxpose.xlu0.b32.start [1/16] %v1288, 128
        %1803 = vxpose.xlu0.b32.cont [2/16] 0.0, 128
        %1804 = vxpose.xlu0.b32.cont [3/16] 0.0, 128
        %1805 = vxpose.xlu0.b32.cont [4/16] 0.0, 128
        %1806 = vxpose.xlu0.b32.cont [5/16] 0.0, 128
        %1807 = vxpose.xlu0.b32.cont [6/16] 0.0, 128
        %1808 = vxpose.xlu0.b32.cont [7/16] 0.0, 128
        %1809 = vxpose.xlu0.b32.cont [8/16] 0.0, 128
        %1810 = vxpose.xlu0.b32.cont [9/16] 0.0, 128
        %1811 = vxpose.xlu0.b32.cont [10/16] 0.0, 128
        %1812 = vxpose.xlu0.b32.cont [11/16] 0.0, 128
        %1813 = vxpose.xlu0.b32.cont [12/16] 0.0, 128
        %1814 = vxpose.xlu0.b32.cont [13/16] 0.0, 128
        %1815 = vxpose.xlu0.b32.cont [14/16] 0.0, 128
        %1816 = vxpose.xlu0.b32.cont [15/16] 0.0, 128
        %1817 = vxpose.xlu0.b32.end [16/16] 0.0, 128
        %v1818 = vpop.trf.xlu0
        %v1819 = vpop.trf.xlu0
        %v1820 = vpop.trf.xlu0
        %v1821 = vpop.trf.xlu0
        %v1822 = vpop.trf.xlu0
        %v1823 = vpop.trf.xlu0
        %v1824 = vpop.trf.xlu0
        %v1825 = vpop.trf.xlu0
        %v1826 = vpop.trf.xlu0
        %v1827 = vpop.trf.xlu0
        %v1828 = vpop.trf.xlu0
        %v1829 = vpop.trf.xlu0
        %v1830 = vpop.trf.xlu0
        %v1831 = vpop.trf.xlu0
        %v1832 = vpop.trf.xlu0
        %v1833 = vpop.trf.xlu0
        %v1834 = vpack.c.bf16 %v1338, %v1338
        %v1835 = vpack.c.bf16 %v1370, %v1370
        %v1836 = vpack.c.bf16 %v1402, %v1402
        %v1837 = vpack.c.bf16 %v1434, %v1434
        %v1838 = vpack.c.bf16 %v1466, %v1466
        %v1839 = vpack.c.bf16 %v1498, %v1498
        %v1840 = vpack.c.bf16 %v1530, %v1530
        %v1841 = vpack.c.bf16 %v1562, %v1562
        %v1842 = vpack.c.bf16 %v1594, %v1594
        %v1843 = vpack.c.bf16 %v1626, %v1626
        %v1844 = vpack.c.bf16 %v1658, %v1658
        %v1845 = vpack.c.bf16 %v1690, %v1690
        %v1846 = vpack.c.bf16 %v1722, %v1722
        %v1847 = vpack.c.bf16 %v1754, %v1754
        %v1848 = vpack.c.bf16 %v1786, %v1786
        %v1849 = vpack.c.bf16 %v1818, %v1818
        %vm1850 = vcmask 64512
        %v1852 = vsel %vm1850, %v1834, 0
        %vm1854 = vcmask 1043456
        %v1856 = vsel %vm1854, %v1290, 0
        %1858 = vmatpush.bf16.msra.mxu0 0
        %1859 = vmatpush.bf16.msra.mxu0 0
        %1860 = vmatpush.bf16.msra.mxu0 0
        %1861 = vmatpush.bf16.msra.mxu0 0
        %1862 = vmatpush.bf16.msra.mxu0 0
        %1863 = vmatpush.bf16.msra.mxu0 0
        %1864 = vmatpush.bf16.msra.mxu0 0
        %1865 = vmatpush.bf16.msra.mxu0 %v1856
        %1866 = vmatmul.bf16.gmra.mxu0 %v1852
        %v1867 = vpop.f32.mrf.mxu0
        %v1868 = vadd.f32 0.0, %v1867
        %v1869 = vpop.f32.mrf.mxu0
        %1870 = vdwg.mxu0
        %v1872 = vsel %vm1850, %v1835, 0
        %v1875 = vsel %vm1854, %v1291, 0
        %1877 = vmatpush.bf16.msra.mxu0 0
        %1878 = vmatpush.bf16.msra.mxu0 0
        %1879 = vmatpush.bf16.msra.mxu0 0
        %1880 = vmatpush.bf16.msra.mxu0 0
        %1881 = vmatpush.bf16.msra.mxu0 0
        %1882 = vmatpush.bf16.msra.mxu0 0
        %1883 = vmatpush.bf16.msra.mxu0 0
        %1884 = vmatpush.bf16.msra.mxu0 %v1875
        %1885 = vmatmul.bf16.gmra.mxu0 %v1872
        %v1886 = vpop.f32.mrf.mxu0
        %v1887 = vadd.f32 0.0, %v1886
        %v1888 = vpop.f32.mrf.mxu0
        %1889 = vdwg.mxu0
        %v1891 = vsel %vm1850, %v1836, 0
        %v1894 = vsel %vm1854, %v1292, 0
        %1896 = vmatpush.bf16.msra.mxu0 0
        %1897 = vmatpush.bf16.msra.mxu0 0
        %1898 = vmatpush.bf16.msra.mxu0 0
        %1899 = vmatpush.bf16.msra.mxu0 0
        %1900 = vmatpush.bf16.msra.mxu0 0
        %1901 = vmatpush.bf16.msra.mxu0 0
        %1902 = vmatpush.bf16.msra.mxu0 0
        %1903 = vmatpush.bf16.msra.mxu0 %v1894
        %1904 = vmatmul.bf16.gmra.mxu0 %v1891
        %v1905 = vpop.f32.mrf.mxu0
        %v1906 = vadd.f32 0.0, %v1905
        %v1907 = vpop.f32.mrf.mxu0
        %1908 = vdwg.mxu0
        %v1910 = vsel %vm1850, %v1837, 0
        %v1913 = vsel %vm1854, %v1293, 0
        %1915 = vmatpush.bf16.msra.mxu0 0
        %1916 = vmatpush.bf16.msra.mxu0 0
        %1917 = vmatpush.bf16.msra.mxu0 0
        %1918 = vmatpush.bf16.msra.mxu0 0
        %1919 = vmatpush.bf16.msra.mxu0 0
        %1920 = vmatpush.bf16.msra.mxu0 0
        %1921 = vmatpush.bf16.msra.mxu0 0
        %1922 = vmatpush.bf16.msra.mxu0 %v1913
        %1923 = vmatmul.bf16.gmra.mxu0 %v1910
        %v1924 = vpop.f32.mrf.mxu0
        %v1925 = vadd.f32 0.0, %v1924
        %v1926 = vpop.f32.mrf.mxu0
        %1927 = vdwg.mxu0
        %v1929 = vsel %vm1850, %v1838, 0
        %v1932 = vsel %vm1854, %v1294, 0
        %1934 = vmatpush.bf16.msra.mxu0 0
        %1935 = vmatpush.bf16.msra.mxu0 0
        %1936 = vmatpush.bf16.msra.mxu0 0
        %1937 = vmatpush.bf16.msra.mxu0 0
        %1938 = vmatpush.bf16.msra.mxu0 0
        %1939 = vmatpush.bf16.msra.mxu0 0
        %1940 = vmatpush.bf16.msra.mxu0 0
        %1941 = vmatpush.bf16.msra.mxu0 %v1932
        %1942 = vmatmul.bf16.gmra.mxu0 %v1929
        %v1943 = vpop.f32.mrf.mxu0
        %v1944 = vadd.f32 0.0, %v1943
        %v1945 = vpop.f32.mrf.mxu0
        %1946 = vdwg.mxu0
        %v1948 = vsel %vm1850, %v1839, 0
        %v1951 = vsel %vm1854, %v1295, 0
        %1953 = vmatpush.bf16.msra.mxu0 0
        %1954 = vmatpush.bf16.msra.mxu0 0
        %1955 = vmatpush.bf16.msra.mxu0 0
        %1956 = vmatpush.bf16.msra.mxu0 0
        %1957 = vmatpush.bf16.msra.mxu0 0
        %1958 = vmatpush.bf16.msra.mxu0 0
        %1959 = vmatpush.bf16.msra.mxu0 0
        %1960 = vmatpush.bf16.msra.mxu0 %v1951
        %1961 = vmatmul.bf16.gmra.mxu0 %v1948
        %v1962 = vpop.f32.mrf.mxu0
        %v1963 = vadd.f32 0.0, %v1962
        %v1964 = vpop.f32.mrf.mxu0
        %1965 = vdwg.mxu0
        %v1967 = vsel %vm1850, %v1840, 0
        %v1970 = vsel %vm1854, %v1296, 0
        %1972 = vmatpush.bf16.msra.mxu0 0
        %1973 = vmatpush.bf16.msra.mxu0 0
        %1974 = vmatpush.bf16.msra.mxu0 0
        %1975 = vmatpush.bf16.msra.mxu0 0
        %1976 = vmatpush.bf16.msra.mxu0 0
        %1977 = vmatpush.bf16.msra.mxu0 0
        %1978 = vmatpush.bf16.msra.mxu0 0
        %1979 = vmatpush.bf16.msra.mxu0 %v1970
        %1980 = vmatmul.bf16.gmra.mxu0 %v1967
        %v1981 = vpop.f32.mrf.mxu0
        %v1982 = vadd.f32 0.0, %v1981
        %v1983 = vpop.f32.mrf.mxu0
        %1984 = vdwg.mxu0
        %v1986 = vsel %vm1850, %v1841, 0
        %v1989 = vsel %vm1854, %v1297, 0
        %1991 = vmatpush.bf16.msra.mxu0 0
        %1992 = vmatpush.bf16.msra.mxu0 0
        %1993 = vmatpush.bf16.msra.mxu0 0
        %1994 = vmatpush.bf16.msra.mxu0 0
        %1995 = vmatpush.bf16.msra.mxu0 0
        %1996 = vmatpush.bf16.msra.mxu0 0
        %1997 = vmatpush.bf16.msra.mxu0 0
        %1998 = vmatpush.bf16.msra.mxu0 %v1989
        %1999 = vmatmul.bf16.gmra.mxu0 %v1986
        %v2000 = vpop.f32.mrf.mxu0
        %v2001 = vadd.f32 0.0, %v2000
        %v2002 = vpop.f32.mrf.mxu0
        %2003 = vdwg.mxu0
        %v2005 = vsel %vm1850, %v1842, 0
        %v2008 = vsel %vm1854, %v1298, 0
        %2010 = vmatpush.bf16.msra.mxu0 0
        %2011 = vmatpush.bf16.msra.mxu0 0
        %2012 = vmatpush.bf16.msra.mxu0 0
        %2013 = vmatpush.bf16.msra.mxu0 0
        %2014 = vmatpush.bf16.msra.mxu0 0
        %2015 = vmatpush.bf16.msra.mxu0 0
        %2016 = vmatpush.bf16.msra.mxu0 0
        %2017 = vmatpush.bf16.msra.mxu0 %v2008
        %2018 = vmatmul.bf16.gmra.mxu0 %v2005
        %v2019 = vpop.f32.mrf.mxu0
        %v2020 = vadd.f32 0.0, %v2019
        %v2021 = vpop.f32.mrf.mxu0
        %2022 = vdwg.mxu0
        %v2024 = vsel %vm1850, %v1843, 0
        %v2027 = vsel %vm1854, %v1299, 0
        %2029 = vmatpush.bf16.msra.mxu0 0
        %2030 = vmatpush.bf16.msra.mxu0 0
        %2031 = vmatpush.bf16.msra.mxu0 0
        %2032 = vmatpush.bf16.msra.mxu0 0
        %2033 = vmatpush.bf16.msra.mxu0 0
        %2034 = vmatpush.bf16.msra.mxu0 0
        %2035 = vmatpush.bf16.msra.mxu0 0
        %2036 = vmatpush.bf16.msra.mxu0 %v2027
        %2037 = vmatmul.bf16.gmra.mxu0 %v2024
        %v2038 = vpop.f32.mrf.mxu0
        %v2039 = vadd.f32 0.0, %v2038
        %v2040 = vpop.f32.mrf.mxu0
        %2041 = vdwg.mxu0
        %v2043 = vsel %vm1850, %v1844, 0
        %v2046 = vsel %vm1854, %v1300, 0
        %2048 = vmatpush.bf16.msra.mxu0 0
        %2049 = vmatpush.bf16.msra.mxu0 0
        %2050 = vmatpush.bf16.msra.mxu0 0
        %2051 = vmatpush.bf16.msra.mxu0 0
        %2052 = vmatpush.bf16.msra.mxu0 0
        %2053 = vmatpush.bf16.msra.mxu0 0
        %2054 = vmatpush.bf16.msra.mxu0 0
        %2055 = vmatpush.bf16.msra.mxu0 %v2046
        %2056 = vmatmul.bf16.gmra.mxu0 %v2043
        %v2057 = vpop.f32.mrf.mxu0
        %v2058 = vadd.f32 0.0, %v2057
        %v2059 = vpop.f32.mrf.mxu0
        %2060 = vdwg.mxu0
        %v2062 = vsel %vm1850, %v1845, 0
        %v2065 = vsel %vm1854, %v1301, 0
        %2067 = vmatpush.bf16.msra.mxu0 0
        %2068 = vmatpush.bf16.msra.mxu0 0
        %2069 = vmatpush.bf16.msra.mxu0 0
        %2070 = vmatpush.bf16.msra.mxu0 0
        %2071 = vmatpush.bf16.msra.mxu0 0
        %2072 = vmatpush.bf16.msra.mxu0 0
        %2073 = vmatpush.bf16.msra.mxu0 0
        %2074 = vmatpush.bf16.msra.mxu0 %v2065
        %2075 = vmatmul.bf16.gmra.mxu0 %v2062
        %v2076 = vpop.f32.mrf.mxu0
        %v2077 = vadd.f32 0.0, %v2076
        %v2078 = vpop.f32.mrf.mxu0
        %2079 = vdwg.mxu0
        %v2081 = vsel %vm1850, %v1846, 0
        %v2084 = vsel %vm1854, %v1302, 0
        %2086 = vmatpush.bf16.msra.mxu0 0
        %2087 = vmatpush.bf16.msra.mxu0 0
        %2088 = vmatpush.bf16.msra.mxu0 0
        %2089 = vmatpush.bf16.msra.mxu0 0
        %2090 = vmatpush.bf16.msra.mxu0 0
        %2091 = vmatpush.bf16.msra.mxu0 0
        %2092 = vmatpush.bf16.msra.mxu0 0
        %2093 = vmatpush.bf16.msra.mxu0 %v2084
        %2094 = vmatmul.bf16.gmra.mxu0 %v2081
        %v2095 = vpop.f32.mrf.mxu0
        %v2096 = vadd.f32 0.0, %v2095
        %v2097 = vpop.f32.mrf.mxu0
        %2098 = vdwg.mxu0
        %v2100 = vsel %vm1850, %v1847, 0
        %v2103 = vsel %vm1854, %v1303, 0
        %2105 = vmatpush.bf16.msra.mxu0 0
        %2106 = vmatpush.bf16.msra.mxu0 0
        %2107 = vmatpush.bf16.msra.mxu0 0
        %2108 = vmatpush.bf16.msra.mxu0 0
        %2109 = vmatpush.bf16.msra.mxu0 0
        %2110 = vmatpush.bf16.msra.mxu0 0
        %2111 = vmatpush.bf16.msra.mxu0 0
        %2112 = vmatpush.bf16.msra.mxu0 %v2103
        %2113 = vmatmul.bf16.gmra.mxu0 %v2100
        %v2114 = vpop.f32.mrf.mxu0
        %v2115 = vadd.f32 0.0, %v2114
        %v2116 = vpop.f32.mrf.mxu0
        %2117 = vdwg.mxu0
        %v2119 = vsel %vm1850, %v1848, 0
        %v2122 = vsel %vm1854, %v1304, 0
        %2124 = vmatpush.bf16.msra.mxu0 0
        %2125 = vmatpush.bf16.msra.mxu0 0
        %2126 = vmatpush.bf16.msra.mxu0 0
        %2127 = vmatpush.bf16.msra.mxu0 0
        %2128 = vmatpush.bf16.msra.mxu0 0
        %2129 = vmatpush.bf16.msra.mxu0 0
        %2130 = vmatpush.bf16.msra.mxu0 0
        %2131 = vmatpush.bf16.msra.mxu0 %v2122
        %2132 = vmatmul.bf16.gmra.mxu0 %v2119
        %v2133 = vpop.f32.mrf.mxu0
        %v2134 = vadd.f32 0.0, %v2133
        %v2135 = vpop.f32.mrf.mxu0
        %2136 = vdwg.mxu0
        %v2138 = vsel %vm1850, %v1849, 0
        %v2141 = vsel %vm1854, %v1305, 0
        %2143 = vmatpush.bf16.msra.mxu0 0
        %2144 = vmatpush.bf16.msra.mxu0 0
        %2145 = vmatpush.bf16.msra.mxu0 0
        %2146 = vmatpush.bf16.msra.mxu0 0
        %2147 = vmatpush.bf16.msra.mxu0 0
        %2148 = vmatpush.bf16.msra.mxu0 0
        %2149 = vmatpush.bf16.msra.mxu0 0
        %2150 = vmatpush.bf16.msra.mxu0 %v2141
        %2151 = vmatmul.bf16.gmra.mxu0 %v2138
        %v2152 = vpop.f32.mrf.mxu0
        %v2153 = vadd.f32 0.0, %v2152
        %v2154 = vpop.f32.mrf.mxu0
        %2155 = vdwg.mxu0
        %v2156 = vmul.f32 %v1868, 0.35355338
        %v2157 = vmul.f32 %v1887, 0.35355338
        %v2158 = vmul.f32 %v1906, 0.35355338
        %v2159 = vmul.f32 %v1925, 0.35355338
        %v2160 = vmul.f32 %v1944, 0.35355338
        %v2161 = vmul.f32 %v1963, 0.35355338
        %v2162 = vmul.f32 %v1982, 0.35355338
        %v2163 = vmul.f32 %v2001, 0.35355338
        %v2164 = vmul.f32 %v2020, 0.35355338
        %v2165 = vmul.f32 %v2039, 0.35355338
        %v2166 = vmul.f32 %v2058, 0.35355338
        %v2167 = vmul.f32 %v2077, 0.35355338
        %v2168 = vmul.f32 %v2096, 0.35355338
        %v2169 = vmul.f32 %v2115, 0.35355338
        %v2170 = vmul.f32 %v2134, 0.35355338
        %v2171 = vmul.f32 %v2153, 0.35355338
        %vm2172 = vcmask 57344
        %v2173 = vsel %vm2172, %v2156, -inf
        %2174 = vmax.xlane.f32.xlu0 %v2173
        %v2175 = vpop.xlane.xlu0 %2174
        %v2176 = vsel %vm2172, %v2157, -inf
        %2177 = vmax.xlane.f32.xlu0 %v2176
        %v2178 = vpop.xlane.xlu0 %2177
        %v2179 = vsel %vm2172, %v2158, -inf
        %2180 = vmax.xlane.f32.xlu0 %v2179
        %v2181 = vpop.xlane.xlu0 %2180
        %v2182 = vsel %vm2172, %v2159, -inf
        %2183 = vmax.xlane.f32.xlu0 %v2182
        %v2184 = vpop.xlane.xlu0 %2183
        %v2185 = vsel %vm2172, %v2160, -inf
        %2186 = vmax.xlane.f32.xlu0 %v2185
        %v2187 = vpop.xlane.xlu0 %2186
        %v2188 = vsel %vm2172, %v2161, -inf
        %2189 = vmax.xlane.f32.xlu0 %v2188
        %v2190 = vpop.xlane.xlu0 %2189
        %v2191 = vsel %vm2172, %v2162, -inf
        %2192 = vmax.xlane.f32.xlu0 %v2191
        %v2193 = vpop.xlane.xlu0 %2192
        %v2194 = vsel %vm2172, %v2163, -inf
        %2195 = vmax.xlane.f32.xlu0 %v2194
        %v2196 = vpop.xlane.xlu0 %2195
        %v2197 = vsel %vm2172, %v2164, -inf
        %2198 = vmax.xlane.f32.xlu0 %v2197
        %v2199 = vpop.xlane.xlu0 %2198
        %v2200 = vsel %vm2172, %v2165, -inf
        %2201 = vmax.xlane.f32.xlu0 %v2200
        %v2202 = vpop.xlane.xlu0 %2201
        %v2203 = vsel %vm2172, %v2166, -inf
        %2204 = vmax.xlane.f32.xlu0 %v2203
        %v2205 = vpop.xlane.xlu0 %2204
        %v2206 = vsel %vm2172, %v2167, -inf
        %2207 = vmax.xlane.f32.xlu0 %v2206
        %v2208 = vpop.xlane.xlu0 %2207
        %v2209 = vsel %vm2172, %v2168, -inf
        %2210 = vmax.xlane.f32.xlu0 %v2209
        %v2211 = vpop.xlane.xlu0 %2210
        %v2212 = vsel %vm2172, %v2169, -inf
        %2213 = vmax.xlane.f32.xlu0 %v2212
        %v2214 = vpop.xlane.xlu0 %2213
        %v2215 = vsel %vm2172, %v2170, -inf
        %2216 = vmax.xlane.f32.xlu0 %v2215
        %v2217 = vpop.xlane.xlu0 %2216
        %v2218 = vsel %vm2172, %v2171, -inf
        %2219 = vmax.xlane.f32.xlu0 %v2218
        %v2220 = vpop.xlane.xlu0 %2219
        %v2221 = vsub.f32 %v2156, %v2175
        %v2222 = vsub.f32 %v2157, %v2178
        %v2223 = vsub.f32 %v2158, %v2181
        %v2224 = vsub.f32 %v2159, %v2184
        %v2225 = vsub.f32 %v2160, %v2187
        %v2226 = vsub.f32 %v2161, %v2190
        %v2227 = vsub.f32 %v2162, %v2193
        %v2228 = vsub.f32 %v2163, %v2196
        %v2229 = vsub.f32 %v2164, %v2199
        %v2230 = vsub.f32 %v2165, %v2202
        %v2231 = vsub.f32 %v2166, %v2205
        %v2232 = vsub.f32 %v2167, %v2208
        %v2233 = vsub.f32 %v2168, %v2211
        %v2234 = vsub.f32 %v2169, %v2214
        %v2235 = vsub.f32 %v2170, %v2217
        %v2236 = vsub.f32 %v2171, %v2220
        %v2237 = vmul.f32 %v2221, 1.442695
        %v2238 = vpow.pop %v2237
        %v2239 = vmul.f32 %v2222, 1.442695
        %v2240 = vpow.pop %v2239
        %v2241 = vmul.f32 %v2223, 1.442695
        %v2242 = vpow.pop %v2241
        %v2243 = vmul.f32 %v2224, 1.442695
        %v2244 = vpow.pop %v2243
        %v2245 = vmul.f32 %v2225, 1.442695
        %v2246 = vpow.pop %v2245
        %v2247 = vmul.f32 %v2226, 1.442695
        %v2248 = vpow.pop %v2247
        %v2249 = vmul.f32 %v2227, 1.442695
        %v2250 = vpow.pop %v2249
        %v2251 = vmul.f32 %v2228, 1.442695
        %v2252 = vpow.pop %v2251
        %v2253 = vmul.f32 %v2229, 1.442695
        %v2254 = vpow.pop %v2253
        %v2255 = vmul.f32 %v2230, 1.442695
        %v2256 = vpow.pop %v2255
        %v2257 = vmul.f32 %v2231, 1.442695
        %v2258 = vpow.pop %v2257
        %v2259 = vmul.f32 %v2232, 1.442695
        %v2260 = vpow.pop %v2259
        %v2261 = vmul.f32 %v2233, 1.442695
        %v2262 = vpow.pop %v2261
        %v2263 = vmul.f32 %v2234, 1.442695
        %v2264 = vpow.pop %v2263
        %v2265 = vmul.f32 %v2235, 1.442695
        %v2266 = vpow.pop %v2265
        %v2267 = vmul.f32 %v2236, 1.442695
        %v2268 = vpow.pop %v2267
        %v2269 = vsel %vm2172, %v2238, 0.0
        %2270 = vadd.xlane.f32.xlu0 %v2269
        %v2271 = vpop.xlane.xlu0 %2270
        %v2272 = vsel %vm2172, %v2240, 0.0
        %2273 = vadd.xlane.f32.xlu0 %v2272
        %v2274 = vpop.xlane.xlu0 %2273
        %v2275 = vsel %vm2172, %v2242, 0.0
        %2276 = vadd.xlane.f32.xlu0 %v2275
        %v2277 = vpop.xlane.xlu0 %2276
        %v2278 = vsel %vm2172, %v2244, 0.0
        %2279 = vadd.xlane.f32.xlu0 %v2278
        %v2280 = vpop.xlane.xlu0 %2279
        %v2281 = vsel %vm2172, %v2246, 0.0
        %2282 = vadd.xlane.f32.xlu0 %v2281
        %v2283 = vpop.xlane.xlu0 %2282
        %v2284 = vsel %vm2172, %v2248, 0.0
        %2285 = vadd.xlane.f32.xlu0 %v2284
        %v2286 = vpop.xlane.xlu0 %2285
        %v2287 = vsel %vm2172, %v2250, 0.0
        %2288 = vadd.xlane.f32.xlu0 %v2287
        %v2289 = vpop.xlane.xlu0 %2288
        %v2290 = vsel %vm2172, %v2252, 0.0
        %2291 = vadd.xlane.f32.xlu0 %v2290
        %v2292 = vpop.xlane.xlu0 %2291
        %v2293 = vsel %vm2172, %v2254, 0.0
        %2294 = vadd.xlane.f32.xlu0 %v2293
        %v2295 = vpop.xlane.xlu0 %2294
        %v2296 = vsel %vm2172, %v2256, 0.0
        %2297 = vadd.xlane.f32.xlu0 %v2296
        %v2298 = vpop.xlane.xlu0 %2297
        %v2299 = vsel %vm2172, %v2258, 0.0
        %2300 = vadd.xlane.f32.xlu0 %v2299
        %v2301 = vpop.xlane.xlu0 %2300
        %v2302 = vsel %vm2172, %v2260, 0.0
        %2303 = vadd.xlane.f32.xlu0 %v2302
        %v2304 = vpop.xlane.xlu0 %2303
        %v2305 = vsel %vm2172, %v2262, 0.0
        %2306 = vadd.xlane.f32.xlu0 %v2305
        %v2307 = vpop.xlane.xlu0 %2306
        %v2308 = vsel %vm2172, %v2264, 0.0
        %2309 = vadd.xlane.f32.xlu0 %v2308
        %v2310 = vpop.xlane.xlu0 %2309
        %v2311 = vsel %vm2172, %v2266, 0.0
        %2312 = vadd.xlane.f32.xlu0 %v2311
        %v2313 = vpop.xlane.xlu0 %2312
        %v2314 = vsel %vm2172, %v2268, 0.0
        %2315 = vadd.xlane.f32.xlu0 %v2314
        %v2316 = vpop.xlane.xlu0 %2315
        %v2317 = vrcp.pop %v2271
        %v2318 = vrcp.pop %v2274
        %v2319 = vrcp.pop %v2277
        %v2320 = vrcp.pop %v2280
        %v2321 = vrcp.pop %v2283
        %v2322 = vrcp.pop %v2286
        %v2323 = vrcp.pop %v2289
        %v2324 = vrcp.pop %v2292
        %v2325 = vrcp.pop %v2295
        %v2326 = vrcp.pop %v2298
        %v2327 = vrcp.pop %v2301
        %v2328 = vrcp.pop %v2304
        %v2329 = vrcp.pop %v2307
        %v2330 = vrcp.pop %v2310
        %v2331 = vrcp.pop %v2313
        %v2332 = vrcp.pop %v2316
        %v2333 = vmul.f32 %v2238, %v2317
        %v2334 = vmul.f32 %v2240, %v2318
        %v2335 = vmul.f32 %v2242, %v2319
        %v2336 = vmul.f32 %v2244, %v2320
        %v2337 = vmul.f32 %v2246, %v2321
        %v2338 = vmul.f32 %v2248, %v2322
        %v2339 = vmul.f32 %v2250, %v2323
        %v2340 = vmul.f32 %v2252, %v2324
        %v2341 = vmul.f32 %v2254, %v2325
        %v2342 = vmul.f32 %v2256, %v2326
        %v2343 = vmul.f32 %v2258, %v2327
        %v2344 = vmul.f32 %v2260, %v2328
        %v2345 = vmul.f32 %v2262, %v2329
        %v2346 = vmul.f32 %v2264, %v2330
        %v2347 = vmul.f32 %v2266, %v2331
        %v2348 = vmul.f32 %v2268, %v2332
        %v2349 = vpack.c.bf16 %v2333, %v2333
        %v2350 = vpack.c.bf16 %v2334, %v2334
        %v2351 = vpack.c.bf16 %v2335, %v2335
        %v2352 = vpack.c.bf16 %v2336, %v2336
        %v2353 = vpack.c.bf16 %v2337, %v2337
        %v2354 = vpack.c.bf16 %v2338, %v2338
        %v2355 = vpack.c.bf16 %v2339, %v2339
        %v2356 = vpack.c.bf16 %v2340, %v2340
        %v2357 = vpack.c.bf16 %v2341, %v2341
        %v2358 = vpack.c.bf16 %v2342, %v2342
        %v2359 = vpack.c.bf16 %v2343, %v2343
        %v2360 = vpack.c.bf16 %v2344, %v2344
        %v2361 = vpack.c.bf16 %v2345, %v2345
        %v2362 = vpack.c.bf16 %v2346, %v2346
        %v2363 = vpack.c.bf16 %v2347, %v2347
        %v2364 = vpack.c.bf16 %v2348, %v2348
        %v2366 = vsel %vm1850, %v2349, 0
        %v2369 = vsel %vm1850, %v1306, 0
        %2371 = vmatpush.bf16.xpose.msra.mxu0 0
        %2372 = vmatpush.bf16.xpose.msra.mxu0 0
        %2373 = vmatpush.bf16.xpose.msra.mxu0 0
        %2374 = vmatpush.bf16.xpose.msra.mxu0 0
        %2375 = vmatpush.bf16.xpose.msra.mxu0 0
        %2376 = vmatpush.bf16.xpose.msra.mxu0 0
        %2377 = vmatpush.bf16.xpose.msra.mxu0 0
        %2378 = vmatpush.bf16.xpose.msra.mxu0 %v2369
        %2379 = vmatmul.bf16.gmra.mxu0 %v2366
        %v2380 = vpop.f32.mrf.mxu0
        %v2381 = vadd.f32 0.0, %v2380
        %v2382 = vpop.f32.mrf.mxu0
        %2383 = vdwg.mxu0
        %v2385 = vsel %vm1850, %v2350, 0
        %v2388 = vsel %vm1850, %v1307, 0
        %2390 = vmatpush.bf16.xpose.msra.mxu0 0
        %2391 = vmatpush.bf16.xpose.msra.mxu0 0
        %2392 = vmatpush.bf16.xpose.msra.mxu0 0
        %2393 = vmatpush.bf16.xpose.msra.mxu0 0
        %2394 = vmatpush.bf16.xpose.msra.mxu0 0
        %2395 = vmatpush.bf16.xpose.msra.mxu0 0
        %2396 = vmatpush.bf16.xpose.msra.mxu0 0
        %2397 = vmatpush.bf16.xpose.msra.mxu0 %v2388
        %2398 = vmatmul.bf16.gmra.mxu0 %v2385
        %v2399 = vpop.f32.mrf.mxu0
        %v2400 = vadd.f32 0.0, %v2399
        %v2401 = vpop.f32.mrf.mxu0
        %2402 = vdwg.mxu0
        %v2404 = vsel %vm1850, %v2351, 0
        %v2407 = vsel %vm1850, %v1308, 0
        %2409 = vmatpush.bf16.xpose.msra.mxu0 0
        %2410 = vmatpush.bf16.xpose.msra.mxu0 0
        %2411 = vmatpush.bf16.xpose.msra.mxu0 0
        %2412 = vmatpush.bf16.xpose.msra.mxu0 0
        %2413 = vmatpush.bf16.xpose.msra.mxu0 0
        %2414 = vmatpush.bf16.xpose.msra.mxu0 0
        %2415 = vmatpush.bf16.xpose.msra.mxu0 0
        %2416 = vmatpush.bf16.xpose.msra.mxu0 %v2407
        %2417 = vmatmul.bf16.gmra.mxu0 %v2404
        %v2418 = vpop.f32.mrf.mxu0
        %v2419 = vadd.f32 0.0, %v2418
        %v2420 = vpop.f32.mrf.mxu0
        %2421 = vdwg.mxu0
        %v2423 = vsel %vm1850, %v2352, 0
        %v2426 = vsel %vm1850, %v1309, 0
        %2428 = vmatpush.bf16.xpose.msra.mxu0 0
        %2429 = vmatpush.bf16.xpose.msra.mxu0 0
        %2430 = vmatpush.bf16.xpose.msra.mxu0 0
        %2431 = vmatpush.bf16.xpose.msra.mxu0 0
        %2432 = vmatpush.bf16.xpose.msra.mxu0 0
        %2433 = vmatpush.bf16.xpose.msra.mxu0 0
        %2434 = vmatpush.bf16.xpose.msra.mxu0 0
        %2435 = vmatpush.bf16.xpose.msra.mxu0 %v2426
        %2436 = vmatmul.bf16.gmra.mxu0 %v2423
        %v2437 = vpop.f32.mrf.mxu0
        %v2438 = vadd.f32 0.0, %v2437
        %v2439 = vpop.f32.mrf.mxu0
        %2440 = vdwg.mxu0
        %v2442 = vsel %vm1850, %v2353, 0
        %v2445 = vsel %vm1850, %v1310, 0
        %2447 = vmatpush.bf16.xpose.msra.mxu0 0
        %2448 = vmatpush.bf16.xpose.msra.mxu0 0
        %2449 = vmatpush.bf16.xpose.msra.mxu0 0
        %2450 = vmatpush.bf16.xpose.msra.mxu0 0
        %2451 = vmatpush.bf16.xpose.msra.mxu0 0
        %2452 = vmatpush.bf16.xpose.msra.mxu0 0
        %2453 = vmatpush.bf16.xpose.msra.mxu0 0
        %2454 = vmatpush.bf16.xpose.msra.mxu0 %v2445
        %2455 = vmatmul.bf16.gmra.mxu0 %v2442
        %v2456 = vpop.f32.mrf.mxu0
        %v2457 = vadd.f32 0.0, %v2456
        %v2458 = vpop.f32.mrf.mxu0
        %2459 = vdwg.mxu0
        %v2461 = vsel %vm1850, %v2354, 0
        %v2464 = vsel %vm1850, %v1311, 0
        %2466 = vmatpush.bf16.xpose.msra.mxu0 0
        %2467 = vmatpush.bf16.xpose.msra.mxu0 0
        %2468 = vmatpush.bf16.xpose.msra.mxu0 0
        %2469 = vmatpush.bf16.xpose.msra.mxu0 0
        %2470 = vmatpush.bf16.xpose.msra.mxu0 0
        %2471 = vmatpush.bf16.xpose.msra.mxu0 0
        %2472 = vmatpush.bf16.xpose.msra.mxu0 0
        %2473 = vmatpush.bf16.xpose.msra.mxu0 %v2464
        %2474 = vmatmul.bf16.gmra.mxu0 %v2461
        %v2475 = vpop.f32.mrf.mxu0
        %v2476 = vadd.f32 0.0, %v2475
        %v2477 = vpop.f32.mrf.mxu0
        %2478 = vdwg.mxu0
        %v2480 = vsel %vm1850, %v2355, 0
        %v2483 = vsel %vm1850, %v1312, 0
        %2485 = vmatpush.bf16.xpose.msra.mxu0 0
        %2486 = vmatpush.bf16.xpose.msra.mxu0 0
        %2487 = vmatpush.bf16.xpose.msra.mxu0 0
        %2488 = vmatpush.bf16.xpose.msra.mxu0 0
        %2489 = vmatpush.bf16.xpose.msra.mxu0 0
        %2490 = vmatpush.bf16.xpose.msra.mxu0 0
        %2491 = vmatpush.bf16.xpose.msra.mxu0 0
        %2492 = vmatpush.bf16.xpose.msra.mxu0 %v2483
        %2493 = vmatmul.bf16.gmra.mxu0 %v2480
        %v2494 = vpop.f32.mrf.mxu0
        %v2495 = vadd.f32 0.0, %v2494
        %v2496 = vpop.f32.mrf.mxu0
        %2497 = vdwg.mxu0
        %v2499 = vsel %vm1850, %v2356, 0
        %v2502 = vsel %vm1850, %v1313, 0
        %2504 = vmatpush.bf16.xpose.msra.mxu0 0
        %2505 = vmatpush.bf16.xpose.msra.mxu0 0
        %2506 = vmatpush.bf16.xpose.msra.mxu0 0
        %2507 = vmatpush.bf16.xpose.msra.mxu0 0
        %2508 = vmatpush.bf16.xpose.msra.mxu0 0
        %2509 = vmatpush.bf16.xpose.msra.mxu0 0
        %2510 = vmatpush.bf16.xpose.msra.mxu0 0
        %2511 = vmatpush.bf16.xpose.msra.mxu0 %v2502
        %2512 = vmatmul.bf16.gmra.mxu0 %v2499
        %v2513 = vpop.f32.mrf.mxu0
        %v2514 = vadd.f32 0.0, %v2513
        %v2515 = vpop.f32.mrf.mxu0
        %2516 = vdwg.mxu0
        %v2518 = vsel %vm1850, %v2357, 0
        %v2521 = vsel %vm1850, %v1314, 0
        %2523 = vmatpush.bf16.xpose.msra.mxu0 0
        %2524 = vmatpush.bf16.xpose.msra.mxu0 0
        %2525 = vmatpush.bf16.xpose.msra.mxu0 0
        %2526 = vmatpush.bf16.xpose.msra.mxu0 0
        %2527 = vmatpush.bf16.xpose.msra.mxu0 0
        %2528 = vmatpush.bf16.xpose.msra.mxu0 0
        %2529 = vmatpush.bf16.xpose.msra.mxu0 0
        %2530 = vmatpush.bf16.xpose.msra.mxu0 %v2521
        %2531 = vmatmul.bf16.gmra.mxu0 %v2518
        %v2532 = vpop.f32.mrf.mxu0
        %v2533 = vadd.f32 0.0, %v2532
        %v2534 = vpop.f32.mrf.mxu0
        %2535 = vdwg.mxu0
        %v2537 = vsel %vm1850, %v2358, 0
        %v2540 = vsel %vm1850, %v1315, 0
        %2542 = vmatpush.bf16.xpose.msra.mxu0 0
        %2543 = vmatpush.bf16.xpose.msra.mxu0 0
        %2544 = vmatpush.bf16.xpose.msra.mxu0 0
        %2545 = vmatpush.bf16.xpose.msra.mxu0 0
        %2546 = vmatpush.bf16.xpose.msra.mxu0 0
        %2547 = vmatpush.bf16.xpose.msra.mxu0 0
        %2548 = vmatpush.bf16.xpose.msra.mxu0 0
        %2549 = vmatpush.bf16.xpose.msra.mxu0 %v2540
        %2550 = vmatmul.bf16.gmra.mxu0 %v2537
        %v2551 = vpop.f32.mrf.mxu0
        %v2552 = vadd.f32 0.0, %v2551
        %v2553 = vpop.f32.mrf.mxu0
        %2554 = vdwg.mxu0
        %v2556 = vsel %vm1850, %v2359, 0
        %v2559 = vsel %vm1850, %v1316, 0
        %2561 = vmatpush.bf16.xpose.msra.mxu0 0
        %2562 = vmatpush.bf16.xpose.msra.mxu0 0
        %2563 = vmatpush.bf16.xpose.msra.mxu0 0
        %2564 = vmatpush.bf16.xpose.msra.mxu0 0
        %2565 = vmatpush.bf16.xpose.msra.mxu0 0
        %2566 = vmatpush.bf16.xpose.msra.mxu0 0
        %2567 = vmatpush.bf16.xpose.msra.mxu0 0
        %2568 = vmatpush.bf16.xpose.msra.mxu0 %v2559
        %2569 = vmatmul.bf16.gmra.mxu0 %v2556
        %v2570 = vpop.f32.mrf.mxu0
        %v2571 = vadd.f32 0.0, %v2570
        %v2572 = vpop.f32.mrf.mxu0
        %2573 = vdwg.mxu0
        %v2575 = vsel %vm1850, %v2360, 0
        %v2578 = vsel %vm1850, %v1317, 0
        %2580 = vmatpush.bf16.xpose.msra.mxu0 0
        %2581 = vmatpush.bf16.xpose.msra.mxu0 0
        %2582 = vmatpush.bf16.xpose.msra.mxu0 0
        %2583 = vmatpush.bf16.xpose.msra.mxu0 0
        %2584 = vmatpush.bf16.xpose.msra.mxu0 0
        %2585 = vmatpush.bf16.xpose.msra.mxu0 0
        %2586 = vmatpush.bf16.xpose.msra.mxu0 0
        %2587 = vmatpush.bf16.xpose.msra.mxu0 %v2578
        %2588 = vmatmul.bf16.gmra.mxu0 %v2575
        %v2589 = vpop.f32.mrf.mxu0
        %v2590 = vadd.f32 0.0, %v2589
        %v2591 = vpop.f32.mrf.mxu0
        %2592 = vdwg.mxu0
        %v2594 = vsel %vm1850, %v2361, 0
        %v2597 = vsel %vm1850, %v1318, 0
        %2599 = vmatpush.bf16.xpose.msra.mxu0 0
        %2600 = vmatpush.bf16.xpose.msra.mxu0 0
        %2601 = vmatpush.bf16.xpose.msra.mxu0 0
        %2602 = vmatpush.bf16.xpose.msra.mxu0 0
        %2603 = vmatpush.bf16.xpose.msra.mxu0 0
        %2604 = vmatpush.bf16.xpose.msra.mxu0 0
        %2605 = vmatpush.bf16.xpose.msra.mxu0 0
        %2606 = vmatpush.bf16.xpose.msra.mxu0 %v2597
        %2607 = vmatmul.bf16.gmra.mxu0 %v2594
        %v2608 = vpop.f32.mrf.mxu0
        %v2609 = vadd.f32 0.0, %v2608
        %v2610 = vpop.f32.mrf.mxu0
        %2611 = vdwg.mxu0
        %v2613 = vsel %vm1850, %v2362, 0
        %v2616 = vsel %vm1850, %v1319, 0
        %2618 = vmatpush.bf16.xpose.msra.mxu0 0
        %2619 = vmatpush.bf16.xpose.msra.mxu0 0
        %2620 = vmatpush.bf16.xpose.msra.mxu0 0
        %2621 = vmatpush.bf16.xpose.msra.mxu0 0
        %2622 = vmatpush.bf16.xpose.msra.mxu0 0
        %2623 = vmatpush.bf16.xpose.msra.mxu0 0
        %2624 = vmatpush.bf16.xpose.msra.mxu0 0
        %2625 = vmatpush.bf16.xpose.msra.mxu0 %v2616
        %2626 = vmatmul.bf16.gmra.mxu0 %v2613
        %v2627 = vpop.f32.mrf.mxu0
        %v2628 = vadd.f32 0.0, %v2627
        %v2629 = vpop.f32.mrf.mxu0
        %2630 = vdwg.mxu0
        %v2632 = vsel %vm1850, %v2363, 0
        %v2635 = vsel %vm1850, %v1320, 0
        %2637 = vmatpush.bf16.xpose.msra.mxu0 0
        %2638 = vmatpush.bf16.xpose.msra.mxu0 0
        %2639 = vmatpush.bf16.xpose.msra.mxu0 0
        %2640 = vmatpush.bf16.xpose.msra.mxu0 0
        %2641 = vmatpush.bf16.xpose.msra.mxu0 0
        %2642 = vmatpush.bf16.xpose.msra.mxu0 0
        %2643 = vmatpush.bf16.xpose.msra.mxu0 0
        %2644 = vmatpush.bf16.xpose.msra.mxu0 %v2635
        %2645 = vmatmul.bf16.gmra.mxu0 %v2632
        %v2646 = vpop.f32.mrf.mxu0
        %v2647 = vadd.f32 0.0, %v2646
        %v2648 = vpop.f32.mrf.mxu0
        %2649 = vdwg.mxu0
        %v2651 = vsel %vm1850, %v2364, 0
        %v2654 = vsel %vm1850, %v1321, 0
        %2656 = vmatpush.bf16.xpose.msra.mxu0 0
        %2657 = vmatpush.bf16.xpose.msra.mxu0 0
        %2658 = vmatpush.bf16.xpose.msra.mxu0 0
        %2659 = vmatpush.bf16.xpose.msra.mxu0 0
        %2660 = vmatpush.bf16.xpose.msra.mxu0 0
        %2661 = vmatpush.bf16.xpose.msra.mxu0 0
        %2662 = vmatpush.bf16.xpose.msra.mxu0 0
        %2663 = vmatpush.bf16.xpose.msra.mxu0 %v2654
        %2664 = vmatmul.bf16.gmra.mxu0 %v2651
        %v2665 = vpop.f32.mrf.mxu0
        %v2666 = vadd.f32 0.0, %v2665
        %v2667 = vpop.f32.mrf.mxu0
        %2668 = vdwg.mxu0
        %v2669 = vpack.c.bf16 %v2381, %v2381
        %v2670 = vpack.c.bf16 %v2400, %v2400
        %v2671 = vpack.c.bf16 %v2419, %v2419
        %v2672 = vpack.c.bf16 %v2438, %v2438
        %v2673 = vpack.c.bf16 %v2457, %v2457
        %v2674 = vpack.c.bf16 %v2476, %v2476
        %v2675 = vpack.c.bf16 %v2495, %v2495
        %v2676 = vpack.c.bf16 %v2514, %v2514
        %v2677 = vpack.c.bf16 %v2533, %v2533
        %v2678 = vpack.c.bf16 %v2552, %v2552
        %v2679 = vpack.c.bf16 %v2571, %v2571
        %v2680 = vpack.c.bf16 %v2590, %v2590
        %v2681 = vpack.c.bf16 %v2609, %v2609
        %v2682 = vpack.c.bf16 %v2628, %v2628
        %v2683 = vpack.c.bf16 %v2647, %v2647
        %v2684 = vpack.c.bf16 %v2666, %v2666
        %v2685 = vld [vmem:[%s8] sm:$0xf]
        %v2686 = vld [vmem:[%s8 + $0x4] sm:$0xf]
        %v2687 = vld [vmem:[%s8 + $0x8] sm:$0xf]
        %v2688 = vld [vmem:[%s8 + $0xc] sm:$0xf]
        %v2689 = vld [vmem:[%s8 + $0x10] sm:$0xf]
        %v2690 = vld [vmem:[%s8 + $0x14] sm:$0xf]
        %v2691 = vld [vmem:[%s8 + $0x18] sm:$0xf]
        %v2692 = vld [vmem:[%s8 + $0x1c] sm:$0xf]
        %v2693 = vld [vmem:[%s8 + $0x20] sm:$0xf]
        %v2694 = vld [vmem:[%s8 + $0x24] sm:$0xf]
        %v2695 = vld [vmem:[%s8 + $0x28] sm:$0xf]
        %v2696 = vld [vmem:[%s8 + $0x2c] sm:$0xf]
        %v2697 = vld [vmem:[%s8 + $0x30] sm:$0xf]
        %v2698 = vld [vmem:[%s8 + $0x34] sm:$0xf]
        %v2699 = vld [vmem:[%s8 + $0x38] sm:$0xf]
        %v2700 = vld [vmem:[%s8 + $0x3c] sm:$0xf]
        %v2702 = vsel %vm1850, %v2669, 0
        %v2705 = vsel %vm1854, %v2685, 0
        %2707 = vmatpush.bf16.msra.mxu0 0
        %2708 = vmatpush.bf16.msra.mxu0 0
        %2709 = vmatpush.bf16.msra.mxu0 0
        %2710 = vmatpush.bf16.msra.mxu0 0
        %2711 = vmatpush.bf16.msra.mxu0 0
        %2712 = vmatpush.bf16.msra.mxu0 0
        %2713 = vmatpush.bf16.msra.mxu0 0
        %2714 = vmatpush.bf16.msra.mxu0 %v2705
        %2715 = vmatmul.bf16.gmra.mxu0 %v2702
        %v2716 = vpop.f32.mrf.mxu0
        %v2717 = vadd.f32 0.0, %v2716
        %v2718 = vpop.f32.mrf.mxu0
        %2719 = vdwg.mxu0
        %v2721 = vsel %vm1850, %v2670, 0
        %v2724 = vsel %vm1854, %v2686, 0
        %2726 = vmatpush.bf16.msra.mxu0 0
        %2727 = vmatpush.bf16.msra.mxu0 0
        %2728 = vmatpush.bf16.msra.mxu0 0
        %2729 = vmatpush.bf16.msra.mxu0 0
        %2730 = vmatpush.bf16.msra.mxu0 0
        %2731 = vmatpush.bf16.msra.mxu0 0
        %2732 = vmatpush.bf16.msra.mxu0 0
        %2733 = vmatpush.bf16.msra.mxu0 %v2724
        %2734 = vmatmul.bf16.gmra.mxu0 %v2721
        %v2735 = vpop.f32.mrf.mxu0
        %v2736 = vadd.f32 0.0, %v2735
        %v2737 = vpop.f32.mrf.mxu0
        %2738 = vdwg.mxu0
        %v2740 = vsel %vm1850, %v2671, 0
        %v2743 = vsel %vm1854, %v2687, 0
        %2745 = vmatpush.bf16.msra.mxu0 0
        %2746 = vmatpush.bf16.msra.mxu0 0
        %2747 = vmatpush.bf16.msra.mxu0 0
        %2748 = vmatpush.bf16.msra.mxu0 0
        %2749 = vmatpush.bf16.msra.mxu0 0
        %2750 = vmatpush.bf16.msra.mxu0 0
        %2751 = vmatpush.bf16.msra.mxu0 0
        %2752 = vmatpush.bf16.msra.mxu0 %v2743
        %2753 = vmatmul.bf16.gmra.mxu0 %v2740
        %v2754 = vpop.f32.mrf.mxu0
        %v2755 = vadd.f32 0.0, %v2754
        %v2756 = vpop.f32.mrf.mxu0
        %2757 = vdwg.mxu0
        %v2759 = vsel %vm1850, %v2672, 0
        %v2762 = vsel %vm1854, %v2688, 0
        %2764 = vmatpush.bf16.msra.mxu0 0
        %2765 = vmatpush.bf16.msra.mxu0 0
        %2766 = vmatpush.bf16.msra.mxu0 0
        %2767 = vmatpush.bf16.msra.mxu0 0
        %2768 = vmatpush.bf16.msra.mxu0 0
        %2769 = vmatpush.bf16.msra.mxu0 0
        %2770 = vmatpush.bf16.msra.mxu0 0
        %2771 = vmatpush.bf16.msra.mxu0 %v2762
        %2772 = vmatmul.bf16.gmra.mxu0 %v2759
        %v2773 = vpop.f32.mrf.mxu0
        %v2774 = vadd.f32 0.0, %v2773
        %v2775 = vpop.f32.mrf.mxu0
        %2776 = vdwg.mxu0
        %v2778 = vsel %vm1850, %v2673, 0
        %v2781 = vsel %vm1854, %v2689, 0
        %2783 = vmatpush.bf16.msra.mxu0 0
        %2784 = vmatpush.bf16.msra.mxu0 0
        %2785 = vmatpush.bf16.msra.mxu0 0
        %2786 = vmatpush.bf16.msra.mxu0 0
        %2787 = vmatpush.bf16.msra.mxu0 0
        %2788 = vmatpush.bf16.msra.mxu0 0
        %2789 = vmatpush.bf16.msra.mxu0 0
        %2790 = vmatpush.bf16.msra.mxu0 %v2781
        %2791 = vmatmul.bf16.gmra.mxu0 %v2778
        %v2792 = vpop.f32.mrf.mxu0
        %v2793 = vadd.f32 0.0, %v2792
        %v2794 = vpop.f32.mrf.mxu0
        %2795 = vdwg.mxu0
        %v2797 = vsel %vm1850, %v2674, 0
        %v2800 = vsel %vm1854, %v2690, 0
        %2802 = vmatpush.bf16.msra.mxu0 0
        %2803 = vmatpush.bf16.msra.mxu0 0
        %2804 = vmatpush.bf16.msra.mxu0 0
        %2805 = vmatpush.bf16.msra.mxu0 0
        %2806 = vmatpush.bf16.msra.mxu0 0
        %2807 = vmatpush.bf16.msra.mxu0 0
        %2808 = vmatpush.bf16.msra.mxu0 0
        %2809 = vmatpush.bf16.msra.mxu0 %v2800
        %2810 = vmatmul.bf16.gmra.mxu0 %v2797
        %v2811 = vpop.f32.mrf.mxu0
        %v2812 = vadd.f32 0.0, %v2811
        %v2813 = vpop.f32.mrf.mxu0
        %2814 = vdwg.mxu0
        %v2816 = vsel %vm1850, %v2675, 0
        %v2819 = vsel %vm1854, %v2691, 0
        %2821 = vmatpush.bf16.msra.mxu0 0
        %2822 = vmatpush.bf16.msra.mxu0 0
        %2823 = vmatpush.bf16.msra.mxu0 0
        %2824 = vmatpush.bf16.msra.mxu0 0
        %2825 = vmatpush.bf16.msra.mxu0 0
        %2826 = vmatpush.bf16.msra.mxu0 0
        %2827 = vmatpush.bf16.msra.mxu0 0
        %2828 = vmatpush.bf16.msra.mxu0 %v2819
        %2829 = vmatmul.bf16.gmra.mxu0 %v2816
        %v2830 = vpop.f32.mrf.mxu0
        %v2831 = vadd.f32 0.0, %v2830
        %v2832 = vpop.f32.mrf.mxu0
        %2833 = vdwg.mxu0
        %v2835 = vsel %vm1850, %v2676, 0
        %v2838 = vsel %vm1854, %v2692, 0
        %2840 = vmatpush.bf16.msra.mxu0 0
        %2841 = vmatpush.bf16.msra.mxu0 0
        %2842 = vmatpush.bf16.msra.mxu0 0
        %2843 = vmatpush.bf16.msra.mxu0 0
        %2844 = vmatpush.bf16.msra.mxu0 0
        %2845 = vmatpush.bf16.msra.mxu0 0
        %2846 = vmatpush.bf16.msra.mxu0 0
        %2847 = vmatpush.bf16.msra.mxu0 %v2838
        %2848 = vmatmul.bf16.gmra.mxu0 %v2835
        %v2849 = vpop.f32.mrf.mxu0
        %v2850 = vadd.f32 0.0, %v2849
        %v2851 = vpop.f32.mrf.mxu0
        %2852 = vdwg.mxu0
        %v2854 = vsel %vm1850, %v2677, 0
        %v2857 = vsel %vm1854, %v2693, 0
        %2859 = vmatpush.bf16.msra.mxu0 0
        %2860 = vmatpush.bf16.msra.mxu0 0
        %2861 = vmatpush.bf16.msra.mxu0 0
        %2862 = vmatpush.bf16.msra.mxu0 0
        %2863 = vmatpush.bf16.msra.mxu0 0
        %2864 = vmatpush.bf16.msra.mxu0 0
        %2865 = vmatpush.bf16.msra.mxu0 0
        %2866 = vmatpush.bf16.msra.mxu0 %v2857
        %2867 = vmatmul.bf16.gmra.mxu0 %v2854
        %v2868 = vpop.f32.mrf.mxu0
        %v2869 = vadd.f32 0.0, %v2868
        %v2870 = vpop.f32.mrf.mxu0
        %2871 = vdwg.mxu0
        %v2873 = vsel %vm1850, %v2678, 0
        %v2876 = vsel %vm1854, %v2694, 0
        %2878 = vmatpush.bf16.msra.mxu0 0
        %2879 = vmatpush.bf16.msra.mxu0 0
        %2880 = vmatpush.bf16.msra.mxu0 0
        %2881 = vmatpush.bf16.msra.mxu0 0
        %2882 = vmatpush.bf16.msra.mxu0 0
        %2883 = vmatpush.bf16.msra.mxu0 0
        %2884 = vmatpush.bf16.msra.mxu0 0
        %2885 = vmatpush.bf16.msra.mxu0 %v2876
        %2886 = vmatmul.bf16.gmra.mxu0 %v2873
        %v2887 = vpop.f32.mrf.mxu0
        %v2888 = vadd.f32 0.0, %v2887
        %v2889 = vpop.f32.mrf.mxu0
        %2890 = vdwg.mxu0
        %v2892 = vsel %vm1850, %v2679, 0
        %v2895 = vsel %vm1854, %v2695, 0
        %2897 = vmatpush.bf16.msra.mxu0 0
        %2898 = vmatpush.bf16.msra.mxu0 0
        %2899 = vmatpush.bf16.msra.mxu0 0
        %2900 = vmatpush.bf16.msra.mxu0 0
        %2901 = vmatpush.bf16.msra.mxu0 0
        %2902 = vmatpush.bf16.msra.mxu0 0
        %2903 = vmatpush.bf16.msra.mxu0 0
        %2904 = vmatpush.bf16.msra.mxu0 %v2895
        %2905 = vmatmul.bf16.gmra.mxu0 %v2892
        %v2906 = vpop.f32.mrf.mxu0
        %v2907 = vadd.f32 0.0, %v2906
        %v2908 = vpop.f32.mrf.mxu0
        %2909 = vdwg.mxu0
        %v2911 = vsel %vm1850, %v2680, 0
        %v2914 = vsel %vm1854, %v2696, 0
        %2916 = vmatpush.bf16.msra.mxu0 0
        %2917 = vmatpush.bf16.msra.mxu0 0
        %2918 = vmatpush.bf16.msra.mxu0 0
        %2919 = vmatpush.bf16.msra.mxu0 0
        %2920 = vmatpush.bf16.msra.mxu0 0
        %2921 = vmatpush.bf16.msra.mxu0 0
        %2922 = vmatpush.bf16.msra.mxu0 0
        %2923 = vmatpush.bf16.msra.mxu0 %v2914
        %2924 = vmatmul.bf16.gmra.mxu0 %v2911
        %v2925 = vpop.f32.mrf.mxu0
        %v2926 = vadd.f32 0.0, %v2925
        %v2927 = vpop.f32.mrf.mxu0
        %2928 = vdwg.mxu0
        %v2930 = vsel %vm1850, %v2681, 0
        %v2933 = vsel %vm1854, %v2697, 0
        %2935 = vmatpush.bf16.msra.mxu0 0
        %2936 = vmatpush.bf16.msra.mxu0 0
        %2937 = vmatpush.bf16.msra.mxu0 0
        %2938 = vmatpush.bf16.msra.mxu0 0
        %2939 = vmatpush.bf16.msra.mxu0 0
        %2940 = vmatpush.bf16.msra.mxu0 0
        %2941 = vmatpush.bf16.msra.mxu0 0
        %2942 = vmatpush.bf16.msra.mxu0 %v2933
        %2943 = vmatmul.bf16.gmra.mxu0 %v2930
        %v2944 = vpop.f32.mrf.mxu0
        %v2945 = vadd.f32 0.0, %v2944
        %v2946 = vpop.f32.mrf.mxu0
        %2947 = vdwg.mxu0
        %v2949 = vsel %vm1850, %v2682, 0
        %v2952 = vsel %vm1854, %v2698, 0
        %2954 = vmatpush.bf16.msra.mxu0 0
        %2955 = vmatpush.bf16.msra.mxu0 0
        %2956 = vmatpush.bf16.msra.mxu0 0
        %2957 = vmatpush.bf16.msra.mxu0 0
        %2958 = vmatpush.bf16.msra.mxu0 0
        %2959 = vmatpush.bf16.msra.mxu0 0
        %2960 = vmatpush.bf16.msra.mxu0 0
        %2961 = vmatpush.bf16.msra.mxu0 %v2952
        %2962 = vmatmul.bf16.gmra.mxu0 %v2949
        %v2963 = vpop.f32.mrf.mxu0
        %v2964 = vadd.f32 0.0, %v2963
        %v2965 = vpop.f32.mrf.mxu0
        %2966 = vdwg.mxu0
        %v2968 = vsel %vm1850, %v2683, 0
        %v2971 = vsel %vm1854, %v2699, 0
        %2973 = vmatpush.bf16.msra.mxu0 0
        %2974 = vmatpush.bf16.msra.mxu0 0
        %2975 = vmatpush.bf16.msra.mxu0 0
        %2976 = vmatpush.bf16.msra.mxu0 0
        %2977 = vmatpush.bf16.msra.mxu0 0
        %2978 = vmatpush.bf16.msra.mxu0 0
        %2979 = vmatpush.bf16.msra.mxu0 0
        %2980 = vmatpush.bf16.msra.mxu0 %v2971
        %2981 = vmatmul.bf16.gmra.mxu0 %v2968
        %v2982 = vpop.f32.mrf.mxu0
        %v2983 = vadd.f32 0.0, %v2982
        %v2984 = vpop.f32.mrf.mxu0
        %2985 = vdwg.mxu0
        %v2987 = vsel %vm1850, %v2684, 0
        %v2990 = vsel %vm1854, %v2700, 0
        %2992 = vmatpush.bf16.msra.mxu0 0
        %2993 = vmatpush.bf16.msra.mxu0 0
        %2994 = vmatpush.bf16.msra.mxu0 0
        %2995 = vmatpush.bf16.msra.mxu0 0
        %2996 = vmatpush.bf16.msra.mxu0 0
        %2997 = vmatpush.bf16.msra.mxu0 0
        %2998 = vmatpush.bf16.msra.mxu0 0
        %2999 = vmatpush.bf16.msra.mxu0 %v2990
        %3000 = vmatmul.bf16.gmra.mxu0 %v2987
        %v3001 = vpop.f32.mrf.mxu0
        %v3002 = vadd.f32 0.0, %v3001
        %v3003 = vpop.f32.mrf.mxu0
        %3004 = vdwg.mxu0
        %vm3005 = vcmask 1040384
        %v3006 = vsel %vm3005, %v2717, 0.0
        %v3007 = vsel %vm3005, %v2736, 0.0
        %v3008 = vadd.f32 %v3006, %v3007
        %v3009 = vsel %vm3005, %v2755, 0.0
        %v3010 = vadd.f32 %v3008, %v3009
        %v3011 = vsel %vm3005, %v2774, 0.0
        %v3012 = vadd.f32 %v3010, %v3011
        %v3013 = vsel %vm3005, %v2793, 0.0
        %v3014 = vadd.f32 %v3012, %v3013
        %v3015 = vsel %vm3005, %v2812, 0.0
        %v3016 = vadd.f32 %v3014, %v3015
        %v3017 = vsel %vm3005, %v2831, 0.0
        %v3018 = vadd.f32 %v3016, %v3017
        %v3019 = vsel %vm3005, %v2850, 0.0
        %v3020 = vadd.f32 %v3018, %v3019
        %v3021 = vsel %vm3005, %v2869, 0.0
        %v3022 = vadd.f32 %v3020, %v3021
        %v3023 = vsel %vm3005, %v2888, 0.0
        %v3024 = vadd.f32 %v3022, %v3023
        %v3025 = vsel %vm3005, %v2907, 0.0
        %v3026 = vadd.f32 %v3024, %v3025
        %v3027 = vsel %vm3005, %v2926, 0.0
        %v3028 = vadd.f32 %v3026, %v3027
        %v3029 = vsel %vm3005, %v2945, 0.0
        %v3030 = vadd.f32 %v3028, %v3029
        %v3031 = vsel %vm3005, %v2964, 0.0
        %v3032 = vadd.f32 %v3030, %v3031
        %v3033 = vsel %vm3005, %v2983, 0.0
        %v3034 = vadd.f32 %v3032, %v3033
        %v3035 = vsel %vm3005, %v3002, 0.0
        %v3036 = vadd.f32 %v3034, %v3035
        %v3037 = vld [vmem:[%s9] sm:$0x1]
        %v3038 = vadd.f32 %v3036, %v3037
        %v3039 = vadd.f32 %v645, %v3038
        %v3040 = vld [vmem:[%s10] sm:$0x1]
        %v3041 = vld [vmem:[%s11] sm:$0x1]
        %v3042 = vsel %vm3005, %v3039, 0.0
        %3043 = vadd.xlane.f32.xlu0 %v3042
        %v3044 = vpop.xlane.xlu0 %3043
        %v3045 = vmul.f32 %v3044, 0.010416667
        %v3046 = vsub.f32 %v3039, %v3045
        %v3047 = vsel %vm644, %v3046, 0.0
        %v3048 = vmul.f32 %v3047, %v3047
        %v3049 = vsel %vm3005, %v3048, 0.0
        %3050 = vadd.xlane.f32.xlu0 %v3049
        %v3051 = vpop.xlane.xlu0 %3050
        %v3052 = vmul.f32 %v3051, 0.010416667
        %v3053 = vadd.f32 %v3052, 1e-05
        %v3054 = vrsqrt.pop %v3053
        %v3055 = vmul.f32 %v3054, %v3053
        %v3056 = vmul.f32 %v3055, %v3054
        %v3057 = vmul.f32 0.5, %v3056
        %v3058 = vsub.f32 1.5, %v3057
        %v3059 = vmul.f32 %v3054, %v3058
        %vm3060 = vweird.f32 %v3053
        %vm3061 = vweird.f32 %v3054
        %vm3062 = vmor %vm3060, %vm3061
        %v3063 = vsel %vm3062, %v3054, %v3059
        %v3064 = vmul.f32 %v3047, %v3063
        %v3065 = vmul.f32 %v3064, %v3040
        %v3066 = vadd.f32 %v3065, %v3041
        %v3067 = vpack.c.bf16 %v3066, %v3066
        %v3068 = vld [vmem:[%s12] sm:$0xff]
        %v3069 = vld [vmem:[%s12 + $0x8] sm:$0xf]
        %v3070 = vld [vmem:[%s12 + $0xc] sm:$0xff]
        %v3071 = vld [vmem:[%s12 + $0x14] sm:$0xf]
        %v3072 = vld [vmem:[%s12 + $0x18] sm:$0xff]
        %v3073 = vld [vmem:[%s12 + $0x20] sm:$0xf]
        %v3074 = vld [vmem:[%s12 + $0x24] sm:$0xff]
        %v3075 = vld [vmem:[%s12 + $0x2c] sm:$0xf]
        %v3076 = vld [vmem:[%s12 + $0x30] sm:$0xff]
        %v3077 = vld [vmem:[%s12 + $0x38] sm:$0xf]
        %v3078 = vld [vmem:[%s12 + $0x3c] sm:$0xff]
        %v3079 = vld [vmem:[%s12 + $0x44] sm:$0xf]
        %v3080 = vld [vmem:[%s12 + $0x48] sm:$0xff]
        %v3081 = vld [vmem:[%s12 + $0x50] sm:$0xf]
        %v3082 = vld [vmem:[%s12 + $0x54] sm:$0xff]
        %v3083 = vld [vmem:[%s12 + $0x5c] sm:$0xf]
        %v3084 = vld [vmem:[%s12 + $0x60] sm:$0xff]
        %v3085 = vld [vmem:[%s12 + $0x68] sm:$0xf]
        %v3086 = vld [vmem:[%s12 + $0x6c] sm:$0xff]
        %v3087 = vld [vmem:[%s12 + $0x74] sm:$0xf]
        %v3088 = vld [vmem:[%s12 + $0x78] sm:$0xff]
        %v3089 = vld [vmem:[%s12 + $0x80] sm:$0xf]
        %v3090 = vld [vmem:[%s12 + $0x84] sm:$0xff]
        %v3091 = vld [vmem:[%s12 + $0x8c] sm:$0xf]
        %v3092 = vld [vmem:[%s12 + $0x90] sm:$0xff]
        %v3093 = vld [vmem:[%s12 + $0x98] sm:$0xf]
        %v3094 = vld [vmem:[%s12 + $0x9c] sm:$0xff]
        %v3095 = vld [vmem:[%s12 + $0xa4] sm:$0xf]
        %v3096 = vld [vmem:[%s12 + $0xa8] sm:$0xff]
        %v3097 = vld [vmem:[%s12 + $0xb0] sm:$0xf]
        %v3098 = vld [vmem:[%s12 + $0xb4] sm:$0xff]
        %v3099 = vld [vmem:[%s12 + $0xbc] sm:$0xf]
        %v3100 = vld [vmem:[%s13] sm:$0x7]
        %v3133 = vunpack.c.l.b16 %v3068
        %v3134 = vunpack.c.h.b16 %v3068
        %v3135 = vunpack.c.l.b16 %v3069
        %v3136 = vunpack.c.l.b16 %v3070
        %v3137 = vunpack.c.h.b16 %v3070
        %v3138 = vunpack.c.l.b16 %v3071
        %v3139 = vunpack.c.l.b16 %v3072
        %v3140 = vunpack.c.h.b16 %v3072
        %v3141 = vunpack.c.l.b16 %v3073
        %v3142 = vunpack.c.l.b16 %v3074
        %v3143 = vunpack.c.h.b16 %v3074
        %v3144 = vunpack.c.l.b16 %v3075
        %v3145 = vunpack.c.l.b16 %v3076
        %v3146 = vunpack.c.h.b16 %v3076
        %v3147 = vunpack.c.l.b16 %v3077
        %v3148 = vunpack.c.l.b16 %v3078
        %v3149 = vunpack.c.h.b16 %v3078
        %v3150 = vunpack.c.l.b16 %v3079
        %v3151 = vunpack.c.l.b16 %v3080
        %v3152 = vunpack.c.h.b16 %v3080
        %v3153 = vunpack.c.l.b16 %v3081
        %v3154 = vunpack.c.l.b16 %v3082
        %v3155 = vunpack.c.h.b16 %v3082
        %v3156 = vunpack.c.l.b16 %v3083
        %v3157 = vunpack.c.l.b16 %v3084
        %v3158 = vunpack.c.h.b16 %v3084
        %v3159 = vunpack.c.l.b16 %v3085
        %v3160 = vunpack.c.l.b16 %v3086
        %v3161 = vunpack.c.h.b16 %v3086
        %v3162 = vunpack.c.l.b16 %v3087
        %v3163 = vunpack.c.l.b16 %v3088
        %v3164 = vunpack.c.h.b16 %v3088
        %v3165 = vunpack.c.l.b16 %v3089
        %v3166 = vunpack.c.l.b16 %v3090
        %v3167 = vunpack.c.h.b16 %v3090
        %v3168 = vunpack.c.l.b16 %v3091
        %v3169 = vunpack.c.l.b16 %v3092
        %v3170 = vunpack.c.h.b16 %v3092
        %v3171 = vunpack.c.l.b16 %v3093
        %v3172 = vunpack.c.l.b16 %v3094
        %v3173 = vunpack.c.h.b16 %v3094
        %v3174 = vunpack.c.l.b16 %v3095
        %v3175 = vunpack.c.l.b16 %v3096
        %v3176 = vunpack.c.h.b16 %v3096
        %v3177 = vunpack.c.l.b16 %v3097
        %v3178 = vunpack.c.l.b16 %v3098
        %v3179 = vunpack.c.h.b16 %v3098
        %v3180 = vunpack.c.l.b16 %v3099
        %v3181 = vpack.c.b16 %v3136, %v3133
        %v3182 = vpack.c.b16 %v3137, %v3134
        %v3183 = vpack.c.b16 %v3138, %v3135
        %v3184 = vpack.c.b16 %v3142, %v3139
        %v3185 = vpack.c.b16 %v3143, %v3140
        %v3186 = vpack.c.b16 %v3144, %v3141
        %v3187 = vpack.c.b16 %v3148, %v3145
        %v3188 = vpack.c.b16 %v3149, %v3146
        %v3189 = vpack.c.b16 %v3150, %v3147
        %v3190 = vpack.c.b16 %v3154, %v3151
        %v3191 = vpack.c.b16 %v3155, %v3152
        %v3192 = vpack.c.b16 %v3156, %v3153
        %v3193 = vpack.c.b16 %v3160, %v3157
        %v3194 = vpack.c.b16 %v3161, %v3158
        %v3195 = vpack.c.b16 %v3162, %v3159
        %v3196 = vpack.c.b16 %v3166, %v3163
        %v3197 = vpack.c.b16 %v3167, %v3164
        %v3198 = vpack.c.b16 %v3168, %v3165
        %v3199 = vpack.c.b16 %v3172, %v3169
        %v3200 = vpack.c.b16 %v3173, %v3170
        %v3201 = vpack.c.b16 %v3174, %v3171
        %v3202 = vpack.c.b16 %v3178, %v3175
        %v3203 = vpack.c.b16 %v3179, %v3176
        %v3204 = vpack.c.b16 %v3180, %v3177
        %v3230 = vperm.slane %v3100, 0
        %v3231 = vperm.slane %v3100, 1
        %v3232 = vperm.slane %v3100, 2
        %3236 = vmatpush.bf16.msra.mxu0 %v3202
        %3237 = vmatpush.bf16.msra.mxu0 %v3199
        %3238 = vmatpush.bf16.msra.mxu0 %v3196
        %3239 = vmatpush.bf16.msra.mxu0 %v3193
        %3240 = vmatpush.bf16.msra.mxu0 %v3190
        %3241 = vmatpush.bf16.msra.mxu0 %v3187
        %3242 = vmatpush.bf16.msra.mxu0 %v3184
        %3243 = vmatpush.bf16.msra.mxu0 %v3181
        %3244 = vmatmul.bf16.gmra.mxu0 %v3067
        %v3245 = vpop.f32.mrf.mxu0
        %v3246 = vadd.f32 %v3230, %v3245
        %v3247 = vpop.f32.mrf.mxu0
        %3248 = vdwg.mxu0
        %3249 = vmatpush.bf16.msra.mxu0 %v3203
        %3250 = vmatpush.bf16.msra.mxu0 %v3200
        %3251 = vmatpush.bf16.msra.mxu0 %v3197
        %3252 = vmatpush.bf16.msra.mxu0 %v3194
        %3253 = vmatpush.bf16.msra.mxu0 %v3191
        %3254 = vmatpush.bf16.msra.mxu0 %v3188
        %3255 = vmatpush.bf16.msra.mxu0 %v3185
        %3256 = vmatpush.bf16.msra.mxu0 %v3182
        %3257 = vmatmul.bf16.gmra.mxu0 %v3067
        %v3258 = vpop.f32.mrf.mxu0
        %v3259 = vadd.f32 %v3231, %v3258
        %v3260 = vpop.f32.mrf.mxu0
        %3261 = vdwg.mxu0
        %3262 = vmatpush.bf16.msra.mxu0 %v3204
        %3263 = vmatpush.bf16.msra.mxu0 %v3201
        %3264 = vmatpush.bf16.msra.mxu0 %v3198
        %3265 = vmatpush.bf16.msra.mxu0 %v3195
        %3266 = vmatpush.bf16.msra.mxu0 %v3192
        %3267 = vmatpush.bf16.msra.mxu0 %v3189
        %3268 = vmatpush.bf16.msra.mxu0 %v3186
        %3269 = vmatpush.bf16.msra.mxu0 %v3183
        %3270 = vmatmul.bf16.gmra.mxu0 %v3067
        %v3271 = vpop.f32.mrf.mxu0
        %v3272 = vadd.f32 %v3232, %v3271
        %v3273 = vpop.f32.mrf.mxu0
        %3274 = vdwg.mxu0
        %v3275 = vmax.f32 %v3246, 0.0
        %v3276 = vmax.f32 %v3259, 0.0
        %v3277 = vmax.f32 %v3272, 0.0
        %v3278 = vpack.c.bf16 %v3275, %v3275
        %v3279 = vpack.c.bf16 %v3276, %v3276
        %v3280 = vpack.c.bf16 %v3277, %v3277
        %v3281 = vld [vmem:[%s14] sm:$0xf]
        %v3282 = vld [vmem:[%s14 + $0x4] sm:$0xf]
        %v3283 = vld [vmem:[%s14 + $0x8] sm:$0xf]
        %v3284 = vld [vmem:[%s14 + $0xc] sm:$0xf]
        %v3285 = vld [vmem:[%s14 + $0x10] sm:$0xf]
        %v3286 = vld [vmem:[%s14 + $0x14] sm:$0xf]
        %v3287 = vld [vmem:[%s14 + $0x18] sm:$0xf]
        %v3288 = vld [vmem:[%s14 + $0x1c] sm:$0xf]
        %v3289 = vld [vmem:[%s14 + $0x20] sm:$0xf]
        %v3290 = vld [vmem:[%s14 + $0x24] sm:$0xf]
        %v3291 = vld [vmem:[%s14 + $0x28] sm:$0xf]
        %v3292 = vld [vmem:[%s14 + $0x2c] sm:$0xf]
        %v3293 = vld [vmem:[%s14 + $0x30] sm:$0xf]
        %v3294 = vld [vmem:[%s14 + $0x34] sm:$0xf]
        %v3295 = vld [vmem:[%s14 + $0x38] sm:$0xf]
        %v3296 = vld [vmem:[%s14 + $0x3c] sm:$0xf]
        %v3297 = vld [vmem:[%s14 + $0x40] sm:$0xf]
        %v3298 = vld [vmem:[%s14 + $0x44] sm:$0xf]
        %v3299 = vld [vmem:[%s14 + $0x48] sm:$0xf]
        %v3300 = vld [vmem:[%s14 + $0x4c] sm:$0xf]
        %v3301 = vld [vmem:[%s14 + $0x50] sm:$0xf]
        %v3302 = vld [vmem:[%s14 + $0x54] sm:$0xf]
        %v3303 = vld [vmem:[%s14 + $0x58] sm:$0xf]
        %v3304 = vld [vmem:[%s14 + $0x5c] sm:$0xf]
        %v3305 = vld [vmem:[%s14 + $0x60] sm:$0xf]
        %v3306 = vld [vmem:[%s14 + $0x64] sm:$0xf]
        %v3307 = vld [vmem:[%s14 + $0x68] sm:$0xf]
        %v3308 = vld [vmem:[%s14 + $0x6c] sm:$0xf]
        %v3309 = vld [vmem:[%s14 + $0x70] sm:$0xf]
        %v3310 = vld [vmem:[%s14 + $0x74] sm:$0xf]
        %v3311 = vld [vmem:[%s14 + $0x78] sm:$0xf]
        %v3312 = vld [vmem:[%s14 + $0x7c] sm:$0xf]
        %v3313 = vld [vmem:[%s14 + $0x80] sm:$0xf]
        %v3314 = vld [vmem:[%s14 + $0x84] sm:$0xf]
        %v3315 = vld [vmem:[%s14 + $0x88] sm:$0xf]
        %v3316 = vld [vmem:[%s14 + $0x8c] sm:$0xf]
        %v3317 = vld [vmem:[%s14 + $0x90] sm:$0xf]
        %v3318 = vld [vmem:[%s14 + $0x94] sm:$0xf]
        %v3319 = vld [vmem:[%s14 + $0x98] sm:$0xf]
        %v3320 = vld [vmem:[%s14 + $0x9c] sm:$0xf]
        %v3321 = vld [vmem:[%s14 + $0xa0] sm:$0xf]
        %v3322 = vld [vmem:[%s14 + $0xa4] sm:$0xf]
        %v3323 = vld [vmem:[%s14 + $0xa8] sm:$0xf]
        %v3324 = vld [vmem:[%s14 + $0xac] sm:$0xf]
        %v3325 = vld [vmem:[%s14 + $0xb0] sm:$0xf]
        %v3326 = vld [vmem:[%s14 + $0xb4] sm:$0xf]
        %v3327 = vld [vmem:[%s14 + $0xb8] sm:$0xf]
        %v3328 = vld [vmem:[%s14 + $0xbc] sm:$0xf]
        %v3329 = vld [vmem:[%s15] sm:$0x1]
        %v3378 = vunpack.c.l.b16 %v3281
        %v3379 = vunpack.c.l.b16 %v3282
        %v3380 = vunpack.c.l.b16 %v3283
        %v3381 = vunpack.c.l.b16 %v3284
        %v3382 = vunpack.c.l.b16 %v3285
        %v3383 = vunpack.c.l.b16 %v3286
        %v3384 = vunpack.c.l.b16 %v3287
        %v3385 = vunpack.c.l.b16 %v3288
        %v3386 = vunpack.c.l.b16 %v3289
        %v3387 = vunpack.c.l.b16 %v3290
        %v3388 = vunpack.c.l.b16 %v3291
        %v3389 = vunpack.c.l.b16 %v3292
        %v3390 = vunpack.c.l.b16 %v3293
        %v3391 = vunpack.c.l.b16 %v3294
        %v3392 = vunpack.c.l.b16 %v3295
        %v3393 = vunpack.c.l.b16 %v3296
        %v3394 = vunpack.c.l.b16 %v3297
        %v3395 = vunpack.c.l.b16 %v3298
        %v3396 = vunpack.c.l.b16 %v3299
        %v3397 = vunpack.c.l.b16 %v3300
        %v3398 = vunpack.c.l.b16 %v3301
        %v3399 = vunpack.c.l.b16 %v3302
        %v3400 = vunpack.c.l.b16 %v3303
        %v3401 = vunpack.c.l.b16 %v3304
        %v3402 = vunpack.c.l.b16 %v3305
        %v3403 = vunpack.c.l.b16 %v3306
        %v3404 = vunpack.c.l.b16 %v3307
        %v3405 = vunpack.c.l.b16 %v3308
        %v3406 = vunpack.c.l.b16 %v3309
        %v3407 = vunpack.c.l.b16 %v3310
        %v3408 = vunpack.c.l.b16 %v3311
        %v3409 = vunpack.c.l.b16 %v3312
        %v3410 = vunpack.c.l.b16 %v3313
        %v3411 = vunpack.c.l.b16 %v3314
        %v3412 = vunpack.c.l.b16 %v3315
        %v3413 = vunpack.c.l.b16 %v3316
        %v3414 = vunpack.c.l.b16 %v3317
        %v3415 = vunpack.c.l.b16 %v3318
        %v3416 = vunpack.c.l.b16 %v3319
        %v3417 = vunpack.c.l.b16 %v3320
        %v3418 = vunpack.c.l.b16 %v3321
        %v3419 = vunpack.c.l.b16 %v3322
        %v3420 = vunpack.c.l.b16 %v3323
        %v3421 = vunpack.c.l.b16 %v3324
        %v3422 = vunpack.c.l.b16 %v3325
        %v3423 = vunpack.c.l.b16 %v3326
        %v3424 = vunpack.c.l.b16 %v3327
        %v3425 = vunpack.c.l.b16 %v3328
        %v3426 = vpack.c.b16 %v3379, %v3378
        %v3427 = vpack.c.b16 %v3381, %v3380
        %v3428 = vpack.c.b16 %v3383, %v3382
        %v3429 = vpack.c.b16 %v3385, %v3384
        %v3430 = vpack.c.b16 %v3387, %v3386
        %v3431 = vpack.c.b16 %v3389, %v3388
        %v3432 = vpack.c.b16 %v3391, %v3390
        %v3433 = vpack.c.b16 %v3393, %v3392
        %v3434 = vpack.c.b16 %v3395, %v3394
        %v3435 = vpack.c.b16 %v3397, %v3396
        %v3436 = vpack.c.b16 %v3399, %v3398
        %v3437 = vpack.c.b16 %v3401, %v3400
        %v3438 = vpack.c.b16 %v3403, %v3402
        %v3439 = vpack.c.b16 %v3405, %v3404
        %v3440 = vpack.c.b16 %v3407, %v3406
        %v3441 = vpack.c.b16 %v3409, %v3408
        %v3442 = vpack.c.b16 %v3411, %v3410
        %v3443 = vpack.c.b16 %v3413, %v3412
        %v3444 = vpack.c.b16 %v3415, %v3414
        %v3445 = vpack.c.b16 %v3417, %v3416
        %v3446 = vpack.c.b16 %v3419, %v3418
        %v3447 = vpack.c.b16 %v3421, %v3420
        %v3448 = vpack.c.b16 %v3423, %v3422
        %v3449 = vpack.c.b16 %v3425, %v3424
        %3474 = vmatpush.bf16.msra.mxu0 %v3433
        %3475 = vmatpush.bf16.msra.mxu0 %v3432
        %3476 = vmatpush.bf16.msra.mxu0 %v3431
        %3477 = vmatpush.bf16.msra.mxu0 %v3430
        %3478 = vmatpush.bf16.msra.mxu0 %v3429
        %3479 = vmatpush.bf16.msra.mxu0 %v3428
        %3480 = vmatpush.bf16.msra.mxu0 %v3427
        %3481 = vmatpush.bf16.msra.mxu0 %v3426
        %3482 = vmatmul.bf16.gmra.mxu0 %v3278
        %v3483 = vpop.f32.mrf.mxu0
        %v3484 = vadd.f32 %v3329, %v3483
        %v3485 = vpop.f32.mrf.mxu0
        %3486 = vdwg.mxu0
        %3487 = vmatpush.bf16.msra.mxu0 %v3441
        %3488 = vmatpush.bf16.msra.mxu0 %v3440
        %3489 = vmatpush.bf16.msra.mxu0 %v3439
        %3490 = vmatpush.bf16.msra.mxu0 %v3438
        %3491 = vmatpush.bf16.msra.mxu0 %v3437
        %3492 = vmatpush.bf16.msra.mxu0 %v3436
        %3493 = vmatpush.bf16.msra.mxu0 %v3435
        %3494 = vmatpush.bf16.msra.mxu0 %v3434
        %3495 = vmatmul.bf16.gmra.mxu0 %v3279
        %v3496 = vpop.f32.mrf.mxu0
        %v3497 = vadd.f32 %v3484, %v3496
        %v3498 = vpop.f32.mrf.mxu0
        %3499 = vdwg.mxu0
        %3500 = vmatpush.bf16.msra.mxu0 %v3449
        %3501 = vmatpush.bf16.msra.mxu0 %v3448
        %3502 = vmatpush.bf16.msra.mxu0 %v3447
        %3503 = vmatpush.bf16.msra.mxu0 %v3446
        %3504 = vmatpush.bf16.msra.mxu0 %v3445
        %3505 = vmatpush.bf16.msra.mxu0 %v3444
        %3506 = vmatpush.bf16.msra.mxu0 %v3443
        %3507 = vmatpush.bf16.msra.mxu0 %v3442
        %3508 = vmatmul.bf16.gmra.mxu0 %v3280
        %v3509 = vpop.f32.mrf.mxu0
        %v3510 = vadd.f32 %v3497, %v3509
        %v3511 = vpop.f32.mrf.mxu0
        %3512 = vdwg.mxu0
        %v3513 = vadd.f32 %v3066, %v3510
        %v3514 = vld [vmem:[%s16] sm:$0x1]
        %v3515 = vld [vmem:[%s17] sm:$0x1]
        %v3516 = vsel %vm3005, %v3513, 0.0
        %3517 = vadd.xlane.f32.xlu0 %v3516
        %v3518 = vpop.xlane.xlu0 %3517
        %v3519 = vmul.f32 %v3518, 0.010416667
        %v3520 = vsub.f32 %v3513, %v3519
        %v3521 = vsel %vm644, %v3520, 0.0
        %v3522 = vmul.f32 %v3521, %v3521
        %v3523 = vsel %vm3005, %v3522, 0.0
        %3524 = vadd.xlane.f32.xlu0 %v3523
        %v3525 = vpop.xlane.xlu0 %3524
        %v3526 = vmul.f32 %v3525, 0.010416667
        %v3527 = vadd.f32 %v3526, 1e-05
        %v3528 = vrsqrt.pop %v3527
        %v3529 = vmul.f32 %v3528, %v3527
        %v3530 = vmul.f32 %v3529, %v3528
        %v3531 = vmul.f32 0.5, %v3530
        %v3532 = vsub.f32 1.5, %v3531
        %v3533 = vmul.f32 %v3528, %v3532
        %vm3534 = vweird.f32 %v3527
        %vm3535 = vweird.f32 %v3528
        %vm3536 = vmor %vm3534, %vm3535
        %v3537 = vsel %vm3536, %v3528, %v3533
        %v3538 = vmul.f32 %v3521, %v3537
        %v3539 = vmul.f32 %v3538, %v3514
        %v3540 = vadd.f32 %v3539, %v3515
        %v3541 = vpack.c.bf16 %v3540, %v3540
        %v3542 = vld [vmem:[%s18] sm:$0xf]
        %v3543 = vld [vmem:[%s18 + $0x4] sm:$0xf]
        %v3544 = vld [vmem:[%s18 + $0x8] sm:$0xf]
        %v3545 = vld [vmem:[%s18 + $0xc] sm:$0xf]
        %v3546 = vld [vmem:[%s18 + $0x10] sm:$0xf]
        %v3547 = vld [vmem:[%s18 + $0x14] sm:$0xf]
        %v3548 = vld [vmem:[%s18 + $0x18] sm:$0xf]
        %v3549 = vld [vmem:[%s18 + $0x1c] sm:$0xf]
        %v3550 = vld [vmem:[%s18 + $0x20] sm:$0xf]
        %v3551 = vld [vmem:[%s18 + $0x24] sm:$0xf]
        %v3552 = vld [vmem:[%s18 + $0x28] sm:$0xf]
        %v3553 = vld [vmem:[%s18 + $0x2c] sm:$0xf]
        %v3554 = vld [vmem:[%s18 + $0x30] sm:$0xf]
        %v3555 = vld [vmem:[%s18 + $0x34] sm:$0xf]
        %v3556 = vld [vmem:[%s18 + $0x38] sm:$0xf]
        %v3557 = vld [vmem:[%s18 + $0x3c] sm:$0xf]
        %v3558 = vld [vmem:[%s19] sm:$0x1]
        %v3575 = vunpack.c.l.b16 %v3542
        %v3576 = vunpack.c.l.b16 %v3543
        %v3577 = vunpack.c.l.b16 %v3544
        %v3578 = vunpack.c.l.b16 %v3545
        %v3579 = vunpack.c.l.b16 %v3546
        %v3580 = vunpack.c.l.b16 %v3547
        %v3581 = vunpack.c.l.b16 %v3548
        %v3582 = vunpack.c.l.b16 %v3549
        %v3583 = vunpack.c.l.b16 %v3550
        %v3584 = vunpack.c.l.b16 %v3551
        %v3585 = vunpack.c.l.b16 %v3552
        %v3586 = vunpack.c.l.b16 %v3553
        %v3587 = vunpack.c.l.b16 %v3554
        %v3588 = vunpack.c.l.b16 %v3555
        %v3589 = vunpack.c.l.b16 %v3556
        %v3590 = vunpack.c.l.b16 %v3557
        %v3591 = vpack.c.b16 %v3576, %v3575
        %v3592 = vpack.c.b16 %v3578, %v3577
        %v3593 = vpack.c.b16 %v3580, %v3579
        %v3594 = vpack.c.b16 %v3582, %v3581
        %v3595 = vpack.c.b16 %v3584, %v3583
        %v3596 = vpack.c.b16 %v3586, %v3585
        %v3597 = vpack.c.b16 %v3588, %v3587
        %v3598 = vpack.c.b16 %v3590, %v3589
        %3607 = vmatpush.bf16.msra.mxu0 %v3598
        %3608 = vmatpush.bf16.msra.mxu0 %v3597
        %3609 = vmatpush.bf16.msra.mxu0 %v3596
        %3610 = vmatpush.bf16.msra.mxu0 %v3595
        %3611 = vmatpush.bf16.msra.mxu0 %v3594
        %3612 = vmatpush.bf16.msra.mxu0 %v3593
        %3613 = vmatpush.bf16.msra.mxu0 %v3592
        %3614 = vmatpush.bf16.msra.mxu0 %v3591
        %3615 = vmatmul.bf16.gmra.mxu0 %v3541
        %v3616 = vpop.f32.mrf.mxu0
        %v3617 = vadd.f32 %v3558, %v3616
        %v3618 = vpop.f32.mrf.mxu0
        %3619 = vdwg.mxu0
        %3620 = vst [vmem:[%s632] sm:$0x1] %v3617
        %s3621 = sand.u32 %s472, 1
        %s3622 = scalar_lea.sflag [#allocation3], %s3621
        %s3623 = sand.u32 %s472, 1
        %s3624 = scalar_lea.vmem [#allocation2], %s3623
        // Predicated region
        $region101: #{tpu_custom_call.1} parent=99 // pred_check
          %p3625 = pneg %p482
        $region102: #{tpu_custom_call.1} parent=99 // pred_check_branch
          %3627 = sbr.rel (%p3625) target = $region104
        $region103: #{tpu_custom_call.1} parent=99 // pred_region
          %3629 = vsyncadd %s3622, 0
          %s3630 = scalar_lea.hbm %s20, %s34
          %s3632 = sshll.u32 %s3624, 4
          %s3633 = int_to_ptr.vmem [resolvable:$true] %s3632
          %s3634 = sshll.u32 %s3630, 4
          %s3635 = int_to_ptr.hbm [resolvable:$true] %s3634
          %3637 = dma.vmem_to_hbm [thread:$0]  %s3633, 16, %s3635, %s3622
        $region104: #{tpu_custom_call.1} parent=99 // pred_fallthru
          _
      $region100: #{tpu_custom_call.1} parent=5 // pred_fallthru
        _
      %p3638 = scmp.le.s32.totalorder 2, %s29
      // Predicated region
      $region105: #{tpu_custom_call.1} parent=5 // pred_check
        %p3639 = pneg %p3638
      $region106: #{tpu_custom_call.1} parent=5 // pred_check_branch
        %3641 = sbr.rel (%p3639) target = $region108
      $region107: #{tpu_custom_call.1} parent=5 // pred_region
        %s3642 = ssub.s32 %s29, 2
        // Predicated region
        $region109: #{tpu_custom_call.1} parent=107 // pred_check
          %p3643 = pneg %p488
        $region110: #{tpu_custom_call.1} parent=107 // pred_check_branch
          %3645 = sbr.rel (%p3643) target = $region112
        $region111: #{tpu_custom_call.1} parent=107 // pred_region
          %s3646 = sand.u32 %s473, 1
          %s3647 = scalar_lea.sflag [#allocation3], %s3646
          %s3648 = sand.u32 %s473, 1
          %s3649 = scalar_lea.vmem [#allocation2], %s3648
          %3651 = dma.done %s3647, 16
        $region112: #{tpu_custom_call.1} parent=107 // pred_fallthru
          _
      $region108: #{tpu_custom_call.1} parent=5 // pred_fallthru
        _
    $region6: #{tpu_custom_call.1} parent=1 // loop_footer
      %s33 = sadd.s32 1, %s29
    $region7: #{tpu_custom_call.1} parent=1 // loop_footer_branch
      %28 = sbr.rel target = $region3
    $region8: #{tpu_custom_call.1} parent=1 // loop_exit
      _
    %3652 = vsyncpa [#allocation3], 1
    %s3653 = scalar_lea.sflag [#allocation3], 1
    %3654 = vsyncpa %s3653, 1

</llo_original>
